<compile_context>
chip_gen: v6e
topology: v6e:2x2x1
jax: 0.10.0
libtpu: 0.0.40
codegen_flags: <defaults>
</compile_context>

<pallas_src>
import functools

import jax
import jax.numpy as jnp
import numpy as np
from jax import lax
from jax.experimental import pallas as pl
from jax.experimental.pallas import tpu as pltpu

NEG_SLOPE = 0.2        # GATv2Conv default negative_slope
LANE = 128             # TPU lane width
MASK_VAL = -1e30       # plain Python float (NOT a jnp array -> would be a captured const)


def _round_up(v, m):
    return (v + m - 1) // m * m


def _gatv2_kernel(att2_ref,   # SMEM (cout,) f32: c2 * a_c
                  hr_ref,     # (TI, cout8)   target right-projection (real channels only)
                  b_ref,      # (TI, 1)  f32  c1 * (hr @ a)
                  hl_ref,     # (TJ, cout_p)  source left-projection (lane-dense)
                  hlT_ref,    # (cout8, TJ)   source left-projection, thin transposed strip
                  d_ref,      # (1, TJ)  f32  c1 * (hl @ a)
                  adj_ref,    # (TI, TJ) int8 mask, adj[i, j] = 1 iff edge j -> i
                  bias_ref,   # (1, cout_p) f32
                  out_ref,    # (TI, cout_p)
                  m_sc, l_sc, acc_sc,
                  *, cout):
    j = pl.program_id(1)
    nj = pl.num_programs(1)

    # ---- per target-tile init (first source tile) -----------------------------------
    @pl.when(j == 0)
    def _init():
        m_sc[...] = jnp.full_like(m_sc, MASK_VAL)
        l_sc[...] = jnp.zeros_like(l_sc)
        acc_sc[...] = jnp.zeros_like(acc_sc)

    hr = hr_ref[...].astype(jnp.float32)      # (TI, cout8)  (no-op cast in f32 mode)
    hlT = hlT_ref[...].astype(jnp.float32)    # (cout8, TJ)

    # ---- GATv2 scores, no (TI, TJ, Cout) intermediate --------------------------------
    #   leaky_relu(v) = c1*v + c2*|v|   (0 < slope < 1)
    #   e[i,j] = c1*(b_i + d_j) + sum_c (c2*a_c) * |hr[i,c] + hl[j,c]|
    # Rank-1 linear part (b, d prescaled by c1 in the wrapper):
    e = b_ref[...] + d_ref[...]               # (TI,1)+(1,TJ) -> (TI,TJ)
    # |.| part: short static loop of VPU add/abs/fma on lane-dense (TI,TJ) planes
    # (source index on lanes); `cout` is the real channel count (small).
    for c in range(cout):
        v = hr[:, c:c + 1] + hlT[c:c + 1, :]  # (TI,1)+(1,TJ) -> (TI,TJ)
        e = e + att2_ref[c] * jnp.abs(v)      # SMEM scalar x vector FMA

    # ---- masked online (flash-style) softmax over source tiles -----------------------
    e = jnp.where(adj_ref[...] != 0, e, MASK_VAL)

    m_prev = m_sc[...]                                              # (TI, 1)
    m_new = jnp.maximum(m_prev, jnp.max(e, axis=-1, keepdims=True))
    corr = jnp.exp(m_prev - m_new)
    p = jnp.exp(e - m_new)      # masked entries underflow to exactly 0 vs. any real max
    l_sc[...] = corr * l_sc[...] + jnp.sum(p, axis=-1, keepdims=True)
    acc_sc[...] = corr * acc_sc[...] + jnp.dot(
        p.astype(hl_ref.dtype), hl_ref[...],
        preferred_element_type=jnp.float32,
        precision=lax.Precision.HIGHEST)
    m_sc[...] = m_new

    # ---- finalize: normalize, add bias, lane-dense store ------------------------------
    @pl.when(j == nj - 1)
    def _fin():
        # approx=True (EUP) is fine at production tolerance; exact divide kept so the
        # tight f32 validation below holds.
        inv_l = pl.reciprocal(l_sc[...], approx=False)
        out_ref[...] = (acc_sc[...] * inv_l + bias_ref[...]).astype(out_ref.dtype)


def graph_attention_conv(x, adj, wl, wr, att, bias, *,
                         tile_n=512, feat_dtype=jnp.float32):
    """GATv2 (heads=1) forward.

    x: (N, Cin); adj: (N, N) 0/1 mask, adj[i, j] = 1 iff edge j -> i (self-loops included,
    every real row needs >= 1 incoming edge); wl, wr: (Cin, Cout); att: (Cout,) or
    (1, Cout); bias: (Cout,) or (1, Cout).

    tile_n: node tile for targets (i, 'parallel') and sources (j, 'arbitrary').  At t=512
            the kernel's VMEM footprint is ~2 MiB, so large tiles are fine on v5e/v6e/v7x
            alike; larger tiles amortize the per-step pipeline overhead.
    feat_dtype: jnp.bfloat16 on v6e/v7x halves hl/hr HBM traffic and uses the fast MXU
            path (validate at ~1e-2); score/softmax math stays f32 regardless.
    """
    n, cin = x.shape
    cout = wl.shape[1]
    cout_p = _round_up(cout, LANE)
    cout8 = _round_up(cout, 8)
    t = _round_up(min(tile_n, _round_up(n, LANE)), LANE)
    n_p = _round_up(n, t)

    f32 = jnp.float32
    c1 = (1.0 + NEG_SLOPE) / 2.0
    c2 = (1.0 - NEG_SLOPE) / 2.0
    hi = lax.Precision.HIGHEST

    # ---- feature projections + rank-1 score terms, hoisted out of the kernel ----------
    x32 = x.astype(f32)
    a = jnp.reshape(att, (cout,)).astype(f32)
    hl = jnp.dot(x32, wl.astype(f32), precision=hi)           # (N, Cout)
    hr = jnp.dot(x32, wr.astype(f32), precision=hi)           # (N, Cout)
    b = c1 * jnp.dot(hr, a, precision=hi)                     # (N,) target rank-1 term
    d = c1 * jnp.dot(hl, a, precision=hi)                     # (N,) source rank-1 term

    # ---- padded, lane-dense operands ----------------------------------------------------
    hr_p = jnp.zeros((n_p, cout8), feat_dtype).at[:n, :cout].set(hr.astype(feat_dtype))
    hl_p = jnp.zeros((n_p, cout_p), feat_dtype).at[:n, :cout].set(hl.astype(feat_dtype))
    hlT_p = jnp.zeros((cout8, n_p), feat_dtype).at[:cout, :n].set(hl.T.astype(feat_dtype))
    b_p = jnp.zeros((n_p, 1), f32).at[:n, 0].set(b)
    d_p = jnp.zeros((1, n_p), f32).at[0, :n].set(d)
    adj_p = jnp.zeros((n_p, n_p), jnp.int8).at[:n, :n].set(adj.astype(jnp.int8))
    bias_p = jnp.zeros((1, cout_p), f32).at[:, :cout].set(
        jnp.reshape(bias, (1, cout)).astype(f32))
    att2 = c2 * a                                              # (Cout,) SMEM scalars

    grid = (n_p // t, n_p // t)
    kern = functools.partial(_gatv2_kernel, cout=cout)

    # TODO(synk): for the deployed N~16 case, batch many graphs per pallas_call (leading
    # 'parallel' batch axis / block-diagonal adjacency packing) so per-call overhead and
    # 128-wide padding stop dominating and both v7x TensorCores get work.
    # TODO(synk): CSR-style edge gathering via scalar prefetch (O(E) instead of O(N^2)
    # adjacency) for large sparse graphs; 1-bit adjacency bitmask if the adj stream is
    # ever exposed on v5e.
    out_p = pl.pallas_call(
        kern,
        out_shape=jax.ShapeDtypeStruct((n_p, cout_p), f32),
        grid_spec=pltpu.PrefetchScalarGridSpec(
            num_scalar_prefetch=0,
            grid=grid,
            in_specs=[
                pl.BlockSpec(memory_space=pltpu.MemorySpace.SMEM),   # att2 (Cout,)
                pl.BlockSpec((t, cout8), lambda i, j: (i, 0)),       # hr   (targets)
                pl.BlockSpec((t, 1), lambda i, j: (i, 0)),           # b    (targets)
                pl.BlockSpec((t, cout_p), lambda i, j: (j, 0)),      # hl   (sources)
                pl.BlockSpec((cout8, t), lambda i, j: (0, j)),       # hl^T (sources)
                pl.BlockSpec((1, t), lambda i, j: (0, j)),           # d    (sources)
                pl.BlockSpec((t, t), lambda i, j: (i, j)),           # adj  (int8)
                pl.BlockSpec((1, cout_p), lambda i, j: (0, 0)),      # bias
            ],
            out_specs=pl.BlockSpec((t, cout_p), lambda i, j: (i, 0)),
            scratch_shapes=[
                pltpu.VMEM((t, 1), jnp.float32),        # running max m
                pltpu.VMEM((t, 1), jnp.float32),        # running sum l
                pltpu.VMEM((t, cout_p), jnp.float32),   # output accumulator
            ],
        ),
        compiler_params=pltpu.CompilerParams(
            dimension_semantics=("parallel", "arbitrary")),
    )(att2, hr_p, b_p, hl_p, hlT_p, d_p, adj_p, bias_p)

    return out_p[:n, :cout]


def edge_index_to_dense(edge_index, num_nodes):
    """edge_index [2, E] (row 0 = source j, row 1 = target i) -> dense int8 mask (N, N)."""
    src, dst = edge_index
    adj = jnp.zeros((num_nodes, num_nodes), jnp.int8)
    return adj.at[dst, src].set(1)


def reference_gatv2(x, adj, wl, wr, att, bias):
    hi = lax.Precision.HIGHEST
    hl = jnp.dot(x, wl, precision=hi)
    hr = jnp.dot(x, wr, precision=hi)
    z = hr[:, None, :] + hl[None, :, :]
    z = jnp.where(z >= 0, z, NEG_SLOPE * z)
    e = jnp.sum(z * jnp.reshape(att, (1, 1, -1)), axis=-1)
    mask = adj > 0
    e = jnp.where(mask, e, -jnp.inf)
    alpha = jax.nn.softmax(e, axis=-1)
    alpha = jnp.where(mask, alpha, 0.0)
    return jnp.dot(alpha, hl, precision=hi) + jnp.reshape(bias, (1, -1))


if __name__ == "__main__":
    N = 16           # number of graph nodes (graph.x.shape[0])
    IN_CH = 8        # in_channels
    OUT_CH = 8       # out_channels

    key = jax.random.PRNGKey(0)
    kx, kwl, kwr, ka = jax.random.split(key, 4)

    # Node features.
    x = jax.random.normal(kx, (N, IN_CH), dtype=jnp.float32)

    # Deterministic ring graph with self-loops (GATv2Conv adds self-loops by default;
    # guarantees every row has >= 1 incoming edge so the softmax is well-defined).
    src = np.concatenate([np.arange(N), np.arange(N), np.arange(N)])
    dst = np.concatenate([np.arange(N), (np.arange(N) + 1) % N, (np.arange(N) - 1) % N])
    edge_index = jnp.asarray(np.stack([src, dst]), dtype=jnp.int32)   # [2, E], E = 3N
    adj = edge_index_to_dense(edge_index, N)

    # Deterministic parameter init (glorot-ish scale).  TODO(synk): PyG's exact glorot +
    # internal lin_l/lin_r bias layout not reproduced bit-for-bit; shapes/semantics match.
    scale = 1.0 / np.sqrt(IN_CH)
    wl = jax.random.uniform(kwl, (IN_CH, OUT_CH), jnp.float32, -scale, scale)
    wr = jax.random.uniform(kwr, (IN_CH, OUT_CH), jnp.float32, -scale, scale)
    att = jax.random.uniform(ka, (1, OUT_CH), jnp.float32, -scale, scale)
    bias = jnp.zeros((1, OUT_CH), jnp.float32)

    # f32 feature path so the tight-tolerance check against the f32 reference holds.
    # On v6e/v7x pass feat_dtype=jnp.bfloat16 and validate at ~1e-2.
    out = graph_attention_conv(x, adj, wl, wr, att, bias)
    out = jax.block_until_ready(out)

    ref = reference_gatv2(x, adj, wl, wr, att, bias)
    np.testing.assert_allclose(np.asarray(out), np.asarray(ref), rtol=1e-4, atol=1e-5)

    print("KERNEL_OK")
</pallas_src>

<mosaic_0001>
module attributes {stable_mosaic.version = 11 : i64} {
  func.func @_gatv2_kernel(%arg0: i32, %arg1: i32, %arg2: memref<8xf32, #tpu.memory_space<smem>>, %arg3: memref<128x8xf32, #tpu.memory_space<vmem>>, %arg4: memref<128x1xf32, #tpu.memory_space<vmem>>, %arg5: memref<128x128xf32, #tpu.memory_space<vmem>>, %arg6: memref<8x128xf32, #tpu.memory_space<vmem>>, %arg7: memref<1x128xf32, #tpu.memory_space<vmem>>, %arg8: memref<128x128xi8, #tpu.memory_space<vmem>>, %arg9: memref<1x128xf32, #tpu.memory_space<vmem>>, %arg10: memref<128x128xf32, #tpu.memory_space<vmem>>, %arg11: memref<128x1xf32, #tpu.memory_space<vmem>>, %arg12: memref<128x1xf32, #tpu.memory_space<vmem>>, %arg13: memref<128x128xf32, #tpu.memory_space<vmem>>) attributes {dimension_semantics = [#tpu.dimension_semantics<parallel>, #tpu.dimension_semantics<arbitrary>], iteration_bounds = array<i64: 1, 1>, scalar_prefetch = 0 : i64, scratch_operands = 3 : i64, tpu.core_type = #tpu.core_type<tc>, window_params = [{transform_indices = @transform_0, window_bounds = array<i64: 8>}, {transform_indices = @transform_1, window_bounds = array<i64: 128, 8>}, {transform_indices = @transform_2, window_bounds = array<i64: 128, 1>}, {transform_indices = @transform_3, window_bounds = array<i64: 128, 128>}, {transform_indices = @transform_4, window_bounds = array<i64: 8, 128>}, {transform_indices = @transform_5, window_bounds = array<i64: 1, 128>}, {transform_indices = @transform_6, window_bounds = array<i64: 128, 128>}, {pipeline_mode = #tpu.pipeline_mode<synchronous>, transform_indices = @transform_7, window_bounds = array<i64: 1, 128>}, {transform_indices = @transform_8, window_bounds = array<i64: 128, 128>}]} {
    %c0_i32 = arith.constant 0 : i32
    %0 = arith.cmpi eq, %arg1, %c0_i32 : i32
    %1 = arith.extui %0 : i1 to i32
    %c0_i32_0 = arith.constant 0 : i32
    %2 = arith.cmpi ne, %1, %c0_i32_0 : i32
    scf.if %2 {
      %cst_30 = arith.constant -1.000000e+30 : f32
      %121 = vector.broadcast %cst_30 : f32 to vector<128x1xf32>
      %c0_31 = arith.constant 0 : index
      %c0_32 = arith.constant 0 : index
      %122 = vector.load %arg11[%c0_31, %c0_32] : memref<128x1xf32, #tpu.memory_space<vmem>>, vector<128x1xf32>
      tpu.vector_store %arg11[%c0_31, %c0_32], %121 {strides = array<i32>} : memref<128x1xf32, #tpu.memory_space<vmem>>, vector<128x1xf32>,
      %cst_33 = arith.constant 0.000000e+00 : f32
      %123 = vector.broadcast %cst_33 : f32 to vector<128x1xf32>
      %c0_34 = arith.constant 0 : index
      %c0_35 = arith.constant 0 : index
      %124 = vector.load %arg12[%c0_34, %c0_35] : memref<128x1xf32, #tpu.memory_space<vmem>>, vector<128x1xf32>
      tpu.vector_store %arg12[%c0_34, %c0_35], %123 {strides = array<i32>} : memref<128x1xf32, #tpu.memory_space<vmem>>, vector<128x1xf32>,
      %cst_36 = arith.constant 0.000000e+00 : f32
      %125 = vector.broadcast %cst_36 : f32 to vector<128x128xf32>
      %c0_37 = arith.constant 0 : index
      %c0_38 = arith.constant 0 : index
      %126 = vector.load %arg13[%c0_37, %c0_38] : memref<128x128xf32, #tpu.memory_space<vmem>>, vector<128x128xf32>
      tpu.vector_store %arg13[%c0_37, %c0_38], %125 {strides = array<i32>} : memref<128x128xf32, #tpu.memory_space<vmem>>, vector<128x128xf32>,
    } else {
    }
    %c0 = arith.constant 0 : index
    %c0_1 = arith.constant 0 : index
    %3 = vector.load %arg3[%c0, %c0_1] : memref<128x8xf32, #tpu.memory_space<vmem>>, vector<128x8xf32>
    %c0_2 = arith.constant 0 : index
    %c0_3 = arith.constant 0 : index
    %4 = vector.load %arg6[%c0_2, %c0_3] : memref<8x128xf32, #tpu.memory_space<vmem>>, vector<8x128xf32>
    %c0_4 = arith.constant 0 : index
    %c0_5 = arith.constant 0 : index
    %5 = vector.load %arg4[%c0_4, %c0_5] : memref<128x1xf32, #tpu.memory_space<vmem>>, vector<128x1xf32>
    %c0_6 = arith.constant 0 : index
    %c0_7 = arith.constant 0 : index
    %6 = vector.load %arg7[%c0_6, %c0_7] : memref<1x128xf32, #tpu.memory_space<vmem>>, vector<1x128xf32>
    %7 = vector.broadcast %5 : vector<128x1xf32> to vector<128x128xf32>
    %8 = vector.broadcast %6 : vector<1x128xf32> to vector<128x128xf32>
    %9 = arith.addf %7, %8 : vector<128x128xf32>
    %10 = vector.extract_strided_slice %3 {offsets = [0, 0], sizes = [128, 1], strides = [1, 1]} : vector<128x8xf32> to vector<128x1xf32>
    %11 = vector.extract_strided_slice %4 {offsets = [0, 0], sizes = [1, 128], strides = [1, 1]} : vector<8x128xf32> to vector<1x128xf32>
    %12 = vector.broadcast %10 : vector<128x1xf32> to vector<128x128xf32>
    %13 = vector.broadcast %11 : vector<1x128xf32> to vector<128x128xf32>
    %14 = arith.addf %12, %13 : vector<128x128xf32>
    %c0_8 = arith.constant 0 : index
    %15 = memref.load %arg2[%c0_8] : memref<8xf32, #tpu.memory_space<smem>>
    %16 = math.absf %14 : vector<128x128xf32>
    %17 = vector.broadcast %15 : f32 to vector<128x128xf32>
    %18 = arith.mulf %17, %16 : vector<128x128xf32>
    %19 = arith.addf %9, %18 : vector<128x128xf32>
    %20 = vector.extract_strided_slice %3 {offsets = [0, 1], sizes = [128, 1], strides = [1, 1]} : vector<128x8xf32> to vector<128x1xf32>
    %21 = vector.extract_strided_slice %4 {offsets = [1, 0], sizes = [1, 128], strides = [1, 1]} : vector<8x128xf32> to vector<1x128xf32>
    %22 = vector.broadcast %20 : vector<128x1xf32> to vector<128x128xf32>
    %23 = vector.broadcast %21 : vector<1x128xf32> to vector<128x128xf32>
    %24 = arith.addf %22, %23 : vector<128x128xf32>
    %c1 = arith.constant 1 : index
    %25 = memref.load %arg2[%c1] : memref<8xf32, #tpu.memory_space<smem>>
    %26 = math.absf %24 : vector<128x128xf32>
    %27 = vector.broadcast %25 : f32 to vector<128x128xf32>
    %28 = arith.mulf %27, %26 : vector<128x128xf32>
    %29 = arith.addf %19, %28 : vector<128x128xf32>
    %30 = vector.extract_strided_slice %3 {offsets = [0, 2], sizes = [128, 1], strides = [1, 1]} : vector<128x8xf32> to vector<128x1xf32>
    %31 = vector.extract_strided_slice %4 {offsets = [2, 0], sizes = [1, 128], strides = [1, 1]} : vector<8x128xf32> to vector<1x128xf32>
    %32 = vector.broadcast %30 : vector<128x1xf32> to vector<128x128xf32>
    %33 = vector.broadcast %31 : vector<1x128xf32> to vector<128x128xf32>
    %34 = arith.addf %32, %33 : vector<128x128xf32>
    %c2 = arith.constant 2 : index
    %35 = memref.load %arg2[%c2] : memref<8xf32, #tpu.memory_space<smem>>
    %36 = math.absf %34 : vector<128x128xf32>
    %37 = vector.broadcast %35 : f32 to vector<128x128xf32>
    %38 = arith.mulf %37, %36 : vector<128x128xf32>
    %39 = arith.addf %29, %38 : vector<128x128xf32>
    %40 = vector.extract_strided_slice %3 {offsets = [0, 3], sizes = [128, 1], strides = [1, 1]} : vector<128x8xf32> to vector<128x1xf32>
    %41 = vector.extract_strided_slice %4 {offsets = [3, 0], sizes = [1, 128], strides = [1, 1]} : vector<8x128xf32> to vector<1x128xf32>
    %42 = vector.broadcast %40 : vector<128x1xf32> to vector<128x128xf32>
    %43 = vector.broadcast %41 : vector<1x128xf32> to vector<128x128xf32>
    %44 = arith.addf %42, %43 : vector<128x128xf32>
    %c3 = arith.constant 3 : index
    %45 = memref.load %arg2[%c3] : memref<8xf32, #tpu.memory_space<smem>>
    %46 = math.absf %44 : vector<128x128xf32>
    %47 = vector.broadcast %45 : f32 to vector<128x128xf32>
    %48 = arith.mulf %47, %46 : vector<128x128xf32>
    %49 = arith.addf %39, %48 : vector<128x128xf32>
    %50 = vector.extract_strided_slice %3 {offsets = [0, 4], sizes = [128, 1], strides = [1, 1]} : vector<128x8xf32> to vector<128x1xf32>
    %51 = vector.extract_strided_slice %4 {offsets = [4, 0], sizes = [1, 128], strides = [1, 1]} : vector<8x128xf32> to vector<1x128xf32>
    %52 = vector.broadcast %50 : vector<128x1xf32> to vector<128x128xf32>
    %53 = vector.broadcast %51 : vector<1x128xf32> to vector<128x128xf32>
    %54 = arith.addf %52, %53 : vector<128x128xf32>
    %c4 = arith.constant 4 : index
    %55 = memref.load %arg2[%c4] : memref<8xf32, #tpu.memory_space<smem>>
    %56 = math.absf %54 : vector<128x128xf32>
    %57 = vector.broadcast %55 : f32 to vector<128x128xf32>
    %58 = arith.mulf %57, %56 : vector<128x128xf32>
    %59 = arith.addf %49, %58 : vector<128x128xf32>
    %60 = vector.extract_strided_slice %3 {offsets = [0, 5], sizes = [128, 1], strides = [1, 1]} : vector<128x8xf32> to vector<128x1xf32>
    %61 = vector.extract_strided_slice %4 {offsets = [5, 0], sizes = [1, 128], strides = [1, 1]} : vector<8x128xf32> to vector<1x128xf32>
    %62 = vector.broadcast %60 : vector<128x1xf32> to vector<128x128xf32>
    %63 = vector.broadcast %61 : vector<1x128xf32> to vector<128x128xf32>
    %64 = arith.addf %62, %63 : vector<128x128xf32>
    %c5 = arith.constant 5 : index
    %65 = memref.load %arg2[%c5] : memref<8xf32, #tpu.memory_space<smem>>
    %66 = math.absf %64 : vector<128x128xf32>
    %67 = vector.broadcast %65 : f32 to vector<128x128xf32>
    %68 = arith.mulf %67, %66 : vector<128x128xf32>
    %69 = arith.addf %59, %68 : vector<128x128xf32>
    %70 = vector.extract_strided_slice %3 {offsets = [0, 6], sizes = [128, 1], strides = [1, 1]} : vector<128x8xf32> to vector<128x1xf32>
    %71 = vector.extract_strided_slice %4 {offsets = [6, 0], sizes = [1, 128], strides = [1, 1]} : vector<8x128xf32> to vector<1x128xf32>
    %72 = vector.broadcast %70 : vector<128x1xf32> to vector<128x128xf32>
    %73 = vector.broadcast %71 : vector<1x128xf32> to vector<128x128xf32>
    %74 = arith.addf %72, %73 : vector<128x128xf32>
    %c6 = arith.constant 6 : index
    %75 = memref.load %arg2[%c6] : memref<8xf32, #tpu.memory_space<smem>>
    %76 = math.absf %74 : vector<128x128xf32>
    %77 = vector.broadcast %75 : f32 to vector<128x128xf32>
    %78 = arith.mulf %77, %76 : vector<128x128xf32>
    %79 = arith.addf %69, %78 : vector<128x128xf32>
    %80 = vector.extract_strided_slice %3 {offsets = [0, 7], sizes = [128, 1], strides = [1, 1]} : vector<128x8xf32> to vector<128x1xf32>
    %81 = vector.extract_strided_slice %4 {offsets = [7, 0], sizes = [1, 128], strides = [1, 1]} : vector<8x128xf32> to vector<1x128xf32>
    %82 = vector.broadcast %80 : vector<128x1xf32> to vector<128x128xf32>
    %83 = vector.broadcast %81 : vector<1x128xf32> to vector<128x128xf32>
    %84 = arith.addf %82, %83 : vector<128x128xf32>
    %c7 = arith.constant 7 : index
    %85 = memref.load %arg2[%c7] : memref<8xf32, #tpu.memory_space<smem>>
    %86 = math.absf %84 : vector<128x128xf32>
    %87 = vector.broadcast %85 : f32 to vector<128x128xf32>
    %88 = arith.mulf %87, %86 : vector<128x128xf32>
    %89 = arith.addf %79, %88 : vector<128x128xf32>
    %c0_9 = arith.constant 0 : index
    %c0_10 = arith.constant 0 : index
    %90 = vector.load %arg8[%c0_9, %c0_10] : memref<128x128xi8, #tpu.memory_space<vmem>>, vector<128x128xi8>
    %c0_i8 = arith.constant 0 : i8
    %91 = vector.broadcast %c0_i8 : i8 to vector<128x128xi8>
    %92 = arith.cmpi ne, %90, %91 : vector<128x128xi8>
    %cst = arith.constant -1.000000e+30 : f32
    %93 = vector.broadcast %cst : f32 to vector<128x128xf32>
    %94 = arith.select %92, %89, %93 : vector<128x128xi1>, vector<128x128xf32>
    %c0_11 = arith.constant 0 : index
    %c0_12 = arith.constant 0 : index
    %95 = vector.load %arg11[%c0_11, %c0_12] : memref<128x1xf32, #tpu.memory_space<vmem>>, vector<128x1xf32>
    %cst_13 = arith.constant dense<0xFF800000> : vector<128xf32>
    %96 = vector.multi_reduction <maximumf>, %94, %cst_13 [1] : vector<128x128xf32> to vector<128xf32>
    %97 = vector.shape_cast %96 : vector<128xf32> to vector<128x1xf32>
    %98 = arith.maximumf %95, %97 : vector<128x1xf32>
    %99 = arith.subf %95, %98 : vector<128x1xf32>
    %100 = math.exp %99 : vector<128x1xf32>
    %101 = vector.broadcast %98 : vector<128x1xf32> to vector<128x128xf32>
    %102 = arith.subf %94, %101 : vector<128x128xf32>
    %103 = math.exp %102 : vector<128x128xf32>
    %c0_14 = arith.constant 0 : index
    %c0_15 = arith.constant 0 : index
    %104 = vector.load %arg12[%c0_14, %c0_15] : memref<128x1xf32, #tpu.memory_space<vmem>>, vector<128x1xf32>
    %105 = arith.mulf %100, %104 : vector<128x1xf32>
    %cst_16 = arith.constant dense<0.000000e+00> : vector<128xf32>
    %106 = vector.multi_reduction <add>, %103, %cst_16 [1] : vector<128x128xf32> to vector<128xf32>
    %107 = vector.shape_cast %106 : vector<128xf32> to vector<128x1xf32>
    %108 = arith.addf %105, %107 : vector<128x1xf32>
    %c0_17 = arith.constant 0 : index
    %c0_18 = arith.constant 0 : index
    %109 = vector.load %arg12[%c0_17, %c0_18] : memref<128x1xf32, #tpu.memory_space<vmem>>, vector<128x1xf32>
    tpu.vector_store %arg12[%c0_17, %c0_18], %108 {strides = array<i32>} : memref<128x1xf32, #tpu.memory_space<vmem>>, vector<128x1xf32>,
    %c0_19 = arith.constant 0 : index
    %c0_20 = arith.constant 0 : index
    %110 = vector.load %arg13[%c0_19, %c0_20] : memref<128x128xf32, #tpu.memory_space<vmem>>, vector<128x128xf32>
    %111 = vector.broadcast %100 : vector<128x1xf32> to vector<128x128xf32>
    %112 = arith.mulf %111, %110 : vector<128x128xf32>
    %c0_21 = arith.constant 0 : index
    %c0_22 = arith.constant 0 : index
    %113 = vector.load %arg5[%c0_21, %c0_22] : memref<128x128xf32, #tpu.memory_space<vmem>>, vector<128x128xf32>
    %cst_23 = arith.constant dense<0.000000e+00> : vector<128x128xf32>
    %114 = tpu.matmul %103, %113, %cst_23 {dimension_numbers = #tpu.dot_dimension_numbers<[1], [0], [0], [1], [0, 0, 1, 1], [], []>, precision = #tpu.contract_precision<fp32>} : vector<128x128xf32>, vector<128x128xf32>, vector<128x128xf32> -> vector<128x128xf32>
    %115 = arith.addf %112, %114 : vector<128x128xf32>
    %c0_24 = arith.constant 0 : index
    %c0_25 = arith.constant 0 : index
    %116 = vector.load %arg13[%c0_24, %c0_25] : memref<128x128xf32, #tpu.memory_space<vmem>>, vector<128x128xf32>
    tpu.vector_store %arg13[%c0_24, %c0_25], %115 {strides = array<i32>} : memref<128x128xf32, #tpu.memory_space<vmem>>, vector<128x128xf32>,
    %c0_26 = arith.constant 0 : index
    %c0_27 = arith.constant 0 : index
    %117 = vector.load %arg11[%c0_26, %c0_27] : memref<128x1xf32, #tpu.memory_space<vmem>>, vector<128x1xf32>
    tpu.vector_store %arg11[%c0_26, %c0_27], %98 {strides = array<i32>} : memref<128x1xf32, #tpu.memory_space<vmem>>, vector<128x1xf32>,
    %c0_i32_28 = arith.constant 0 : i32
    %118 = arith.cmpi eq, %arg1, %c0_i32_28 : i32
    %119 = arith.extui %118 : i1 to i32
    %c0_i32_29 = arith.constant 0 : i32
    %120 = arith.cmpi ne, %119, %c0_i32_29 : i32
    scf.if %120 {
      %c0_30 = arith.constant 0 : index
      %c0_31 = arith.constant 0 : index
      %121 = vector.load %arg12[%c0_30, %c0_31] : memref<128x1xf32, #tpu.memory_space<vmem>>, vector<128x1xf32>
      %122 = tpu.reciprocal %121 : vector<128x1xf32> -> vector<128x1xf32>
      %c0_32 = arith.constant 0 : index
      %c0_33 = arith.constant 0 : index
      %123 = vector.load %arg13[%c0_32, %c0_33] : memref<128x128xf32, #tpu.memory_space<vmem>>, vector<128x128xf32>
      %124 = vector.broadcast %122 : vector<128x1xf32> to vector<128x128xf32>
      %125 = arith.mulf %123, %124 : vector<128x128xf32>
      %c0_34 = arith.constant 0 : index
      %c0_35 = arith.constant 0 : index
      %126 = vector.load %arg9[%c0_34, %c0_35] : memref<1x128xf32, #tpu.memory_space<vmem>>, vector<1x128xf32>
      %127 = vector.broadcast %126 : vector<1x128xf32> to vector<128x128xf32>
      %128 = arith.addf %125, %127 : vector<128x128xf32>
      %c0_36 = arith.constant 0 : index
      %c0_37 = arith.constant 0 : index
      %129 = vector.load %arg10[%c0_36, %c0_37] : memref<128x128xf32, #tpu.memory_space<vmem>>, vector<128x128xf32>
      tpu.vector_store %arg10[%c0_36, %c0_37], %128 {strides = array<i32>} : memref<128x128xf32, #tpu.memory_space<vmem>>, vector<128x128xf32>,
    } else {
    }
    return
  }
  func.func @transform_0(%arg0: i32, %arg1: i32) -> i32 {
    %c0_i32 = arith.constant 0 : i32
    %c0_i32_0 = arith.constant 0 : i32
    return %c0_i32 : i32
  }
  func.func @transform_1(%arg0: i32, %arg1: i32) -> (i32, i32) {
    %c0_i32 = arith.constant 0 : i32
    %c0_i32_0 = arith.constant 0 : i32
    return %arg0, %c0_i32 : i32, i32
  }
  func.func @transform_2(%arg0: i32, %arg1: i32) -> (i32, i32) {
    %c0_i32 = arith.constant 0 : i32
    %c0_i32_0 = arith.constant 0 : i32
    return %arg0, %c0_i32 : i32, i32
  }
  func.func @transform_3(%arg0: i32, %arg1: i32) -> (i32, i32) {
    %c0_i32 = arith.constant 0 : i32
    %c0_i32_0 = arith.constant 0 : i32
    return %arg1, %c0_i32 : i32, i32
  }
  func.func @transform_4(%arg0: i32, %arg1: i32) -> (i32, i32) {
    %c0_i32 = arith.constant 0 : i32
    %c0_i32_0 = arith.constant 0 : i32
    return %c0_i32, %arg1 : i32, i32
  }
  func.func @transform_5(%arg0: i32, %arg1: i32) -> (i32, i32) {
    %c0_i32 = arith.constant 0 : i32
    %c0_i32_0 = arith.constant 0 : i32
    return %c0_i32, %arg1 : i32, i32
  }
  func.func @transform_6(%arg0: i32, %arg1: i32) -> (i32, i32) {
    %c0_i32 = arith.constant 0 : i32
    return %arg0, %arg1 : i32, i32
  }
  func.func @transform_7(%arg0: i32, %arg1: i32) -> (i32, i32) {
    %c0_i32 = arith.constant 0 : i32
    %c0_i32_0 = arith.constant 0 : i32
    %c0_i32_1 = arith.constant 0 : i32
    return %c0_i32, %c0_i32_0 : i32, i32
  }
  func.func @transform_8(%arg0: i32, %arg1: i32) -> (i32, i32) {
    %c0_i32 = arith.constant 0 : i32
    %c0_i32_0 = arith.constant 0 : i32
    return %arg0, %c0_i32 : i32, i32
  }
}

</mosaic_0001>

<llo_original>
// kernel: tpu_custom_call.1
$region0: #{tpu_custom_call.1}
  #allocation0 [shape = 'u32[]', space=smem, size = 0x4, offset = 0x4, fixed_abs, tag = 'smem constant byte address 0x4 - core index']
  #allocation1 [shape = 'u32[144,128]{1,0:T(1,128)}', space=vmem, size = 0x12000, scoped, tag = 'internal scratch']
  #allocation2 [shape = 'f32[128,1]{1,0:T(8,128)}', space=vmem, size = 0x10000, scoped, tag = 'scratch operand']
  #allocation3 [shape = 'f32[128,1]{1,0:T(8,128)}', space=vmem, size = 0x10000, scoped, tag = 'scratch operand']
  #allocation4 [shape = 'f32[128,128]{1,0:T(8,128)}', space=vmem, size = 0x10000, scoped, tag = 'scratch operand']
  %s0 = inlined_call_operand.vmem [shape: f32[8], index: 0, kind: input, shape index: {}]
  %s1 = inlined_call_operand.vmem [shape: f32[128,8], index: 1, kind: input, shape index: {}]
  %s2 = inlined_call_operand.vmem [shape: f32[128,1], index: 2, kind: input, shape index: {}]
  %s3 = inlined_call_operand.vmem [shape: f32[128,128], index: 3, kind: input, shape index: {}]
  %s4 = inlined_call_operand.vmem [shape: f32[8,128], index: 4, kind: input, shape index: {}]
  %s5 = inlined_call_operand.vmem [shape: f32[1,128], index: 5, kind: input, shape index: {}]
  %s6 = inlined_call_operand.vmem [shape: s8[128,128], index: 6, kind: input, shape index: {}]
  %s7 = inlined_call_operand.vmem [shape: f32[1,128], index: 7, kind: input, shape index: {}]
  %s8 = inlined_call_operand.hbm [shape: f32[128,128], index: 8, kind: output, shape index: {}]
  %s9 = sld [smem:[#allocation0]]
  $region54: #{tpu_custom_call.1} parent=0
    _
  %s11 = ssub.s32 1, %s9
  %s12 = scalar_select 0, %s11, %s9
  $region1: #{tpu_custom_call.1} parent=0
    #allocation5 [shape = 'u8[512]{0}', space=smem, size = 0x200, scoped, tag = 'input window, operand 0, single buffered']
    #allocation6 [shape = 's32[1]{0}', space=sflag, size = 0x4, scoped, tag = 'scoped memory for tpu_custom_call.1']
    #allocation7 [shape = 's32[1]{0}', space=sflag, size = 0x4, scoped, tag = 'scoped memory for tpu_custom_call.1']
    #allocation8 [shape = 'u8[65536]{0}', space=vmem, size = 0x10000, scoped, tag = 'output window, operand 0, single buffered']
    %13 = vsyncpa [#allocation7], 0
    %14 = vsyncpa [#allocation6], 0
    // Predicated region
    $region2: #{tpu_custom_call.1} parent=1 // pred_check
      _
    $region3: #{tpu_custom_call.1} parent=1 // pred_check_branch
      %16 = sbr.rel (0) target = $region5
    $region4: #{tpu_custom_call.1} parent=1 // pred_region
      %s18 = ssub.s32 16, 16
      %19 = vsyncadd [#allocation7], %s18
      %s21 = sshll.u32 %s0, 4
      %s22 = int_to_ptr.vmem [resolvable:$true] %s21
      %24 = dma.vmem_to_smem %s22, 16, [#allocation5], [#allocation7]
    $region5: #{tpu_custom_call.1} parent=1 // pred_fallthru
      _
    // Predicated region
    $region6: #{tpu_custom_call.1} parent=1 // pred_check
      _
    $region7: #{tpu_custom_call.1} parent=1 // pred_check_branch
      %26 = sbr.rel (0) target = $region9
    $region8: #{tpu_custom_call.1} parent=1 // pred_region
      _
    $region9: #{tpu_custom_call.1} parent=1 // pred_fallthru
      _
    // Predicated region
    $region10: #{tpu_custom_call.1} parent=1 // pred_check
      _
    $region11: #{tpu_custom_call.1} parent=1 // pred_check_branch
      %28 = sbr.rel (0) target = $region13
    $region12: #{tpu_custom_call.1} parent=1 // pred_region
      _
    $region13: #{tpu_custom_call.1} parent=1 // pred_fallthru
      _
    // Predicated region
    $region14: #{tpu_custom_call.1} parent=1 // pred_check
      _
    $region15: #{tpu_custom_call.1} parent=1 // pred_check_branch
      %30 = sbr.rel (0) target = $region17
    $region16: #{tpu_custom_call.1} parent=1 // pred_region
      _
    $region17: #{tpu_custom_call.1} parent=1 // pred_fallthru
      _
    // Predicated region
    $region18: #{tpu_custom_call.1} parent=1 // pred_check
      _
    $region19: #{tpu_custom_call.1} parent=1 // pred_check_branch
      %32 = sbr.rel (0) target = $region21
    $region20: #{tpu_custom_call.1} parent=1 // pred_region
      _
    $region21: #{tpu_custom_call.1} parent=1 // pred_fallthru
      _
    // Predicated region
    $region22: #{tpu_custom_call.1} parent=1 // pred_check
      _
    $region23: #{tpu_custom_call.1} parent=1 // pred_check_branch
      %34 = sbr.rel (0) target = $region25
    $region24: #{tpu_custom_call.1} parent=1 // pred_region
      _
    $region25: #{tpu_custom_call.1} parent=1 // pred_fallthru
      _
    // Predicated region
    $region26: #{tpu_custom_call.1} parent=1 // pred_check
      _
    $region27: #{tpu_custom_call.1} parent=1 // pred_check_branch
      %36 = sbr.rel (0) target = $region29
    $region28: #{tpu_custom_call.1} parent=1 // pred_region
      _
    $region29: #{tpu_custom_call.1} parent=1 // pred_fallthru
      _
    // Predicated region
    $region30: #{tpu_custom_call.1} parent=1 // pred_check
      _
    $region31: #{tpu_custom_call.1} parent=1 // pred_check_branch
      %38 = sbr.rel (0) target = $region33
    $region32: #{tpu_custom_call.1} parent=1 // pred_region
      _
    $region33: #{tpu_custom_call.1} parent=1 // pred_fallthru
      _
    // Predicated region
    $region34: #{tpu_custom_call.1} parent=1 // pred_check
      _
    $region35: #{tpu_custom_call.1} parent=1 // pred_check_branch
      %40 = sbr.rel (0) target = $region37
    $region36: #{tpu_custom_call.1} parent=1 // pred_region
      %41 = dma.done [#allocation7], 16
    $region37: #{tpu_custom_call.1} parent=1 // pred_fallthru
      _
    %42 = sfence
    %p45 = scmp.eq.s32.totalorder 0, 0
    // Predicated region
    $region38: #{tpu_custom_call.1} parent=1 // pred_check
      %p46 = pneg %p45
    $region39: #{tpu_custom_call.1} parent=1 // pred_check_branch
      %48 = sbr.rel (%p46) target = $region41
    $region40: #{tpu_custom_call.1} parent=1 // pred_region
      %vm49 = vcmask 7168
      %50 = vst.msk [vmem:[#allocation2] sm:$0xff] %vm49, -1e+30
      %51 = vst.msk [vmem:[#allocation2 + $0x8] sm:$0xff] %vm49, -1e+30
      %52 = vst.msk [vmem:[#allocation2 + $0x10] sm:$0xff] %vm49, -1e+30
      %53 = vst.msk [vmem:[#allocation2 + $0x18] sm:$0xff] %vm49, -1e+30
      %54 = vst.msk [vmem:[#allocation2 + $0x20] sm:$0xff] %vm49, -1e+30
      %55 = vst.msk [vmem:[#allocation2 + $0x28] sm:$0xff] %vm49, -1e+30
      %56 = vst.msk [vmem:[#allocation2 + $0x30] sm:$0xff] %vm49, -1e+30
      %57 = vst.msk [vmem:[#allocation2 + $0x38] sm:$0xff] %vm49, -1e+30
      %58 = vst.msk [vmem:[#allocation2 + $0x40] sm:$0xff] %vm49, -1e+30
      %59 = vst.msk [vmem:[#allocation2 + $0x48] sm:$0xff] %vm49, -1e+30
      %60 = vst.msk [vmem:[#allocation2 + $0x50] sm:$0xff] %vm49, -1e+30
      %61 = vst.msk [vmem:[#allocation2 + $0x58] sm:$0xff] %vm49, -1e+30
      %62 = vst.msk [vmem:[#allocation2 + $0x60] sm:$0xff] %vm49, -1e+30
      %63 = vst.msk [vmem:[#allocation2 + $0x68] sm:$0xff] %vm49, -1e+30
      %64 = vst.msk [vmem:[#allocation2 + $0x70] sm:$0xff] %vm49, -1e+30
      %65 = vst.msk [vmem:[#allocation2 + $0x78] sm:$0xff] %vm49, -1e+30
      %66 = vst.msk [vmem:[#allocation3] sm:$0xff] %vm49, 0.0
      %67 = vst.msk [vmem:[#allocation3 + $0x8] sm:$0xff] %vm49, 0.0
      %68 = vst.msk [vmem:[#allocation3 + $0x10] sm:$0xff] %vm49, 0.0
      %69 = vst.msk [vmem:[#allocation3 + $0x18] sm:$0xff] %vm49, 0.0
      %70 = vst.msk [vmem:[#allocation3 + $0x20] sm:$0xff] %vm49, 0.0
      %71 = vst.msk [vmem:[#allocation3 + $0x28] sm:$0xff] %vm49, 0.0
      %72 = vst.msk [vmem:[#allocation3 + $0x30] sm:$0xff] %vm49, 0.0
      %73 = vst.msk [vmem:[#allocation3 + $0x38] sm:$0xff] %vm49, 0.0
      %74 = vst.msk [vmem:[#allocation3 + $0x40] sm:$0xff] %vm49, 0.0
      %75 = vst.msk [vmem:[#allocation3 + $0x48] sm:$0xff] %vm49, 0.0
      %76 = vst.msk [vmem:[#allocation3 + $0x50] sm:$0xff] %vm49, 0.0
      %77 = vst.msk [vmem:[#allocation3 + $0x58] sm:$0xff] %vm49, 0.0
      %78 = vst.msk [vmem:[#allocation3 + $0x60] sm:$0xff] %vm49, 0.0
      %79 = vst.msk [vmem:[#allocation3 + $0x68] sm:$0xff] %vm49, 0.0
      %80 = vst.msk [vmem:[#allocation3 + $0x70] sm:$0xff] %vm49, 0.0
      %81 = vst.msk [vmem:[#allocation3 + $0x78] sm:$0xff] %vm49, 0.0
      %82 = vst [vmem:[#allocation4] sm:$0xff] 0.0
      %83 = vst [vmem:[#allocation4 + $0x8] sm:$0xff] 0.0
      %84 = vst [vmem:[#allocation4 + $0x10] sm:$0xff] 0.0
      %85 = vst [vmem:[#allocation4 + $0x18] sm:$0xff] 0.0
      %86 = vst [vmem:[#allocation4 + $0x20] sm:$0xff] 0.0
      %87 = vst [vmem:[#allocation4 + $0x28] sm:$0xff] 0.0
      %88 = vst [vmem:[#allocation4 + $0x30] sm:$0xff] 0.0
      %89 = vst [vmem:[#allocation4 + $0x38] sm:$0xff] 0.0
      %90 = vst [vmem:[#allocation4 + $0x40] sm:$0xff] 0.0
      %91 = vst [vmem:[#allocation4 + $0x48] sm:$0xff] 0.0
      %92 = vst [vmem:[#allocation4 + $0x50] sm:$0xff] 0.0
      %93 = vst [vmem:[#allocation4 + $0x58] sm:$0xff] 0.0
      %94 = vst [vmem:[#allocation4 + $0x60] sm:$0xff] 0.0
      %95 = vst [vmem:[#allocation4 + $0x68] sm:$0xff] 0.0
      %96 = vst [vmem:[#allocation4 + $0x70] sm:$0xff] 0.0
      %97 = vst [vmem:[#allocation4 + $0x78] sm:$0xff] 0.0
    $region41: #{tpu_custom_call.1} parent=1 // pred_fallthru
      _
    %v98 = vld [vmem:[%s1] sm:$0xff]
    %v99 = vld [vmem:[%s1 + $0x8] sm:$0xff]
    %v100 = vld [vmem:[%s1 + $0x10] sm:$0xff]
    %v101 = vld [vmem:[%s1 + $0x18] sm:$0xff]
    %v102 = vld [vmem:[%s1 + $0x20] sm:$0xff]
    %v103 = vld [vmem:[%s1 + $0x28] sm:$0xff]
    %v104 = vld [vmem:[%s1 + $0x30] sm:$0xff]
    %v105 = vld [vmem:[%s1 + $0x38] sm:$0xff]
    %v106 = vld [vmem:[%s1 + $0x40] sm:$0xff]
    %v107 = vld [vmem:[%s1 + $0x48] sm:$0xff]
    %v108 = vld [vmem:[%s1 + $0x50] sm:$0xff]
    %v109 = vld [vmem:[%s1 + $0x58] sm:$0xff]
    %v110 = vld [vmem:[%s1 + $0x60] sm:$0xff]
    %v111 = vld [vmem:[%s1 + $0x68] sm:$0xff]
    %v112 = vld [vmem:[%s1 + $0x70] sm:$0xff]
    %v113 = vld [vmem:[%s1 + $0x78] sm:$0xff]
    %v114 = vld [vmem:[%s4] sm:$0xff]
    %v115 = vld [vmem:[%s2] sm:$0xff]
    %v116 = vld [vmem:[%s2 + $0x8] sm:$0xff]
    %v117 = vld [vmem:[%s2 + $0x10] sm:$0xff]
    %v118 = vld [vmem:[%s2 + $0x18] sm:$0xff]
    %v119 = vld [vmem:[%s2 + $0x20] sm:$0xff]
    %v120 = vld [vmem:[%s2 + $0x28] sm:$0xff]
    %v121 = vld [vmem:[%s2 + $0x30] sm:$0xff]
    %v122 = vld [vmem:[%s2 + $0x38] sm:$0xff]
    %v123 = vld [vmem:[%s2 + $0x40] sm:$0xff]
    %v124 = vld [vmem:[%s2 + $0x48] sm:$0xff]
    %v125 = vld [vmem:[%s2 + $0x50] sm:$0xff]
    %v126 = vld [vmem:[%s2 + $0x58] sm:$0xff]
    %v127 = vld [vmem:[%s2 + $0x60] sm:$0xff]
    %v128 = vld [vmem:[%s2 + $0x68] sm:$0xff]
    %v129 = vld [vmem:[%s2 + $0x70] sm:$0xff]
    %v130 = vld [vmem:[%s2 + $0x78] sm:$0xff]
    %v131 = vld [vmem:[%s5] sm:$0x1]
    %133 = vset.pattern.permute.xlu0 0
    %134 = vperm.xlu0 %133, %v115
    %v135 = vpop.permute.xlu0 %134
    %138 = vset.pattern.permute.xlu0 0
    %139 = vperm.xlu0 %138, %v116
    %v140 = vpop.permute.xlu0 %139
    %143 = vset.pattern.permute.xlu0 0
    %144 = vperm.xlu0 %143, %v117
    %v145 = vpop.permute.xlu0 %144
    %148 = vset.pattern.permute.xlu0 0
    %149 = vperm.xlu0 %148, %v118
    %v150 = vpop.permute.xlu0 %149
    %153 = vset.pattern.permute.xlu0 0
    %154 = vperm.xlu0 %153, %v119
    %v155 = vpop.permute.xlu0 %154
    %158 = vset.pattern.permute.xlu0 0
    %159 = vperm.xlu0 %158, %v120
    %v160 = vpop.permute.xlu0 %159
    %163 = vset.pattern.permute.xlu0 0
    %164 = vperm.xlu0 %163, %v121
    %v165 = vpop.permute.xlu0 %164
    %168 = vset.pattern.permute.xlu0 0
    %169 = vperm.xlu0 %168, %v122
    %v170 = vpop.permute.xlu0 %169
    %173 = vset.pattern.permute.xlu0 0
    %174 = vperm.xlu0 %173, %v123
    %v175 = vpop.permute.xlu0 %174
    %178 = vset.pattern.permute.xlu0 0
    %179 = vperm.xlu0 %178, %v124
    %v180 = vpop.permute.xlu0 %179
    %183 = vset.pattern.permute.xlu0 0
    %184 = vperm.xlu0 %183, %v125
    %v185 = vpop.permute.xlu0 %184
    %188 = vset.pattern.permute.xlu0 0
    %189 = vperm.xlu0 %188, %v126
    %v190 = vpop.permute.xlu0 %189
    %193 = vset.pattern.permute.xlu0 0
    %194 = vperm.xlu0 %193, %v127
    %v195 = vpop.permute.xlu0 %194
    %198 = vset.pattern.permute.xlu0 0
    %199 = vperm.xlu0 %198, %v128
    %v200 = vpop.permute.xlu0 %199
    %203 = vset.pattern.permute.xlu0 0
    %204 = vperm.xlu0 %203, %v129
    %v205 = vpop.permute.xlu0 %204
    %208 = vset.pattern.permute.xlu0 0
    %209 = vperm.xlu0 %208, %v130
    %v210 = vpop.permute.xlu0 %209
    %v213 = vlaneseq
    %v214 = vshrl.u32 %v213, 7
    %v215 = vsub.s32 0, %v214
    %v216 = vrot.slane %v131, %v215
    %v218 = vadd.f32 %v135, %v216
    %v219 = vadd.f32 %v140, %v216
    %v220 = vadd.f32 %v145, %v216
    %v221 = vadd.f32 %v150, %v216
    %v222 = vadd.f32 %v155, %v216
    %v223 = vadd.f32 %v160, %v216
    %v224 = vadd.f32 %v165, %v216
    %v225 = vadd.f32 %v170, %v216
    %v226 = vadd.f32 %v175, %v216
    %v227 = vadd.f32 %v180, %v216
    %v228 = vadd.f32 %v185, %v216
    %v229 = vadd.f32 %v190, %v216
    %v230 = vadd.f32 %v195, %v216
    %v231 = vadd.f32 %v200, %v216
    %v232 = vadd.f32 %v205, %v216
    %v233 = vadd.f32 %v210, %v216
    %235 = vset.pattern.permute.xlu0 0
    %236 = vperm.xlu0 %235, %v98
    %v237 = vpop.permute.xlu0 %236
    %240 = vset.pattern.permute.xlu0 0
    %241 = vperm.xlu0 %240, %v99
    %v242 = vpop.permute.xlu0 %241
    %245 = vset.pattern.permute.xlu0 0
    %246 = vperm.xlu0 %245, %v100
    %v247 = vpop.permute.xlu0 %246
    %250 = vset.pattern.permute.xlu0 0
    %251 = vperm.xlu0 %250, %v101
    %v252 = vpop.permute.xlu0 %251
    %255 = vset.pattern.permute.xlu0 0
    %256 = vperm.xlu0 %255, %v102
    %v257 = vpop.permute.xlu0 %256
    %260 = vset.pattern.permute.xlu0 0
    %261 = vperm.xlu0 %260, %v103
    %v262 = vpop.permute.xlu0 %261
    %265 = vset.pattern.permute.xlu0 0
    %266 = vperm.xlu0 %265, %v104
    %v267 = vpop.permute.xlu0 %266
    %270 = vset.pattern.permute.xlu0 0
    %271 = vperm.xlu0 %270, %v105
    %v272 = vpop.permute.xlu0 %271
    %275 = vset.pattern.permute.xlu0 0
    %276 = vperm.xlu0 %275, %v106
    %v277 = vpop.permute.xlu0 %276
    %280 = vset.pattern.permute.xlu0 0
    %281 = vperm.xlu0 %280, %v107
    %v282 = vpop.permute.xlu0 %281
    %285 = vset.pattern.permute.xlu0 0
    %286 = vperm.xlu0 %285, %v108
    %v287 = vpop.permute.xlu0 %286
    %290 = vset.pattern.permute.xlu0 0
    %291 = vperm.xlu0 %290, %v109
    %v292 = vpop.permute.xlu0 %291
    %295 = vset.pattern.permute.xlu0 0
    %296 = vperm.xlu0 %295, %v110
    %v297 = vpop.permute.xlu0 %296
    %300 = vset.pattern.permute.xlu0 0
    %301 = vperm.xlu0 %300, %v111
    %v302 = vpop.permute.xlu0 %301
    %305 = vset.pattern.permute.xlu0 0
    %306 = vperm.xlu0 %305, %v112
    %v307 = vpop.permute.xlu0 %306
    %310 = vset.pattern.permute.xlu0 0
    %311 = vperm.xlu0 %310, %v113
    %v312 = vpop.permute.xlu0 %311
    %v314 = vlaneseq
    %v315 = vshrl.u32 %v314, 7
    %v316 = vsub.s32 0, %v315
    %v317 = vrot.slane %v114, %v316
    %v318 = vadd.f32 %v237, %v317
    %v319 = vadd.f32 %v242, %v317
    %v320 = vadd.f32 %v247, %v317
    %v321 = vadd.f32 %v252, %v317
    %v322 = vadd.f32 %v257, %v317
    %v323 = vadd.f32 %v262, %v317
    %v324 = vadd.f32 %v267, %v317
    %v325 = vadd.f32 %v272, %v317
    %v326 = vadd.f32 %v277, %v317
    %v327 = vadd.f32 %v282, %v317
    %v328 = vadd.f32 %v287, %v317
    %v329 = vadd.f32 %v292, %v317
    %v330 = vadd.f32 %v297, %v317
    %v331 = vadd.f32 %v302, %v317
    %v332 = vadd.f32 %v307, %v317
    %v333 = vadd.f32 %v312, %v317
    %s334 = sld [smem:[#allocation5]]
    %v335 = vand.u32 2147483647, %v318
    %v336 = vand.u32 2147483647, %v319
    %v337 = vand.u32 2147483647, %v320
    %v338 = vand.u32 2147483647, %v321
    %v339 = vand.u32 2147483647, %v322
    %v340 = vand.u32 2147483647, %v323
    %v341 = vand.u32 2147483647, %v324
    %v342 = vand.u32 2147483647, %v325
    %v343 = vand.u32 2147483647, %v326
    %v344 = vand.u32 2147483647, %v327
    %v345 = vand.u32 2147483647, %v328
    %v346 = vand.u32 2147483647, %v329
    %v347 = vand.u32 2147483647, %v330
    %v348 = vand.u32 2147483647, %v331
    %v349 = vand.u32 2147483647, %v332
    %v350 = vand.u32 2147483647, %v333
    %v351 = vstv %s334
    %v352 = vmul.f32 %v351, %v335
    %v353 = vmul.f32 %v351, %v336
    %v354 = vmul.f32 %v351, %v337
    %v355 = vmul.f32 %v351, %v338
    %v356 = vmul.f32 %v351, %v339
    %v357 = vmul.f32 %v351, %v340
    %v358 = vmul.f32 %v351, %v341
    %v359 = vmul.f32 %v351, %v342
    %v360 = vmul.f32 %v351, %v343
    %v361 = vmul.f32 %v351, %v344
    %v362 = vmul.f32 %v351, %v345
    %v363 = vmul.f32 %v351, %v346
    %v364 = vmul.f32 %v351, %v347
    %v365 = vmul.f32 %v351, %v348
    %v366 = vmul.f32 %v351, %v349
    %v367 = vmul.f32 %v351, %v350
    %v368 = vadd.f32 %v218, %v352
    %v369 = vadd.f32 %v219, %v353
    %v370 = vadd.f32 %v220, %v354
    %v371 = vadd.f32 %v221, %v355
    %v372 = vadd.f32 %v222, %v356
    %v373 = vadd.f32 %v223, %v357
    %v374 = vadd.f32 %v224, %v358
    %v375 = vadd.f32 %v225, %v359
    %v376 = vadd.f32 %v226, %v360
    %v377 = vadd.f32 %v227, %v361
    %v378 = vadd.f32 %v228, %v362
    %v379 = vadd.f32 %v229, %v363
    %v380 = vadd.f32 %v230, %v364
    %v381 = vadd.f32 %v231, %v365
    %v382 = vadd.f32 %v232, %v366
    %v383 = vadd.f32 %v233, %v367
    %384 = vset.pattern.permute.xlu0 1
    %385 = vperm.xlu0 %384, %v98
    %v386 = vpop.permute.xlu0 %385
    %388 = vset.pattern.permute.xlu0 1
    %389 = vperm.xlu0 %388, %v99
    %v390 = vpop.permute.xlu0 %389
    %392 = vset.pattern.permute.xlu0 1
    %393 = vperm.xlu0 %392, %v100
    %v394 = vpop.permute.xlu0 %393
    %396 = vset.pattern.permute.xlu0 1
    %397 = vperm.xlu0 %396, %v101
    %v398 = vpop.permute.xlu0 %397
    %400 = vset.pattern.permute.xlu0 1
    %401 = vperm.xlu0 %400, %v102
    %v402 = vpop.permute.xlu0 %401
    %404 = vset.pattern.permute.xlu0 1
    %405 = vperm.xlu0 %404, %v103
    %v406 = vpop.permute.xlu0 %405
    %408 = vset.pattern.permute.xlu0 1
    %409 = vperm.xlu0 %408, %v104
    %v410 = vpop.permute.xlu0 %409
    %412 = vset.pattern.permute.xlu0 1
    %413 = vperm.xlu0 %412, %v105
    %v414 = vpop.permute.xlu0 %413
    %416 = vset.pattern.permute.xlu0 1
    %417 = vperm.xlu0 %416, %v106
    %v418 = vpop.permute.xlu0 %417
    %420 = vset.pattern.permute.xlu0 1
    %421 = vperm.xlu0 %420, %v107
    %v422 = vpop.permute.xlu0 %421
    %424 = vset.pattern.permute.xlu0 1
    %425 = vperm.xlu0 %424, %v108
    %v426 = vpop.permute.xlu0 %425
    %428 = vset.pattern.permute.xlu0 1
    %429 = vperm.xlu0 %428, %v109
    %v430 = vpop.permute.xlu0 %429
    %432 = vset.pattern.permute.xlu0 1
    %433 = vperm.xlu0 %432, %v110
    %v434 = vpop.permute.xlu0 %433
    %436 = vset.pattern.permute.xlu0 1
    %437 = vperm.xlu0 %436, %v111
    %v438 = vpop.permute.xlu0 %437
    %440 = vset.pattern.permute.xlu0 1
    %441 = vperm.xlu0 %440, %v112
    %v442 = vpop.permute.xlu0 %441
    %444 = vset.pattern.permute.xlu0 1
    %445 = vperm.xlu0 %444, %v113
    %v446 = vpop.permute.xlu0 %445
    %v448 = vlaneseq
    %v449 = vshrl.u32 %v448, 7
    %v450 = vsub.s32 1, %v449
    %v451 = vrot.slane %v114, %v450
    %v452 = vadd.f32 %v386, %v451
    %v453 = vadd.f32 %v390, %v451
    %v454 = vadd.f32 %v394, %v451
    %v455 = vadd.f32 %v398, %v451
    %v456 = vadd.f32 %v402, %v451
    %v457 = vadd.f32 %v406, %v451
    %v458 = vadd.f32 %v410, %v451
    %v459 = vadd.f32 %v414, %v451
    %v460 = vadd.f32 %v418, %v451
    %v461 = vadd.f32 %v422, %v451
    %v462 = vadd.f32 %v426, %v451
    %v463 = vadd.f32 %v430, %v451
    %v464 = vadd.f32 %v434, %v451
    %v465 = vadd.f32 %v438, %v451
    %v466 = vadd.f32 %v442, %v451
    %v467 = vadd.f32 %v446, %v451
    %s468 = sld [smem:[#allocation5 + $0x1]]
    %v469 = vand.u32 2147483647, %v452
    %v470 = vand.u32 2147483647, %v453
    %v471 = vand.u32 2147483647, %v454
    %v472 = vand.u32 2147483647, %v455
    %v473 = vand.u32 2147483647, %v456
    %v474 = vand.u32 2147483647, %v457
    %v475 = vand.u32 2147483647, %v458
    %v476 = vand.u32 2147483647, %v459
    %v477 = vand.u32 2147483647, %v460
    %v478 = vand.u32 2147483647, %v461
    %v479 = vand.u32 2147483647, %v462
    %v480 = vand.u32 2147483647, %v463
    %v481 = vand.u32 2147483647, %v464
    %v482 = vand.u32 2147483647, %v465
    %v483 = vand.u32 2147483647, %v466
    %v484 = vand.u32 2147483647, %v467
    %v485 = vstv %s468
    %v486 = vmul.f32 %v485, %v469
    %v487 = vmul.f32 %v485, %v470
    %v488 = vmul.f32 %v485, %v471
    %v489 = vmul.f32 %v485, %v472
    %v490 = vmul.f32 %v485, %v473
    %v491 = vmul.f32 %v485, %v474
    %v492 = vmul.f32 %v485, %v475
    %v493 = vmul.f32 %v485, %v476
    %v494 = vmul.f32 %v485, %v477
    %v495 = vmul.f32 %v485, %v478
    %v496 = vmul.f32 %v485, %v479
    %v497 = vmul.f32 %v485, %v480
    %v498 = vmul.f32 %v485, %v481
    %v499 = vmul.f32 %v485, %v482
    %v500 = vmul.f32 %v485, %v483
    %v501 = vmul.f32 %v485, %v484
    %v502 = vadd.f32 %v368, %v486
    %v503 = vadd.f32 %v369, %v487
    %v504 = vadd.f32 %v370, %v488
    %v505 = vadd.f32 %v371, %v489
    %v506 = vadd.f32 %v372, %v490
    %v507 = vadd.f32 %v373, %v491
    %v508 = vadd.f32 %v374, %v492
    %v509 = vadd.f32 %v375, %v493
    %v510 = vadd.f32 %v376, %v494
    %v511 = vadd.f32 %v377, %v495
    %v512 = vadd.f32 %v378, %v496
    %v513 = vadd.f32 %v379, %v497
    %v514 = vadd.f32 %v380, %v498
    %v515 = vadd.f32 %v381, %v499
    %v516 = vadd.f32 %v382, %v500
    %v517 = vadd.f32 %v383, %v501
    %518 = vset.pattern.permute.xlu0 2
    %519 = vperm.xlu0 %518, %v98
    %v520 = vpop.permute.xlu0 %519
    %522 = vset.pattern.permute.xlu0 2
    %523 = vperm.xlu0 %522, %v99
    %v524 = vpop.permute.xlu0 %523
    %526 = vset.pattern.permute.xlu0 2
    %527 = vperm.xlu0 %526, %v100
    %v528 = vpop.permute.xlu0 %527
    %530 = vset.pattern.permute.xlu0 2
    %531 = vperm.xlu0 %530, %v101
    %v532 = vpop.permute.xlu0 %531
    %534 = vset.pattern.permute.xlu0 2
    %535 = vperm.xlu0 %534, %v102
    %v536 = vpop.permute.xlu0 %535
    %538 = vset.pattern.permute.xlu0 2
    %539 = vperm.xlu0 %538, %v103
    %v540 = vpop.permute.xlu0 %539
    %542 = vset.pattern.permute.xlu0 2
    %543 = vperm.xlu0 %542, %v104
    %v544 = vpop.permute.xlu0 %543
    %546 = vset.pattern.permute.xlu0 2
    %547 = vperm.xlu0 %546, %v105
    %v548 = vpop.permute.xlu0 %547
    %550 = vset.pattern.permute.xlu0 2
    %551 = vperm.xlu0 %550, %v106
    %v552 = vpop.permute.xlu0 %551
    %554 = vset.pattern.permute.xlu0 2
    %555 = vperm.xlu0 %554, %v107
    %v556 = vpop.permute.xlu0 %555
    %558 = vset.pattern.permute.xlu0 2
    %559 = vperm.xlu0 %558, %v108
    %v560 = vpop.permute.xlu0 %559
    %562 = vset.pattern.permute.xlu0 2
    %563 = vperm.xlu0 %562, %v109
    %v564 = vpop.permute.xlu0 %563
    %566 = vset.pattern.permute.xlu0 2
    %567 = vperm.xlu0 %566, %v110
    %v568 = vpop.permute.xlu0 %567
    %570 = vset.pattern.permute.xlu0 2
    %571 = vperm.xlu0 %570, %v111
    %v572 = vpop.permute.xlu0 %571
    %574 = vset.pattern.permute.xlu0 2
    %575 = vperm.xlu0 %574, %v112
    %v576 = vpop.permute.xlu0 %575
    %578 = vset.pattern.permute.xlu0 2
    %579 = vperm.xlu0 %578, %v113
    %v580 = vpop.permute.xlu0 %579
    %v582 = vlaneseq
    %v583 = vshrl.u32 %v582, 7
    %v584 = vsub.s32 2, %v583
    %v585 = vrot.slane %v114, %v584
    %v586 = vadd.f32 %v520, %v585
    %v587 = vadd.f32 %v524, %v585
    %v588 = vadd.f32 %v528, %v585
    %v589 = vadd.f32 %v532, %v585
    %v590 = vadd.f32 %v536, %v585
    %v591 = vadd.f32 %v540, %v585
    %v592 = vadd.f32 %v544, %v585
    %v593 = vadd.f32 %v548, %v585
    %v594 = vadd.f32 %v552, %v585
    %v595 = vadd.f32 %v556, %v585
    %v596 = vadd.f32 %v560, %v585
    %v597 = vadd.f32 %v564, %v585
    %v598 = vadd.f32 %v568, %v585
    %v599 = vadd.f32 %v572, %v585
    %v600 = vadd.f32 %v576, %v585
    %v601 = vadd.f32 %v580, %v585
    %s602 = sld [smem:[#allocation5 + $0x2]]
    %v603 = vand.u32 2147483647, %v586
    %v604 = vand.u32 2147483647, %v587
    %v605 = vand.u32 2147483647, %v588
    %v606 = vand.u32 2147483647, %v589
    %v607 = vand.u32 2147483647, %v590
    %v608 = vand.u32 2147483647, %v591
    %v609 = vand.u32 2147483647, %v592
    %v610 = vand.u32 2147483647, %v593
    %v611 = vand.u32 2147483647, %v594
    %v612 = vand.u32 2147483647, %v595
    %v613 = vand.u32 2147483647, %v596
    %v614 = vand.u32 2147483647, %v597
    %v615 = vand.u32 2147483647, %v598
    %v616 = vand.u32 2147483647, %v599
    %v617 = vand.u32 2147483647, %v600
    %v618 = vand.u32 2147483647, %v601
    %v619 = vstv %s602
    %v620 = vmul.f32 %v619, %v603
    %v621 = vmul.f32 %v619, %v604
    %v622 = vmul.f32 %v619, %v605
    %v623 = vmul.f32 %v619, %v606
    %v624 = vmul.f32 %v619, %v607
    %v625 = vmul.f32 %v619, %v608
    %v626 = vmul.f32 %v619, %v609
    %v627 = vmul.f32 %v619, %v610
    %v628 = vmul.f32 %v619, %v611
    %v629 = vmul.f32 %v619, %v612
    %v630 = vmul.f32 %v619, %v613
    %v631 = vmul.f32 %v619, %v614
    %v632 = vmul.f32 %v619, %v615
    %v633 = vmul.f32 %v619, %v616
    %v634 = vmul.f32 %v619, %v617
    %v635 = vmul.f32 %v619, %v618
    %v636 = vadd.f32 %v502, %v620
    %v637 = vadd.f32 %v503, %v621
    %v638 = vadd.f32 %v504, %v622
    %v639 = vadd.f32 %v505, %v623
    %v640 = vadd.f32 %v506, %v624
    %v641 = vadd.f32 %v507, %v625
    %v642 = vadd.f32 %v508, %v626
    %v643 = vadd.f32 %v509, %v627
    %v644 = vadd.f32 %v510, %v628
    %v645 = vadd.f32 %v511, %v629
    %v646 = vadd.f32 %v512, %v630
    %v647 = vadd.f32 %v513, %v631
    %v648 = vadd.f32 %v514, %v632
    %v649 = vadd.f32 %v515, %v633
    %v650 = vadd.f32 %v516, %v634
    %v651 = vadd.f32 %v517, %v635
    %652 = vset.pattern.permute.xlu0 3
    %653 = vperm.xlu0 %652, %v98
    %v654 = vpop.permute.xlu0 %653
    %656 = vset.pattern.permute.xlu0 3
    %657 = vperm.xlu0 %656, %v99
    %v658 = vpop.permute.xlu0 %657
    %660 = vset.pattern.permute.xlu0 3
    %661 = vperm.xlu0 %660, %v100
    %v662 = vpop.permute.xlu0 %661
    %664 = vset.pattern.permute.xlu0 3
    %665 = vperm.xlu0 %664, %v101
    %v666 = vpop.permute.xlu0 %665
    %668 = vset.pattern.permute.xlu0 3
    %669 = vperm.xlu0 %668, %v102
    %v670 = vpop.permute.xlu0 %669
    %672 = vset.pattern.permute.xlu0 3
    %673 = vperm.xlu0 %672, %v103
    %v674 = vpop.permute.xlu0 %673
    %676 = vset.pattern.permute.xlu0 3
    %677 = vperm.xlu0 %676, %v104
    %v678 = vpop.permute.xlu0 %677
    %680 = vset.pattern.permute.xlu0 3
    %681 = vperm.xlu0 %680, %v105
    %v682 = vpop.permute.xlu0 %681
    %684 = vset.pattern.permute.xlu0 3
    %685 = vperm.xlu0 %684, %v106
    %v686 = vpop.permute.xlu0 %685
    %688 = vset.pattern.permute.xlu0 3
    %689 = vperm.xlu0 %688, %v107
    %v690 = vpop.permute.xlu0 %689
    %692 = vset.pattern.permute.xlu0 3
    %693 = vperm.xlu0 %692, %v108
    %v694 = vpop.permute.xlu0 %693
    %696 = vset.pattern.permute.xlu0 3
    %697 = vperm.xlu0 %696, %v109
    %v698 = vpop.permute.xlu0 %697
    %700 = vset.pattern.permute.xlu0 3
    %701 = vperm.xlu0 %700, %v110
    %v702 = vpop.permute.xlu0 %701
    %704 = vset.pattern.permute.xlu0 3
    %705 = vperm.xlu0 %704, %v111
    %v706 = vpop.permute.xlu0 %705
    %708 = vset.pattern.permute.xlu0 3
    %709 = vperm.xlu0 %708, %v112
    %v710 = vpop.permute.xlu0 %709
    %712 = vset.pattern.permute.xlu0 3
    %713 = vperm.xlu0 %712, %v113
    %v714 = vpop.permute.xlu0 %713
    %v716 = vlaneseq
    %v717 = vshrl.u32 %v716, 7
    %v718 = vsub.s32 3, %v717
    %v719 = vrot.slane %v114, %v718
    %v720 = vadd.f32 %v654, %v719
    %v721 = vadd.f32 %v658, %v719
    %v722 = vadd.f32 %v662, %v719
    %v723 = vadd.f32 %v666, %v719
    %v724 = vadd.f32 %v670, %v719
    %v725 = vadd.f32 %v674, %v719
    %v726 = vadd.f32 %v678, %v719
    %v727 = vadd.f32 %v682, %v719
    %v728 = vadd.f32 %v686, %v719
    %v729 = vadd.f32 %v690, %v719
    %v730 = vadd.f32 %v694, %v719
    %v731 = vadd.f32 %v698, %v719
    %v732 = vadd.f32 %v702, %v719
    %v733 = vadd.f32 %v706, %v719
    %v734 = vadd.f32 %v710, %v719
    %v735 = vadd.f32 %v714, %v719
    %s736 = sld [smem:[#allocation5 + $0x3]]
    %v737 = vand.u32 2147483647, %v720
    %v738 = vand.u32 2147483647, %v721
    %v739 = vand.u32 2147483647, %v722
    %v740 = vand.u32 2147483647, %v723
    %v741 = vand.u32 2147483647, %v724
    %v742 = vand.u32 2147483647, %v725
    %v743 = vand.u32 2147483647, %v726
    %v744 = vand.u32 2147483647, %v727
    %v745 = vand.u32 2147483647, %v728
    %v746 = vand.u32 2147483647, %v729
    %v747 = vand.u32 2147483647, %v730
    %v748 = vand.u32 2147483647, %v731
    %v749 = vand.u32 2147483647, %v732
    %v750 = vand.u32 2147483647, %v733
    %v751 = vand.u32 2147483647, %v734
    %v752 = vand.u32 2147483647, %v735
    %v753 = vstv %s736
    %v754 = vmul.f32 %v753, %v737
    %v755 = vmul.f32 %v753, %v738
    %v756 = vmul.f32 %v753, %v739
    %v757 = vmul.f32 %v753, %v740
    %v758 = vmul.f32 %v753, %v741
    %v759 = vmul.f32 %v753, %v742
    %v760 = vmul.f32 %v753, %v743
    %v761 = vmul.f32 %v753, %v744
    %v762 = vmul.f32 %v753, %v745
    %v763 = vmul.f32 %v753, %v746
    %v764 = vmul.f32 %v753, %v747
    %v765 = vmul.f32 %v753, %v748
    %v766 = vmul.f32 %v753, %v749
    %v767 = vmul.f32 %v753, %v750
    %v768 = vmul.f32 %v753, %v751
    %v769 = vmul.f32 %v753, %v752
    %v770 = vadd.f32 %v636, %v754
    %v771 = vadd.f32 %v637, %v755
    %v772 = vadd.f32 %v638, %v756
    %v773 = vadd.f32 %v639, %v757
    %v774 = vadd.f32 %v640, %v758
    %v775 = vadd.f32 %v641, %v759
    %v776 = vadd.f32 %v642, %v760
    %v777 = vadd.f32 %v643, %v761
    %v778 = vadd.f32 %v644, %v762
    %v779 = vadd.f32 %v645, %v763
    %v780 = vadd.f32 %v646, %v764
    %v781 = vadd.f32 %v647, %v765
    %v782 = vadd.f32 %v648, %v766
    %v783 = vadd.f32 %v649, %v767
    %v784 = vadd.f32 %v650, %v768
    %v785 = vadd.f32 %v651, %v769
    %786 = vset.pattern.permute.xlu0 4
    %787 = vperm.xlu0 %786, %v98
    %v788 = vpop.permute.xlu0 %787
    %790 = vset.pattern.permute.xlu0 4
    %791 = vperm.xlu0 %790, %v99
    %v792 = vpop.permute.xlu0 %791
    %794 = vset.pattern.permute.xlu0 4
    %795 = vperm.xlu0 %794, %v100
    %v796 = vpop.permute.xlu0 %795
    %798 = vset.pattern.permute.xlu0 4
    %799 = vperm.xlu0 %798, %v101
    %v800 = vpop.permute.xlu0 %799
    %802 = vset.pattern.permute.xlu0 4
    %803 = vperm.xlu0 %802, %v102
    %v804 = vpop.permute.xlu0 %803
    %806 = vset.pattern.permute.xlu0 4
    %807 = vperm.xlu0 %806, %v103
    %v808 = vpop.permute.xlu0 %807
    %810 = vset.pattern.permute.xlu0 4
    %811 = vperm.xlu0 %810, %v104
    %v812 = vpop.permute.xlu0 %811
    %814 = vset.pattern.permute.xlu0 4
    %815 = vperm.xlu0 %814, %v105
    %v816 = vpop.permute.xlu0 %815
    %818 = vset.pattern.permute.xlu0 4
    %819 = vperm.xlu0 %818, %v106
    %v820 = vpop.permute.xlu0 %819
    %822 = vset.pattern.permute.xlu0 4
    %823 = vperm.xlu0 %822, %v107
    %v824 = vpop.permute.xlu0 %823
    %826 = vset.pattern.permute.xlu0 4
    %827 = vperm.xlu0 %826, %v108
    %v828 = vpop.permute.xlu0 %827
    %830 = vset.pattern.permute.xlu0 4
    %831 = vperm.xlu0 %830, %v109
    %v832 = vpop.permute.xlu0 %831
    %834 = vset.pattern.permute.xlu0 4
    %835 = vperm.xlu0 %834, %v110
    %v836 = vpop.permute.xlu0 %835
    %838 = vset.pattern.permute.xlu0 4
    %839 = vperm.xlu0 %838, %v111
    %v840 = vpop.permute.xlu0 %839
    %842 = vset.pattern.permute.xlu0 4
    %843 = vperm.xlu0 %842, %v112
    %v844 = vpop.permute.xlu0 %843
    %846 = vset.pattern.permute.xlu0 4
    %847 = vperm.xlu0 %846, %v113
    %v848 = vpop.permute.xlu0 %847
    %v850 = vlaneseq
    %v851 = vshrl.u32 %v850, 7
    %v852 = vsub.s32 4, %v851
    %v853 = vrot.slane %v114, %v852
    %v854 = vadd.f32 %v788, %v853
    %v855 = vadd.f32 %v792, %v853
    %v856 = vadd.f32 %v796, %v853
    %v857 = vadd.f32 %v800, %v853
    %v858 = vadd.f32 %v804, %v853
    %v859 = vadd.f32 %v808, %v853
    %v860 = vadd.f32 %v812, %v853
    %v861 = vadd.f32 %v816, %v853
    %v862 = vadd.f32 %v820, %v853
    %v863 = vadd.f32 %v824, %v853
    %v864 = vadd.f32 %v828, %v853
    %v865 = vadd.f32 %v832, %v853
    %v866 = vadd.f32 %v836, %v853
    %v867 = vadd.f32 %v840, %v853
    %v868 = vadd.f32 %v844, %v853
    %v869 = vadd.f32 %v848, %v853
    %s870 = sld [smem:[#allocation5 + $0x4]]
    %v871 = vand.u32 2147483647, %v854
    %v872 = vand.u32 2147483647, %v855
    %v873 = vand.u32 2147483647, %v856
    %v874 = vand.u32 2147483647, %v857
    %v875 = vand.u32 2147483647, %v858
    %v876 = vand.u32 2147483647, %v859
    %v877 = vand.u32 2147483647, %v860
    %v878 = vand.u32 2147483647, %v861
    %v879 = vand.u32 2147483647, %v862
    %v880 = vand.u32 2147483647, %v863
    %v881 = vand.u32 2147483647, %v864
    %v882 = vand.u32 2147483647, %v865
    %v883 = vand.u32 2147483647, %v866
    %v884 = vand.u32 2147483647, %v867
    %v885 = vand.u32 2147483647, %v868
    %v886 = vand.u32 2147483647, %v869
    %v887 = vstv %s870
    %v888 = vmul.f32 %v887, %v871
    %v889 = vmul.f32 %v887, %v872
    %v890 = vmul.f32 %v887, %v873
    %v891 = vmul.f32 %v887, %v874
    %v892 = vmul.f32 %v887, %v875
    %v893 = vmul.f32 %v887, %v876
    %v894 = vmul.f32 %v887, %v877
    %v895 = vmul.f32 %v887, %v878
    %v896 = vmul.f32 %v887, %v879
    %v897 = vmul.f32 %v887, %v880
    %v898 = vmul.f32 %v887, %v881
    %v899 = vmul.f32 %v887, %v882
    %v900 = vmul.f32 %v887, %v883
    %v901 = vmul.f32 %v887, %v884
    %v902 = vmul.f32 %v887, %v885
    %v903 = vmul.f32 %v887, %v886
    %v904 = vadd.f32 %v770, %v888
    %v905 = vadd.f32 %v771, %v889
    %v906 = vadd.f32 %v772, %v890
    %v907 = vadd.f32 %v773, %v891
    %v908 = vadd.f32 %v774, %v892
    %v909 = vadd.f32 %v775, %v893
    %v910 = vadd.f32 %v776, %v894
    %v911 = vadd.f32 %v777, %v895
    %v912 = vadd.f32 %v778, %v896
    %v913 = vadd.f32 %v779, %v897
    %v914 = vadd.f32 %v780, %v898
    %v915 = vadd.f32 %v781, %v899
    %v916 = vadd.f32 %v782, %v900
    %v917 = vadd.f32 %v783, %v901
    %v918 = vadd.f32 %v784, %v902
    %v919 = vadd.f32 %v785, %v903
    %920 = vset.pattern.permute.xlu0 5
    %921 = vperm.xlu0 %920, %v98
    %v922 = vpop.permute.xlu0 %921
    %924 = vset.pattern.permute.xlu0 5
    %925 = vperm.xlu0 %924, %v99
    %v926 = vpop.permute.xlu0 %925
    %928 = vset.pattern.permute.xlu0 5
    %929 = vperm.xlu0 %928, %v100
    %v930 = vpop.permute.xlu0 %929
    %932 = vset.pattern.permute.xlu0 5
    %933 = vperm.xlu0 %932, %v101
    %v934 = vpop.permute.xlu0 %933
    %936 = vset.pattern.permute.xlu0 5
    %937 = vperm.xlu0 %936, %v102
    %v938 = vpop.permute.xlu0 %937
    %940 = vset.pattern.permute.xlu0 5
    %941 = vperm.xlu0 %940, %v103
    %v942 = vpop.permute.xlu0 %941
    %944 = vset.pattern.permute.xlu0 5
    %945 = vperm.xlu0 %944, %v104
    %v946 = vpop.permute.xlu0 %945
    %948 = vset.pattern.permute.xlu0 5
    %949 = vperm.xlu0 %948, %v105
    %v950 = vpop.permute.xlu0 %949
    %952 = vset.pattern.permute.xlu0 5
    %953 = vperm.xlu0 %952, %v106
    %v954 = vpop.permute.xlu0 %953
    %956 = vset.pattern.permute.xlu0 5
    %957 = vperm.xlu0 %956, %v107
    %v958 = vpop.permute.xlu0 %957
    %960 = vset.pattern.permute.xlu0 5
    %961 = vperm.xlu0 %960, %v108
    %v962 = vpop.permute.xlu0 %961
    %964 = vset.pattern.permute.xlu0 5
    %965 = vperm.xlu0 %964, %v109
    %v966 = vpop.permute.xlu0 %965
    %968 = vset.pattern.permute.xlu0 5
    %969 = vperm.xlu0 %968, %v110
    %v970 = vpop.permute.xlu0 %969
    %972 = vset.pattern.permute.xlu0 5
    %973 = vperm.xlu0 %972, %v111
    %v974 = vpop.permute.xlu0 %973
    %976 = vset.pattern.permute.xlu0 5
    %977 = vperm.xlu0 %976, %v112
    %v978 = vpop.permute.xlu0 %977
    %980 = vset.pattern.permute.xlu0 5
    %981 = vperm.xlu0 %980, %v113
    %v982 = vpop.permute.xlu0 %981
    %v984 = vlaneseq
    %v985 = vshrl.u32 %v984, 7
    %v986 = vsub.s32 5, %v985
    %v987 = vrot.slane %v114, %v986
    %v988 = vadd.f32 %v922, %v987
    %v989 = vadd.f32 %v926, %v987
    %v990 = vadd.f32 %v930, %v987
    %v991 = vadd.f32 %v934, %v987
    %v992 = vadd.f32 %v938, %v987
    %v993 = vadd.f32 %v942, %v987
    %v994 = vadd.f32 %v946, %v987
    %v995 = vadd.f32 %v950, %v987
    %v996 = vadd.f32 %v954, %v987
    %v997 = vadd.f32 %v958, %v987
    %v998 = vadd.f32 %v962, %v987
    %v999 = vadd.f32 %v966, %v987
    %v1000 = vadd.f32 %v970, %v987
    %v1001 = vadd.f32 %v974, %v987
    %v1002 = vadd.f32 %v978, %v987
    %v1003 = vadd.f32 %v982, %v987
    %s1004 = sld [smem:[#allocation5 + $0x5]]
    %v1005 = vand.u32 2147483647, %v988
    %v1006 = vand.u32 2147483647, %v989
    %v1007 = vand.u32 2147483647, %v990
    %v1008 = vand.u32 2147483647, %v991
    %v1009 = vand.u32 2147483647, %v992
    %v1010 = vand.u32 2147483647, %v993
    %v1011 = vand.u32 2147483647, %v994
    %v1012 = vand.u32 2147483647, %v995
    %v1013 = vand.u32 2147483647, %v996
    %v1014 = vand.u32 2147483647, %v997
    %v1015 = vand.u32 2147483647, %v998
    %v1016 = vand.u32 2147483647, %v999
    %v1017 = vand.u32 2147483647, %v1000
    %v1018 = vand.u32 2147483647, %v1001
    %v1019 = vand.u32 2147483647, %v1002
    %v1020 = vand.u32 2147483647, %v1003
    %v1021 = vstv %s1004
    %v1022 = vmul.f32 %v1021, %v1005
    %v1023 = vmul.f32 %v1021, %v1006
    %v1024 = vmul.f32 %v1021, %v1007
    %v1025 = vmul.f32 %v1021, %v1008
    %v1026 = vmul.f32 %v1021, %v1009
    %v1027 = vmul.f32 %v1021, %v1010
    %v1028 = vmul.f32 %v1021, %v1011
    %v1029 = vmul.f32 %v1021, %v1012
    %v1030 = vmul.f32 %v1021, %v1013
    %v1031 = vmul.f32 %v1021, %v1014
    %v1032 = vmul.f32 %v1021, %v1015
    %v1033 = vmul.f32 %v1021, %v1016
    %v1034 = vmul.f32 %v1021, %v1017
    %v1035 = vmul.f32 %v1021, %v1018
    %v1036 = vmul.f32 %v1021, %v1019
    %v1037 = vmul.f32 %v1021, %v1020
    %v1038 = vadd.f32 %v904, %v1022
    %v1039 = vadd.f32 %v905, %v1023
    %v1040 = vadd.f32 %v906, %v1024
    %v1041 = vadd.f32 %v907, %v1025
    %v1042 = vadd.f32 %v908, %v1026
    %v1043 = vadd.f32 %v909, %v1027
    %v1044 = vadd.f32 %v910, %v1028
    %v1045 = vadd.f32 %v911, %v1029
    %v1046 = vadd.f32 %v912, %v1030
    %v1047 = vadd.f32 %v913, %v1031
    %v1048 = vadd.f32 %v914, %v1032
    %v1049 = vadd.f32 %v915, %v1033
    %v1050 = vadd.f32 %v916, %v1034
    %v1051 = vadd.f32 %v917, %v1035
    %v1052 = vadd.f32 %v918, %v1036
    %v1053 = vadd.f32 %v919, %v1037
    %1054 = vset.pattern.permute.xlu0 6
    %1055 = vperm.xlu0 %1054, %v98
    %v1056 = vpop.permute.xlu0 %1055
    %1058 = vset.pattern.permute.xlu0 6
    %1059 = vperm.xlu0 %1058, %v99
    %v1060 = vpop.permute.xlu0 %1059
    %1062 = vset.pattern.permute.xlu0 6
    %1063 = vperm.xlu0 %1062, %v100
    %v1064 = vpop.permute.xlu0 %1063
    %1066 = vset.pattern.permute.xlu0 6
    %1067 = vperm.xlu0 %1066, %v101
    %v1068 = vpop.permute.xlu0 %1067
    %1070 = vset.pattern.permute.xlu0 6
    %1071 = vperm.xlu0 %1070, %v102
    %v1072 = vpop.permute.xlu0 %1071
    %1074 = vset.pattern.permute.xlu0 6
    %1075 = vperm.xlu0 %1074, %v103
    %v1076 = vpop.permute.xlu0 %1075
    %1078 = vset.pattern.permute.xlu0 6
    %1079 = vperm.xlu0 %1078, %v104
    %v1080 = vpop.permute.xlu0 %1079
    %1082 = vset.pattern.permute.xlu0 6
    %1083 = vperm.xlu0 %1082, %v105
    %v1084 = vpop.permute.xlu0 %1083
    %1086 = vset.pattern.permute.xlu0 6
    %1087 = vperm.xlu0 %1086, %v106
    %v1088 = vpop.permute.xlu0 %1087
    %1090 = vset.pattern.permute.xlu0 6
    %1091 = vperm.xlu0 %1090, %v107
    %v1092 = vpop.permute.xlu0 %1091
    %1094 = vset.pattern.permute.xlu0 6
    %1095 = vperm.xlu0 %1094, %v108
    %v1096 = vpop.permute.xlu0 %1095
    %1098 = vset.pattern.permute.xlu0 6
    %1099 = vperm.xlu0 %1098, %v109
    %v1100 = vpop.permute.xlu0 %1099
    %1102 = vset.pattern.permute.xlu0 6
    %1103 = vperm.xlu0 %1102, %v110
    %v1104 = vpop.permute.xlu0 %1103
    %1106 = vset.pattern.permute.xlu0 6
    %1107 = vperm.xlu0 %1106, %v111
    %v1108 = vpop.permute.xlu0 %1107
    %1110 = vset.pattern.permute.xlu0 6
    %1111 = vperm.xlu0 %1110, %v112
    %v1112 = vpop.permute.xlu0 %1111
    %1114 = vset.pattern.permute.xlu0 6
    %1115 = vperm.xlu0 %1114, %v113
    %v1116 = vpop.permute.xlu0 %1115
    %v1118 = vlaneseq
    %v1119 = vshrl.u32 %v1118, 7
    %v1120 = vsub.s32 6, %v1119
    %v1121 = vrot.slane %v114, %v1120
    %v1122 = vadd.f32 %v1056, %v1121
    %v1123 = vadd.f32 %v1060, %v1121
    %v1124 = vadd.f32 %v1064, %v1121
    %v1125 = vadd.f32 %v1068, %v1121
    %v1126 = vadd.f32 %v1072, %v1121
    %v1127 = vadd.f32 %v1076, %v1121
    %v1128 = vadd.f32 %v1080, %v1121
    %v1129 = vadd.f32 %v1084, %v1121
    %v1130 = vadd.f32 %v1088, %v1121
    %v1131 = vadd.f32 %v1092, %v1121
    %v1132 = vadd.f32 %v1096, %v1121
    %v1133 = vadd.f32 %v1100, %v1121
    %v1134 = vadd.f32 %v1104, %v1121
    %v1135 = vadd.f32 %v1108, %v1121
    %v1136 = vadd.f32 %v1112, %v1121
    %v1137 = vadd.f32 %v1116, %v1121
    %s1138 = sld [smem:[#allocation5 + $0x6]]
    %v1139 = vand.u32 2147483647, %v1122
    %v1140 = vand.u32 2147483647, %v1123
    %v1141 = vand.u32 2147483647, %v1124
    %v1142 = vand.u32 2147483647, %v1125
    %v1143 = vand.u32 2147483647, %v1126
    %v1144 = vand.u32 2147483647, %v1127
    %v1145 = vand.u32 2147483647, %v1128
    %v1146 = vand.u32 2147483647, %v1129
    %v1147 = vand.u32 2147483647, %v1130
    %v1148 = vand.u32 2147483647, %v1131
    %v1149 = vand.u32 2147483647, %v1132
    %v1150 = vand.u32 2147483647, %v1133
    %v1151 = vand.u32 2147483647, %v1134
    %v1152 = vand.u32 2147483647, %v1135
    %v1153 = vand.u32 2147483647, %v1136
    %v1154 = vand.u32 2147483647, %v1137
    %v1155 = vstv %s1138
    %v1156 = vmul.f32 %v1155, %v1139
    %v1157 = vmul.f32 %v1155, %v1140
    %v1158 = vmul.f32 %v1155, %v1141
    %v1159 = vmul.f32 %v1155, %v1142
    %v1160 = vmul.f32 %v1155, %v1143
    %v1161 = vmul.f32 %v1155, %v1144
    %v1162 = vmul.f32 %v1155, %v1145
    %v1163 = vmul.f32 %v1155, %v1146
    %v1164 = vmul.f32 %v1155, %v1147
    %v1165 = vmul.f32 %v1155, %v1148
    %v1166 = vmul.f32 %v1155, %v1149
    %v1167 = vmul.f32 %v1155, %v1150
    %v1168 = vmul.f32 %v1155, %v1151
    %v1169 = vmul.f32 %v1155, %v1152
    %v1170 = vmul.f32 %v1155, %v1153
    %v1171 = vmul.f32 %v1155, %v1154
    %v1172 = vadd.f32 %v1038, %v1156
    %v1173 = vadd.f32 %v1039, %v1157
    %v1174 = vadd.f32 %v1040, %v1158
    %v1175 = vadd.f32 %v1041, %v1159
    %v1176 = vadd.f32 %v1042, %v1160
    %v1177 = vadd.f32 %v1043, %v1161
    %v1178 = vadd.f32 %v1044, %v1162
    %v1179 = vadd.f32 %v1045, %v1163
    %v1180 = vadd.f32 %v1046, %v1164
    %v1181 = vadd.f32 %v1047, %v1165
    %v1182 = vadd.f32 %v1048, %v1166
    %v1183 = vadd.f32 %v1049, %v1167
    %v1184 = vadd.f32 %v1050, %v1168
    %v1185 = vadd.f32 %v1051, %v1169
    %v1186 = vadd.f32 %v1052, %v1170
    %v1187 = vadd.f32 %v1053, %v1171
    %1188 = vset.pattern.permute.xlu0 7
    %1189 = vperm.xlu0 %1188, %v98
    %v1190 = vpop.permute.xlu0 %1189
    %1192 = vset.pattern.permute.xlu0 7
    %1193 = vperm.xlu0 %1192, %v99
    %v1194 = vpop.permute.xlu0 %1193
    %1196 = vset.pattern.permute.xlu0 7
    %1197 = vperm.xlu0 %1196, %v100
    %v1198 = vpop.permute.xlu0 %1197
    %1200 = vset.pattern.permute.xlu0 7
    %1201 = vperm.xlu0 %1200, %v101
    %v1202 = vpop.permute.xlu0 %1201
    %1204 = vset.pattern.permute.xlu0 7
    %1205 = vperm.xlu0 %1204, %v102
    %v1206 = vpop.permute.xlu0 %1205
    %1208 = vset.pattern.permute.xlu0 7
    %1209 = vperm.xlu0 %1208, %v103
    %v1210 = vpop.permute.xlu0 %1209
    %1212 = vset.pattern.permute.xlu0 7
    %1213 = vperm.xlu0 %1212, %v104
    %v1214 = vpop.permute.xlu0 %1213
    %1216 = vset.pattern.permute.xlu0 7
    %1217 = vperm.xlu0 %1216, %v105
    %v1218 = vpop.permute.xlu0 %1217
    %1220 = vset.pattern.permute.xlu0 7
    %1221 = vperm.xlu0 %1220, %v106
    %v1222 = vpop.permute.xlu0 %1221
    %1224 = vset.pattern.permute.xlu0 7
    %1225 = vperm.xlu0 %1224, %v107
    %v1226 = vpop.permute.xlu0 %1225
    %1228 = vset.pattern.permute.xlu0 7
    %1229 = vperm.xlu0 %1228, %v108
    %v1230 = vpop.permute.xlu0 %1229
    %1232 = vset.pattern.permute.xlu0 7
    %1233 = vperm.xlu0 %1232, %v109
    %v1234 = vpop.permute.xlu0 %1233
    %1236 = vset.pattern.permute.xlu0 7
    %1237 = vperm.xlu0 %1236, %v110
    %v1238 = vpop.permute.xlu0 %1237
    %1240 = vset.pattern.permute.xlu0 7
    %1241 = vperm.xlu0 %1240, %v111
    %v1242 = vpop.permute.xlu0 %1241
    %1244 = vset.pattern.permute.xlu0 7
    %1245 = vperm.xlu0 %1244, %v112
    %v1246 = vpop.permute.xlu0 %1245
    %1248 = vset.pattern.permute.xlu0 7
    %1249 = vperm.xlu0 %1248, %v113
    %v1250 = vpop.permute.xlu0 %1249
    %v1252 = vlaneseq
    %v1253 = vshrl.u32 %v1252, 7
    %v1254 = vsub.s32 7, %v1253
    %v1255 = vrot.slane %v114, %v1254
    %v1256 = vadd.f32 %v1190, %v1255
    %v1257 = vadd.f32 %v1194, %v1255
    %v1258 = vadd.f32 %v1198, %v1255
    %v1259 = vadd.f32 %v1202, %v1255
    %v1260 = vadd.f32 %v1206, %v1255
    %v1261 = vadd.f32 %v1210, %v1255
    %v1262 = vadd.f32 %v1214, %v1255
    %v1263 = vadd.f32 %v1218, %v1255
    %v1264 = vadd.f32 %v1222, %v1255
    %v1265 = vadd.f32 %v1226, %v1255
    %v1266 = vadd.f32 %v1230, %v1255
    %v1267 = vadd.f32 %v1234, %v1255
    %v1268 = vadd.f32 %v1238, %v1255
    %v1269 = vadd.f32 %v1242, %v1255
    %v1270 = vadd.f32 %v1246, %v1255
    %v1271 = vadd.f32 %v1250, %v1255
    %s1272 = sld [smem:[#allocation5 + $0x7]]
    %v1273 = vand.u32 2147483647, %v1256
    %v1274 = vand.u32 2147483647, %v1257
    %v1275 = vand.u32 2147483647, %v1258
    %v1276 = vand.u32 2147483647, %v1259
    %v1277 = vand.u32 2147483647, %v1260
    %v1278 = vand.u32 2147483647, %v1261
    %v1279 = vand.u32 2147483647, %v1262
    %v1280 = vand.u32 2147483647, %v1263
    %v1281 = vand.u32 2147483647, %v1264
    %v1282 = vand.u32 2147483647, %v1265
    %v1283 = vand.u32 2147483647, %v1266
    %v1284 = vand.u32 2147483647, %v1267
    %v1285 = vand.u32 2147483647, %v1268
    %v1286 = vand.u32 2147483647, %v1269
    %v1287 = vand.u32 2147483647, %v1270
    %v1288 = vand.u32 2147483647, %v1271
    %v1289 = vstv %s1272
    %v1290 = vmul.f32 %v1289, %v1273
    %v1291 = vmul.f32 %v1289, %v1274
    %v1292 = vmul.f32 %v1289, %v1275
    %v1293 = vmul.f32 %v1289, %v1276
    %v1294 = vmul.f32 %v1289, %v1277
    %v1295 = vmul.f32 %v1289, %v1278
    %v1296 = vmul.f32 %v1289, %v1279
    %v1297 = vmul.f32 %v1289, %v1280
    %v1298 = vmul.f32 %v1289, %v1281
    %v1299 = vmul.f32 %v1289, %v1282
    %v1300 = vmul.f32 %v1289, %v1283
    %v1301 = vmul.f32 %v1289, %v1284
    %v1302 = vmul.f32 %v1289, %v1285
    %v1303 = vmul.f32 %v1289, %v1286
    %v1304 = vmul.f32 %v1289, %v1287
    %v1305 = vmul.f32 %v1289, %v1288
    %v1306 = vadd.f32 %v1172, %v1290
    %v1307 = vadd.f32 %v1173, %v1291
    %v1308 = vadd.f32 %v1174, %v1292
    %v1309 = vadd.f32 %v1175, %v1293
    %v1310 = vadd.f32 %v1176, %v1294
    %v1311 = vadd.f32 %v1177, %v1295
    %v1312 = vadd.f32 %v1178, %v1296
    %v1313 = vadd.f32 %v1179, %v1297
    %v1314 = vadd.f32 %v1180, %v1298
    %v1315 = vadd.f32 %v1181, %v1299
    %v1316 = vadd.f32 %v1182, %v1300
    %v1317 = vadd.f32 %v1183, %v1301
    %v1318 = vadd.f32 %v1184, %v1302
    %v1319 = vadd.f32 %v1185, %v1303
    %v1320 = vadd.f32 %v1186, %v1304
    %v1321 = vadd.f32 %v1187, %v1305
    %v1322 = vld [vmem:[%s6] sm:$0xff]
    %v1323 = vld [vmem:[%s6 + $0x8] sm:$0xff]
    %v1324 = vld [vmem:[%s6 + $0x10] sm:$0xff]
    %v1325 = vld [vmem:[%s6 + $0x18] sm:$0xff]
    %vm1326 = vnez %v1322
    %vm1327 = vnez %v1323
    %vm1328 = vnez %v1324
    %vm1329 = vnez %v1325
    %v1330 = vsel %vm1326, 16843009, 0
    %v1331 = vsel %vm1327, 16843009, 0
    %v1332 = vsel %vm1328, 16843009, 0
    %v1333 = vsel %vm1329, 16843009, 0
    %v1334 = vunpack.c.0.s8 %v1330
    %v1335 = vunpack.c.1.s8 %v1330
    %v1336 = vunpack.c.2.s8 %v1330
    %v1337 = vunpack.c.3.s8 %v1330
    %v1338 = vunpack.c.0.s8 %v1331
    %v1339 = vunpack.c.1.s8 %v1331
    %v1340 = vunpack.c.2.s8 %v1331
    %v1341 = vunpack.c.3.s8 %v1331
    %v1342 = vunpack.c.0.s8 %v1332
    %v1343 = vunpack.c.1.s8 %v1332
    %v1344 = vunpack.c.2.s8 %v1332
    %v1345 = vunpack.c.3.s8 %v1332
    %v1346 = vunpack.c.0.s8 %v1333
    %v1347 = vunpack.c.1.s8 %v1333
    %v1348 = vunpack.c.2.s8 %v1333
    %v1349 = vunpack.c.3.s8 %v1333
    %v1350 = vpack.c.b16 %v1334, %v1334
    %v1351 = vpack.c.b8 %v1350, %v1350
    %v1352 = vpack.c.b16 %v1335, %v1335
    %v1353 = vpack.c.b8 %v1352, %v1352
    %v1354 = vpack.c.b16 %v1336, %v1336
    %v1355 = vpack.c.b8 %v1354, %v1354
    %v1356 = vpack.c.b16 %v1337, %v1337
    %v1357 = vpack.c.b8 %v1356, %v1356
    %v1358 = vpack.c.b16 %v1338, %v1338
    %v1359 = vpack.c.b8 %v1358, %v1358
    %v1360 = vpack.c.b16 %v1339, %v1339
    %v1361 = vpack.c.b8 %v1360, %v1360
    %v1362 = vpack.c.b16 %v1340, %v1340
    %v1363 = vpack.c.b8 %v1362, %v1362
    %v1364 = vpack.c.b16 %v1341, %v1341
    %v1365 = vpack.c.b8 %v1364, %v1364
    %v1366 = vpack.c.b16 %v1342, %v1342
    %v1367 = vpack.c.b8 %v1366, %v1366
    %v1368 = vpack.c.b16 %v1343, %v1343
    %v1369 = vpack.c.b8 %v1368, %v1368
    %v1370 = vpack.c.b16 %v1344, %v1344
    %v1371 = vpack.c.b8 %v1370, %v1370
    %v1372 = vpack.c.b16 %v1345, %v1345
    %v1373 = vpack.c.b8 %v1372, %v1372
    %v1374 = vpack.c.b16 %v1346, %v1346
    %v1375 = vpack.c.b8 %v1374, %v1374
    %v1376 = vpack.c.b16 %v1347, %v1347
    %v1377 = vpack.c.b8 %v1376, %v1376
    %v1378 = vpack.c.b16 %v1348, %v1348
    %v1379 = vpack.c.b8 %v1378, %v1378
    %v1380 = vpack.c.b16 %v1349, %v1349
    %v1381 = vpack.c.b8 %v1380, %v1380
    %vm1382 = vnez %v1351
    %vm1383 = vnez %v1353
    %vm1384 = vnez %v1355
    %vm1385 = vnez %v1357
    %vm1386 = vnez %v1359
    %vm1387 = vnez %v1361
    %vm1388 = vnez %v1363
    %vm1389 = vnez %v1365
    %vm1390 = vnez %v1367
    %vm1391 = vnez %v1369
    %vm1392 = vnez %v1371
    %vm1393 = vnez %v1373
    %vm1394 = vnez %v1375
    %vm1395 = vnez %v1377
    %vm1396 = vnez %v1379
    %vm1397 = vnez %v1381
    %v1398 = vsel %vm1382, 16843009, 0
    %v1399 = vsel %vm1383, 16843009, 0
    %v1400 = vsel %vm1384, 16843009, 0
    %v1401 = vsel %vm1385, 16843009, 0
    %v1402 = vsel %vm1386, 16843009, 0
    %v1403 = vsel %vm1387, 16843009, 0
    %v1404 = vsel %vm1388, 16843009, 0
    %v1405 = vsel %vm1389, 16843009, 0
    %v1406 = vsel %vm1390, 16843009, 0
    %v1407 = vsel %vm1391, 16843009, 0
    %v1408 = vsel %vm1392, 16843009, 0
    %v1409 = vsel %vm1393, 16843009, 0
    %v1410 = vsel %vm1394, 16843009, 0
    %v1411 = vsel %vm1395, 16843009, 0
    %v1412 = vsel %vm1396, 16843009, 0
    %v1413 = vsel %vm1397, 16843009, 0
    %v1414 = vunpack.c.0.s8 %v1398
    %v1415 = vunpack.c.0.s8 %v1399
    %v1416 = vunpack.c.0.s8 %v1400
    %v1417 = vunpack.c.0.s8 %v1401
    %v1418 = vunpack.c.0.s8 %v1402
    %v1419 = vunpack.c.0.s8 %v1403
    %v1420 = vunpack.c.0.s8 %v1404
    %v1421 = vunpack.c.0.s8 %v1405
    %v1422 = vunpack.c.0.s8 %v1406
    %v1423 = vunpack.c.0.s8 %v1407
    %v1424 = vunpack.c.0.s8 %v1408
    %v1425 = vunpack.c.0.s8 %v1409
    %v1426 = vunpack.c.0.s8 %v1410
    %v1427 = vunpack.c.0.s8 %v1411
    %v1428 = vunpack.c.0.s8 %v1412
    %v1429 = vunpack.c.0.s8 %v1413
    %vm1430 = vcmp.ne.s32.totalorder %v1414, 0
    %vm1431 = vcmp.ne.s32.totalorder %v1415, 0
    %vm1432 = vcmp.ne.s32.totalorder %v1416, 0
    %vm1433 = vcmp.ne.s32.totalorder %v1417, 0
    %vm1434 = vcmp.ne.s32.totalorder %v1418, 0
    %vm1435 = vcmp.ne.s32.totalorder %v1419, 0
    %vm1436 = vcmp.ne.s32.totalorder %v1420, 0
    %vm1437 = vcmp.ne.s32.totalorder %v1421, 0
    %vm1438 = vcmp.ne.s32.totalorder %v1422, 0
    %vm1439 = vcmp.ne.s32.totalorder %v1423, 0
    %vm1440 = vcmp.ne.s32.totalorder %v1424, 0
    %vm1441 = vcmp.ne.s32.totalorder %v1425, 0
    %vm1442 = vcmp.ne.s32.totalorder %v1426, 0
    %vm1443 = vcmp.ne.s32.totalorder %v1427, 0
    %vm1444 = vcmp.ne.s32.totalorder %v1428, 0
    %vm1445 = vcmp.ne.s32.totalorder %v1429, 0
    %v1446 = vsel %vm1430, %v1306, -1e+30
    %v1447 = vsel %vm1431, %v1307, -1e+30
    %v1448 = vsel %vm1432, %v1308, -1e+30
    %v1449 = vsel %vm1433, %v1309, -1e+30
    %v1450 = vsel %vm1434, %v1310, -1e+30
    %v1451 = vsel %vm1435, %v1311, -1e+30
    %v1452 = vsel %vm1436, %v1312, -1e+30
    %v1453 = vsel %vm1437, %v1313, -1e+30
    %v1454 = vsel %vm1438, %v1314, -1e+30
    %v1455 = vsel %vm1439, %v1315, -1e+30
    %v1456 = vsel %vm1440, %v1316, -1e+30
    %v1457 = vsel %vm1441, %v1317, -1e+30
    %v1458 = vsel %vm1442, %v1318, -1e+30
    %v1459 = vsel %vm1443, %v1319, -1e+30
    %v1460 = vsel %vm1444, %v1320, -1e+30
    %v1461 = vsel %vm1445, %v1321, -1e+30
    %v1462 = vld [vmem:[#allocation2] sm:$0xff]
    %v1463 = vld [vmem:[#allocation2 + $0x8] sm:$0xff]
    %v1464 = vld [vmem:[#allocation2 + $0x10] sm:$0xff]
    %v1465 = vld [vmem:[#allocation2 + $0x18] sm:$0xff]
    %v1466 = vld [vmem:[#allocation2 + $0x20] sm:$0xff]
    %v1467 = vld [vmem:[#allocation2 + $0x28] sm:$0xff]
    %v1468 = vld [vmem:[#allocation2 + $0x30] sm:$0xff]
    %v1469 = vld [vmem:[#allocation2 + $0x38] sm:$0xff]
    %v1470 = vld [vmem:[#allocation2 + $0x40] sm:$0xff]
    %v1471 = vld [vmem:[#allocation2 + $0x48] sm:$0xff]
    %v1472 = vld [vmem:[#allocation2 + $0x50] sm:$0xff]
    %v1473 = vld [vmem:[#allocation2 + $0x58] sm:$0xff]
    %v1474 = vld [vmem:[#allocation2 + $0x60] sm:$0xff]
    %v1475 = vld [vmem:[#allocation2 + $0x68] sm:$0xff]
    %v1476 = vld [vmem:[#allocation2 + $0x70] sm:$0xff]
    %v1477 = vld [vmem:[#allocation2 + $0x78] sm:$0xff]
    %1478 = vmax.xlane.f32.xlu0 %v1446
    %v1479 = vpop.xlane.xlu0 %1478
    %1480 = vmax.xlane.f32.xlu0 %v1447
    %v1481 = vpop.xlane.xlu0 %1480
    %1482 = vmax.xlane.f32.xlu0 %v1448
    %v1483 = vpop.xlane.xlu0 %1482
    %1484 = vmax.xlane.f32.xlu0 %v1449
    %v1485 = vpop.xlane.xlu0 %1484
    %1486 = vmax.xlane.f32.xlu0 %v1450
    %v1487 = vpop.xlane.xlu0 %1486
    %1488 = vmax.xlane.f32.xlu0 %v1451
    %v1489 = vpop.xlane.xlu0 %1488
    %1490 = vmax.xlane.f32.xlu0 %v1452
    %v1491 = vpop.xlane.xlu0 %1490
    %1492 = vmax.xlane.f32.xlu0 %v1453
    %v1493 = vpop.xlane.xlu0 %1492
    %1494 = vmax.xlane.f32.xlu0 %v1454
    %v1495 = vpop.xlane.xlu0 %1494
    %1496 = vmax.xlane.f32.xlu0 %v1455
    %v1497 = vpop.xlane.xlu0 %1496
    %1498 = vmax.xlane.f32.xlu0 %v1456
    %v1499 = vpop.xlane.xlu0 %1498
    %1500 = vmax.xlane.f32.xlu0 %v1457
    %v1501 = vpop.xlane.xlu0 %1500
    %1502 = vmax.xlane.f32.xlu0 %v1458
    %v1503 = vpop.xlane.xlu0 %1502
    %1504 = vmax.xlane.f32.xlu0 %v1459
    %v1505 = vpop.xlane.xlu0 %1504
    %1506 = vmax.xlane.f32.xlu0 %v1460
    %v1507 = vpop.xlane.xlu0 %1506
    %1508 = vmax.xlane.f32.xlu0 %v1461
    %v1509 = vpop.xlane.xlu0 %1508
    %v1510 = vmax.f32 %v1462, %v1479
    %v1511 = vmax.f32 %v1463, %v1481
    %v1512 = vmax.f32 %v1464, %v1483
    %v1513 = vmax.f32 %v1465, %v1485
    %v1514 = vmax.f32 %v1466, %v1487
    %v1515 = vmax.f32 %v1467, %v1489
    %v1516 = vmax.f32 %v1468, %v1491
    %v1517 = vmax.f32 %v1469, %v1493
    %v1518 = vmax.f32 %v1470, %v1495
    %v1519 = vmax.f32 %v1471, %v1497
    %v1520 = vmax.f32 %v1472, %v1499
    %v1521 = vmax.f32 %v1473, %v1501
    %v1522 = vmax.f32 %v1474, %v1503
    %v1523 = vmax.f32 %v1475, %v1505
    %v1524 = vmax.f32 %v1476, %v1507
    %v1525 = vmax.f32 %v1477, %v1509
    %v1526 = vsub.f32 %v1462, %v1510
    %v1527 = vsub.f32 %v1463, %v1511
    %v1528 = vsub.f32 %v1464, %v1512
    %v1529 = vsub.f32 %v1465, %v1513
    %v1530 = vsub.f32 %v1466, %v1514
    %v1531 = vsub.f32 %v1467, %v1515
    %v1532 = vsub.f32 %v1468, %v1516
    %v1533 = vsub.f32 %v1469, %v1517
    %v1534 = vsub.f32 %v1470, %v1518
    %v1535 = vsub.f32 %v1471, %v1519
    %v1536 = vsub.f32 %v1472, %v1520
    %v1537 = vsub.f32 %v1473, %v1521
    %v1538 = vsub.f32 %v1474, %v1522
    %v1539 = vsub.f32 %v1475, %v1523
    %v1540 = vsub.f32 %v1476, %v1524
    %v1541 = vsub.f32 %v1477, %v1525
    %v1542 = vmul.f32 %v1526, 1.442695
    %v1543 = vpow.pop %v1542
    %v1544 = vmul.f32 %v1527, 1.442695
    %v1545 = vpow.pop %v1544
    %v1546 = vmul.f32 %v1528, 1.442695
    %v1547 = vpow.pop %v1546
    %v1548 = vmul.f32 %v1529, 1.442695
    %v1549 = vpow.pop %v1548
    %v1550 = vmul.f32 %v1530, 1.442695
    %v1551 = vpow.pop %v1550
    %v1552 = vmul.f32 %v1531, 1.442695
    %v1553 = vpow.pop %v1552
    %v1554 = vmul.f32 %v1532, 1.442695
    %v1555 = vpow.pop %v1554
    %v1556 = vmul.f32 %v1533, 1.442695
    %v1557 = vpow.pop %v1556
    %v1558 = vmul.f32 %v1534, 1.442695
    %v1559 = vpow.pop %v1558
    %v1560 = vmul.f32 %v1535, 1.442695
    %v1561 = vpow.pop %v1560
    %v1562 = vmul.f32 %v1536, 1.442695
    %v1563 = vpow.pop %v1562
    %v1564 = vmul.f32 %v1537, 1.442695
    %v1565 = vpow.pop %v1564
    %v1566 = vmul.f32 %v1538, 1.442695
    %v1567 = vpow.pop %v1566
    %v1568 = vmul.f32 %v1539, 1.442695
    %v1569 = vpow.pop %v1568
    %v1570 = vmul.f32 %v1540, 1.442695
    %v1571 = vpow.pop %v1570
    %v1572 = vmul.f32 %v1541, 1.442695
    %v1573 = vpow.pop %v1572
    %1575 = vset.pattern.permute.xlu0 0
    %1576 = vperm.xlu0 %1575, %v1510
    %v1577 = vpop.permute.xlu0 %1576
    %1580 = vset.pattern.permute.xlu0 0
    %1581 = vperm.xlu0 %1580, %v1511
    %v1582 = vpop.permute.xlu0 %1581
    %1585 = vset.pattern.permute.xlu0 0
    %1586 = vperm.xlu0 %1585, %v1512
    %v1587 = vpop.permute.xlu0 %1586
    %1590 = vset.pattern.permute.xlu0 0
    %1591 = vperm.xlu0 %1590, %v1513
    %v1592 = vpop.permute.xlu0 %1591
    %1595 = vset.pattern.permute.xlu0 0
    %1596 = vperm.xlu0 %1595, %v1514
    %v1597 = vpop.permute.xlu0 %1596
    %1600 = vset.pattern.permute.xlu0 0
    %1601 = vperm.xlu0 %1600, %v1515
    %v1602 = vpop.permute.xlu0 %1601
    %1605 = vset.pattern.permute.xlu0 0
    %1606 = vperm.xlu0 %1605, %v1516
    %v1607 = vpop.permute.xlu0 %1606
    %1610 = vset.pattern.permute.xlu0 0
    %1611 = vperm.xlu0 %1610, %v1517
    %v1612 = vpop.permute.xlu0 %1611
    %1615 = vset.pattern.permute.xlu0 0
    %1616 = vperm.xlu0 %1615, %v1518
    %v1617 = vpop.permute.xlu0 %1616
    %1620 = vset.pattern.permute.xlu0 0
    %1621 = vperm.xlu0 %1620, %v1519
    %v1622 = vpop.permute.xlu0 %1621
    %1625 = vset.pattern.permute.xlu0 0
    %1626 = vperm.xlu0 %1625, %v1520
    %v1627 = vpop.permute.xlu0 %1626
    %1630 = vset.pattern.permute.xlu0 0
    %1631 = vperm.xlu0 %1630, %v1521
    %v1632 = vpop.permute.xlu0 %1631
    %1635 = vset.pattern.permute.xlu0 0
    %1636 = vperm.xlu0 %1635, %v1522
    %v1637 = vpop.permute.xlu0 %1636
    %1640 = vset.pattern.permute.xlu0 0
    %1641 = vperm.xlu0 %1640, %v1523
    %v1642 = vpop.permute.xlu0 %1641
    %1645 = vset.pattern.permute.xlu0 0
    %1646 = vperm.xlu0 %1645, %v1524
    %v1647 = vpop.permute.xlu0 %1646
    %1650 = vset.pattern.permute.xlu0 0
    %1651 = vperm.xlu0 %1650, %v1525
    %v1652 = vpop.permute.xlu0 %1651
    %v1654 = vsub.f32 %v1446, %v1577
    %v1655 = vsub.f32 %v1447, %v1582
    %v1656 = vsub.f32 %v1448, %v1587
    %v1657 = vsub.f32 %v1449, %v1592
    %v1658 = vsub.f32 %v1450, %v1597
    %v1659 = vsub.f32 %v1451, %v1602
    %v1660 = vsub.f32 %v1452, %v1607
    %v1661 = vsub.f32 %v1453, %v1612
    %v1662 = vsub.f32 %v1454, %v1617
    %v1663 = vsub.f32 %v1455, %v1622
    %v1664 = vsub.f32 %v1456, %v1627
    %v1665 = vsub.f32 %v1457, %v1632
    %v1666 = vsub.f32 %v1458, %v1637
    %v1667 = vsub.f32 %v1459, %v1642
    %v1668 = vsub.f32 %v1460, %v1647
    %v1669 = vsub.f32 %v1461, %v1652
    %v1670 = vmul.f32 %v1654, 1.442695
    %v1671 = vpow.pop %v1670
    %v1672 = vmul.f32 %v1655, 1.442695
    %v1673 = vpow.pop %v1672
    %v1674 = vmul.f32 %v1656, 1.442695
    %v1675 = vpow.pop %v1674
    %v1676 = vmul.f32 %v1657, 1.442695
    %v1677 = vpow.pop %v1676
    %v1678 = vmul.f32 %v1658, 1.442695
    %v1679 = vpow.pop %v1678
    %v1680 = vmul.f32 %v1659, 1.442695
    %v1681 = vpow.pop %v1680
    %v1682 = vmul.f32 %v1660, 1.442695
    %v1683 = vpow.pop %v1682
    %v1684 = vmul.f32 %v1661, 1.442695
    %v1685 = vpow.pop %v1684
    %v1686 = vmul.f32 %v1662, 1.442695
    %v1687 = vpow.pop %v1686
    %v1688 = vmul.f32 %v1663, 1.442695
    %v1689 = vpow.pop %v1688
    %v1690 = vmul.f32 %v1664, 1.442695
    %v1691 = vpow.pop %v1690
    %v1692 = vmul.f32 %v1665, 1.442695
    %v1693 = vpow.pop %v1692
    %v1694 = vmul.f32 %v1666, 1.442695
    %v1695 = vpow.pop %v1694
    %v1696 = vmul.f32 %v1667, 1.442695
    %v1697 = vpow.pop %v1696
    %v1698 = vmul.f32 %v1668, 1.442695
    %v1699 = vpow.pop %v1698
    %v1700 = vmul.f32 %v1669, 1.442695
    %v1701 = vpow.pop %v1700
    %v1702 = vld [vmem:[#allocation3] sm:$0xff]
    %v1703 = vld [vmem:[#allocation3 + $0x8] sm:$0xff]
    %v1704 = vld [vmem:[#allocation3 + $0x10] sm:$0xff]
    %v1705 = vld [vmem:[#allocation3 + $0x18] sm:$0xff]
    %v1706 = vld [vmem:[#allocation3 + $0x20] sm:$0xff]
    %v1707 = vld [vmem:[#allocation3 + $0x28] sm:$0xff]
    %v1708 = vld [vmem:[#allocation3 + $0x30] sm:$0xff]
    %v1709 = vld [vmem:[#allocation3 + $0x38] sm:$0xff]
    %v1710 = vld [vmem:[#allocation3 + $0x40] sm:$0xff]
    %v1711 = vld [vmem:[#allocation3 + $0x48] sm:$0xff]
    %v1712 = vld [vmem:[#allocation3 + $0x50] sm:$0xff]
    %v1713 = vld [vmem:[#allocation3 + $0x58] sm:$0xff]
    %v1714 = vld [vmem:[#allocation3 + $0x60] sm:$0xff]
    %v1715 = vld [vmem:[#allocation3 + $0x68] sm:$0xff]
    %v1716 = vld [vmem:[#allocation3 + $0x70] sm:$0xff]
    %v1717 = vld [vmem:[#allocation3 + $0x78] sm:$0xff]
    %v1718 = vmul.f32 %v1543, %v1702
    %v1719 = vmul.f32 %v1545, %v1703
    %v1720 = vmul.f32 %v1547, %v1704
    %v1721 = vmul.f32 %v1549, %v1705
    %v1722 = vmul.f32 %v1551, %v1706
    %v1723 = vmul.f32 %v1553, %v1707
    %v1724 = vmul.f32 %v1555, %v1708
    %v1725 = vmul.f32 %v1557, %v1709
    %v1726 = vmul.f32 %v1559, %v1710
    %v1727 = vmul.f32 %v1561, %v1711
    %v1728 = vmul.f32 %v1563, %v1712
    %v1729 = vmul.f32 %v1565, %v1713
    %v1730 = vmul.f32 %v1567, %v1714
    %v1731 = vmul.f32 %v1569, %v1715
    %v1732 = vmul.f32 %v1571, %v1716
    %v1733 = vmul.f32 %v1573, %v1717
    %1734 = vadd.xlane.f32.xlu0 %v1671
    %v1735 = vpop.xlane.xlu0 %1734
    %1736 = vadd.xlane.f32.xlu0 %v1673
    %v1737 = vpop.xlane.xlu0 %1736
    %1738 = vadd.xlane.f32.xlu0 %v1675
    %v1739 = vpop.xlane.xlu0 %1738
    %1740 = vadd.xlane.f32.xlu0 %v1677
    %v1741 = vpop.xlane.xlu0 %1740
    %1742 = vadd.xlane.f32.xlu0 %v1679
    %v1743 = vpop.xlane.xlu0 %1742
    %1744 = vadd.xlane.f32.xlu0 %v1681
    %v1745 = vpop.xlane.xlu0 %1744
    %1746 = vadd.xlane.f32.xlu0 %v1683
    %v1747 = vpop.xlane.xlu0 %1746
    %1748 = vadd.xlane.f32.xlu0 %v1685
    %v1749 = vpop.xlane.xlu0 %1748
    %1750 = vadd.xlane.f32.xlu0 %v1687
    %v1751 = vpop.xlane.xlu0 %1750
    %1752 = vadd.xlane.f32.xlu0 %v1689
    %v1753 = vpop.xlane.xlu0 %1752
    %1754 = vadd.xlane.f32.xlu0 %v1691
    %v1755 = vpop.xlane.xlu0 %1754
    %1756 = vadd.xlane.f32.xlu0 %v1693
    %v1757 = vpop.xlane.xlu0 %1756
    %1758 = vadd.xlane.f32.xlu0 %v1695
    %v1759 = vpop.xlane.xlu0 %1758
    %1760 = vadd.xlane.f32.xlu0 %v1697
    %v1761 = vpop.xlane.xlu0 %1760
    %1762 = vadd.xlane.f32.xlu0 %v1699
    %v1763 = vpop.xlane.xlu0 %1762
    %1764 = vadd.xlane.f32.xlu0 %v1701
    %v1765 = vpop.xlane.xlu0 %1764
    %v1766 = vadd.f32 %v1718, %v1735
    %v1767 = vadd.f32 %v1719, %v1737
    %v1768 = vadd.f32 %v1720, %v1739
    %v1769 = vadd.f32 %v1721, %v1741
    %v1770 = vadd.f32 %v1722, %v1743
    %v1771 = vadd.f32 %v1723, %v1745
    %v1772 = vadd.f32 %v1724, %v1747
    %v1773 = vadd.f32 %v1725, %v1749
    %v1774 = vadd.f32 %v1726, %v1751
    %v1775 = vadd.f32 %v1727, %v1753
    %v1776 = vadd.f32 %v1728, %v1755
    %v1777 = vadd.f32 %v1729, %v1757
    %v1778 = vadd.f32 %v1730, %v1759
    %v1779 = vadd.f32 %v1731, %v1761
    %v1780 = vadd.f32 %v1732, %v1763
    %v1781 = vadd.f32 %v1733, %v1765
    %vm1782 = vcmask 7168
    %1783 = vst.msk [vmem:[#allocation3] sm:$0xff] %vm1782, %v1766
    %1784 = vst.msk [vmem:[#allocation3 + $0x8] sm:$0xff] %vm1782, %v1767
    %1785 = vst.msk [vmem:[#allocation3 + $0x10] sm:$0xff] %vm1782, %v1768
    %1786 = vst.msk [vmem:[#allocation3 + $0x18] sm:$0xff] %vm1782, %v1769
    %1787 = vst.msk [vmem:[#allocation3 + $0x20] sm:$0xff] %vm1782, %v1770
    %1788 = vst.msk [vmem:[#allocation3 + $0x28] sm:$0xff] %vm1782, %v1771
    %1789 = vst.msk [vmem:[#allocation3 + $0x30] sm:$0xff] %vm1782, %v1772
    %1790 = vst.msk [vmem:[#allocation3 + $0x38] sm:$0xff] %vm1782, %v1773
    %1791 = vst.msk [vmem:[#allocation3 + $0x40] sm:$0xff] %vm1782, %v1774
    %1792 = vst.msk [vmem:[#allocation3 + $0x48] sm:$0xff] %vm1782, %v1775
    %1793 = vst.msk [vmem:[#allocation3 + $0x50] sm:$0xff] %vm1782, %v1776
    %1794 = vst.msk [vmem:[#allocation3 + $0x58] sm:$0xff] %vm1782, %v1777
    %1795 = vst.msk [vmem:[#allocation3 + $0x60] sm:$0xff] %vm1782, %v1778
    %1796 = vst.msk [vmem:[#allocation3 + $0x68] sm:$0xff] %vm1782, %v1779
    %1797 = vst.msk [vmem:[#allocation3 + $0x70] sm:$0xff] %vm1782, %v1780
    %1798 = vst.msk [vmem:[#allocation3 + $0x78] sm:$0xff] %vm1782, %v1781
    %v1799 = vld [vmem:[#allocation4] sm:$0xff]
    %v1800 = vld [vmem:[#allocation4 + $0x8] sm:$0xff]
    %v1801 = vld [vmem:[#allocation4 + $0x10] sm:$0xff]
    %v1802 = vld [vmem:[#allocation4 + $0x18] sm:$0xff]
    %v1803 = vld [vmem:[#allocation4 + $0x20] sm:$0xff]
    %v1804 = vld [vmem:[#allocation4 + $0x28] sm:$0xff]
    %v1805 = vld [vmem:[#allocation4 + $0x30] sm:$0xff]
    %v1806 = vld [vmem:[#allocation4 + $0x38] sm:$0xff]
    %v1807 = vld [vmem:[#allocation4 + $0x40] sm:$0xff]
    %v1808 = vld [vmem:[#allocation4 + $0x48] sm:$0xff]
    %v1809 = vld [vmem:[#allocation4 + $0x50] sm:$0xff]
    %v1810 = vld [vmem:[#allocation4 + $0x58] sm:$0xff]
    %v1811 = vld [vmem:[#allocation4 + $0x60] sm:$0xff]
    %v1812 = vld [vmem:[#allocation4 + $0x68] sm:$0xff]
    %v1813 = vld [vmem:[#allocation4 + $0x70] sm:$0xff]
    %v1814 = vld [vmem:[#allocation4 + $0x78] sm:$0xff]
    %1816 = vset.pattern.permute.xlu0 0
    %1817 = vperm.xlu0 %1816, %v1543
    %v1818 = vpop.permute.xlu0 %1817
    %1821 = vset.pattern.permute.xlu0 0
    %1822 = vperm.xlu0 %1821, %v1545
    %v1823 = vpop.permute.xlu0 %1822
    %1826 = vset.pattern.permute.xlu0 0
    %1827 = vperm.xlu0 %1826, %v1547
    %v1828 = vpop.permute.xlu0 %1827
    %1831 = vset.pattern.permute.xlu0 0
    %1832 = vperm.xlu0 %1831, %v1549
    %v1833 = vpop.permute.xlu0 %1832
    %1836 = vset.pattern.permute.xlu0 0
    %1837 = vperm.xlu0 %1836, %v1551
    %v1838 = vpop.permute.xlu0 %1837
    %1841 = vset.pattern.permute.xlu0 0
    %1842 = vperm.xlu0 %1841, %v1553
    %v1843 = vpop.permute.xlu0 %1842
    %1846 = vset.pattern.permute.xlu0 0
    %1847 = vperm.xlu0 %1846, %v1555
    %v1848 = vpop.permute.xlu0 %1847
    %1851 = vset.pattern.permute.xlu0 0
    %1852 = vperm.xlu0 %1851, %v1557
    %v1853 = vpop.permute.xlu0 %1852
    %1856 = vset.pattern.permute.xlu0 0
    %1857 = vperm.xlu0 %1856, %v1559
    %v1858 = vpop.permute.xlu0 %1857
    %1861 = vset.pattern.permute.xlu0 0
    %1862 = vperm.xlu0 %1861, %v1561
    %v1863 = vpop.permute.xlu0 %1862
    %1866 = vset.pattern.permute.xlu0 0
    %1867 = vperm.xlu0 %1866, %v1563
    %v1868 = vpop.permute.xlu0 %1867
    %1871 = vset.pattern.permute.xlu0 0
    %1872 = vperm.xlu0 %1871, %v1565
    %v1873 = vpop.permute.xlu0 %1872
    %1876 = vset.pattern.permute.xlu0 0
    %1877 = vperm.xlu0 %1876, %v1567
    %v1878 = vpop.permute.xlu0 %1877
    %1881 = vset.pattern.permute.xlu0 0
    %1882 = vperm.xlu0 %1881, %v1569
    %v1883 = vpop.permute.xlu0 %1882
    %1886 = vset.pattern.permute.xlu0 0
    %1887 = vperm.xlu0 %1886, %v1571
    %v1888 = vpop.permute.xlu0 %1887
    %1891 = vset.pattern.permute.xlu0 0
    %1892 = vperm.xlu0 %1891, %v1573
    %v1893 = vpop.permute.xlu0 %1892
    %v1895 = vmul.f32 %v1818, %v1799
    %v1896 = vmul.f32 %v1823, %v1800
    %v1897 = vmul.f32 %v1828, %v1801
    %v1898 = vmul.f32 %v1833, %v1802
    %v1899 = vmul.f32 %v1838, %v1803
    %v1900 = vmul.f32 %v1843, %v1804
    %v1901 = vmul.f32 %v1848, %v1805
    %v1902 = vmul.f32 %v1853, %v1806
    %v1903 = vmul.f32 %v1858, %v1807
    %v1904 = vmul.f32 %v1863, %v1808
    %v1905 = vmul.f32 %v1868, %v1809
    %v1906 = vmul.f32 %v1873, %v1810
    %v1907 = vmul.f32 %v1878, %v1811
    %v1908 = vmul.f32 %v1883, %v1812
    %v1909 = vmul.f32 %v1888, %v1813
    %v1910 = vmul.f32 %v1893, %v1814
    %v1911 = vld [vmem:[%s3] sm:$0xff]
    %v1912 = vld [vmem:[%s3 + $0x8] sm:$0xff]
    %v1913 = vld [vmem:[%s3 + $0x10] sm:$0xff]
    %v1914 = vld [vmem:[%s3 + $0x18] sm:$0xff]
    %v1915 = vld [vmem:[%s3 + $0x20] sm:$0xff]
    %v1916 = vld [vmem:[%s3 + $0x28] sm:$0xff]
    %v1917 = vld [vmem:[%s3 + $0x30] sm:$0xff]
    %v1918 = vld [vmem:[%s3 + $0x38] sm:$0xff]
    %v1919 = vld [vmem:[%s3 + $0x40] sm:$0xff]
    %v1920 = vld [vmem:[%s3 + $0x48] sm:$0xff]
    %v1921 = vld [vmem:[%s3 + $0x50] sm:$0xff]
    %v1922 = vld [vmem:[%s3 + $0x58] sm:$0xff]
    %v1923 = vld [vmem:[%s3 + $0x60] sm:$0xff]
    %v1924 = vld [vmem:[%s3 + $0x68] sm:$0xff]
    %v1925 = vld [vmem:[%s3 + $0x70] sm:$0xff]
    %v1926 = vld [vmem:[%s3 + $0x78] sm:$0xff]
    %1927 = vmatprep.subr.mxu0 0.0
    %v1928 = vand.u32 %v1926, 4294901760
    %1929 = vmatpush1.msra.mxu0 %v1928
    %1930 = vmatprep.subr.mxu0 0.0
    %v1931 = vand.u32 %v1925, 4294901760
    %1932 = vmatpush1.msra.mxu0 %v1931
    %1933 = vmatprep.subr.mxu0 0.0
    %v1934 = vand.u32 %v1924, 4294901760
    %1935 = vmatpush1.msra.mxu0 %v1934
    %1936 = vmatprep.subr.mxu0 0.0
    %v1937 = vand.u32 %v1923, 4294901760
    %1938 = vmatpush1.msra.mxu0 %v1937
    %1939 = vmatprep.subr.mxu0 0.0
    %v1940 = vand.u32 %v1922, 4294901760
    %1941 = vmatpush1.msra.mxu0 %v1940
    %1942 = vmatprep.subr.mxu0 0.0
    %v1943 = vand.u32 %v1921, 4294901760
    %1944 = vmatpush1.msra.mxu0 %v1943
    %1945 = vmatprep.subr.mxu0 0.0
    %v1946 = vand.u32 %v1920, 4294901760
    %1947 = vmatpush1.msra.mxu0 %v1946
    %1948 = vmatprep.subr.mxu0 0.0
    %v1949 = vand.u32 %v1919, 4294901760
    %1950 = vmatpush1.msra.mxu0 %v1949
    %1951 = vmatprep.subr.mxu0 0.0
    %v1952 = vand.u32 %v1918, 4294901760
    %1953 = vmatpush1.msra.mxu0 %v1952
    %1954 = vmatprep.subr.mxu0 0.0
    %v1955 = vand.u32 %v1917, 4294901760
    %1956 = vmatpush1.msra.mxu0 %v1955
    %1957 = vmatprep.subr.mxu0 0.0
    %v1958 = vand.u32 %v1916, 4294901760
    %1959 = vmatpush1.msra.mxu0 %v1958
    %1960 = vmatprep.subr.mxu0 0.0
    %v1961 = vand.u32 %v1915, 4294901760
    %1962 = vmatpush1.msra.mxu0 %v1961
    %1963 = vmatprep.subr.mxu0 0.0
    %v1964 = vand.u32 %v1914, 4294901760
    %1965 = vmatpush1.msra.mxu0 %v1964
    %1966 = vmatprep.subr.mxu0 0.0
    %v1967 = vand.u32 %v1913, 4294901760
    %1968 = vmatpush1.msra.mxu0 %v1967
    %1969 = vmatprep.subr.mxu0 0.0
    %v1970 = vand.u32 %v1912, 4294901760
    %1971 = vmatpush1.msra.mxu0 %v1970
    %1972 = vmatprep.subr.mxu0 0.0
    %v1973 = vand.u32 %v1911, 4294901760
    %1974 = vmatpush1.msra.mxu0 %v1973
    %1975 = vmatprep.subr.mxu0 0.0
    %1976 = vmatpush2.msra.mxu0 0.0
    %1977 = vmatprep.subr.mxu0 0.0
    %1978 = vmatpush2.msra.mxu0 0.0
    %1979 = vmatprep.subr.mxu0 0.0
    %1980 = vmatpush2.msra.mxu0 0.0
    %1981 = vmatprep.subr.mxu0 0.0
    %1982 = vmatpush2.msra.mxu0 0.0
    %1983 = vmatprep.subr.mxu0 0.0
    %1984 = vmatpush2.msra.mxu0 0.0
    %1985 = vmatprep.subr.mxu0 0.0
    %1986 = vmatpush2.msra.mxu0 0.0
    %1987 = vmatprep.subr.mxu0 0.0
    %1988 = vmatpush2.msra.mxu0 0.0
    %1989 = vmatprep.subr.mxu0 0.0
    %1990 = vmatpush2.msra.mxu0 0.0
    %1991 = vmatprep.subr.mxu0 0.0
    %1992 = vmatpush2.msra.mxu0 0.0
    %1993 = vmatprep.subr.mxu0 0.0
    %1994 = vmatpush2.msra.mxu0 0.0
    %1995 = vmatprep.subr.mxu0 0.0
    %1996 = vmatpush2.msra.mxu0 0.0
    %1997 = vmatprep.subr.mxu0 0.0
    %1998 = vmatpush2.msra.mxu0 0.0
    %1999 = vmatprep.subr.mxu0 0.0
    %2000 = vmatpush2.msra.mxu0 0.0
    %2001 = vmatprep.subr.mxu0 0.0
    %2002 = vmatpush2.msra.mxu0 0.0
    %2003 = vmatprep.subr.mxu0 0.0
    %2004 = vmatpush2.msra.mxu0 0.0
    %2005 = vmatprep.subr.mxu0 0.0
    %2006 = vmatpush2.msra.mxu0 0.0
    %2007 = vmatprep.mubr.f32.mxu0 0.0
    %v2008 = vand.u32 %v1671, 4294901760
    %v2009 = vsub.f32 %v1671, %v2008
    %v2010 = vand.u32 %v2009, 4294901760
    %v2011 = vsub.f32 %v2009, %v2010
    %v2012 = vand.u32 %v2011, 4294901760
    %2013 = vmatmul.mubr.f32.gmra.mxu0 %v2012
    %v2014 = vpop.f32.mrf.mxu0
    %v2015 = vadd.f32 0.0, %v2014
    %v2016 = vpop.f32.mrf.mxu0
    %2017 = vmatprep.mubr.f32.mxu0 0.0
    %v2018 = vand.u32 %v1673, 4294901760
    %v2019 = vsub.f32 %v1673, %v2018
    %v2020 = vand.u32 %v2019, 4294901760
    %v2021 = vsub.f32 %v2019, %v2020
    %v2022 = vand.u32 %v2021, 4294901760
    %2023 = vmatmul.mubr.f32.gmra.mxu0 %v2022
    %v2024 = vpop.f32.mrf.mxu0
    %v2025 = vadd.f32 0.0, %v2024
    %v2026 = vpop.f32.mrf.mxu0
    %2027 = vmatprep.mubr.f32.mxu0 0.0
    %v2028 = vand.u32 %v1675, 4294901760
    %v2029 = vsub.f32 %v1675, %v2028
    %v2030 = vand.u32 %v2029, 4294901760
    %v2031 = vsub.f32 %v2029, %v2030
    %v2032 = vand.u32 %v2031, 4294901760
    %2033 = vmatmul.mubr.f32.gmra.mxu0 %v2032
    %v2034 = vpop.f32.mrf.mxu0
    %v2035 = vadd.f32 0.0, %v2034
    %v2036 = vpop.f32.mrf.mxu0
    %2037 = vmatprep.mubr.f32.mxu0 0.0
    %v2038 = vand.u32 %v1677, 4294901760
    %v2039 = vsub.f32 %v1677, %v2038
    %v2040 = vand.u32 %v2039, 4294901760
    %v2041 = vsub.f32 %v2039, %v2040
    %v2042 = vand.u32 %v2041, 4294901760
    %2043 = vmatmul.mubr.f32.gmra.mxu0 %v2042
    %v2044 = vpop.f32.mrf.mxu0
    %v2045 = vadd.f32 0.0, %v2044
    %v2046 = vpop.f32.mrf.mxu0
    %2047 = vmatprep.mubr.f32.mxu0 0.0
    %v2048 = vand.u32 %v1679, 4294901760
    %v2049 = vsub.f32 %v1679, %v2048
    %v2050 = vand.u32 %v2049, 4294901760
    %v2051 = vsub.f32 %v2049, %v2050
    %v2052 = vand.u32 %v2051, 4294901760
    %2053 = vmatmul.mubr.f32.gmra.mxu0 %v2052
    %v2054 = vpop.f32.mrf.mxu0
    %v2055 = vadd.f32 0.0, %v2054
    %v2056 = vpop.f32.mrf.mxu0
    %2057 = vmatprep.mubr.f32.mxu0 0.0
    %v2058 = vand.u32 %v1681, 4294901760
    %v2059 = vsub.f32 %v1681, %v2058
    %v2060 = vand.u32 %v2059, 4294901760
    %v2061 = vsub.f32 %v2059, %v2060
    %v2062 = vand.u32 %v2061, 4294901760
    %2063 = vmatmul.mubr.f32.gmra.mxu0 %v2062
    %v2064 = vpop.f32.mrf.mxu0
    %v2065 = vadd.f32 0.0, %v2064
    %v2066 = vpop.f32.mrf.mxu0
    %2067 = vmatprep.mubr.f32.mxu0 0.0
    %v2068 = vand.u32 %v1683, 4294901760
    %v2069 = vsub.f32 %v1683, %v2068
    %v2070 = vand.u32 %v2069, 4294901760
    %v2071 = vsub.f32 %v2069, %v2070
    %v2072 = vand.u32 %v2071, 4294901760
    %2073 = vmatmul.mubr.f32.gmra.mxu0 %v2072
    %v2074 = vpop.f32.mrf.mxu0
    %v2075 = vadd.f32 0.0, %v2074
    %v2076 = vpop.f32.mrf.mxu0
    %2077 = vmatprep.mubr.f32.mxu0 0.0
    %v2078 = vand.u32 %v1685, 4294901760
    %v2079 = vsub.f32 %v1685, %v2078
    %v2080 = vand.u32 %v2079, 4294901760
    %v2081 = vsub.f32 %v2079, %v2080
    %v2082 = vand.u32 %v2081, 4294901760
    %2083 = vmatmul.mubr.f32.gmra.mxu0 %v2082
    %v2084 = vpop.f32.mrf.mxu0
    %v2085 = vadd.f32 0.0, %v2084
    %v2086 = vpop.f32.mrf.mxu0
    %2087 = vmatprep.mubr.f32.mxu0 0.0
    %v2088 = vand.u32 %v1687, 4294901760
    %v2089 = vsub.f32 %v1687, %v2088
    %v2090 = vand.u32 %v2089, 4294901760
    %v2091 = vsub.f32 %v2089, %v2090
    %v2092 = vand.u32 %v2091, 4294901760
    %2093 = vmatmul.mubr.f32.gmra.mxu0 %v2092
    %v2094 = vpop.f32.mrf.mxu0
    %v2095 = vadd.f32 0.0, %v2094
    %v2096 = vpop.f32.mrf.mxu0
    %2097 = vmatprep.mubr.f32.mxu0 0.0
    %v2098 = vand.u32 %v1689, 4294901760
    %v2099 = vsub.f32 %v1689, %v2098
    %v2100 = vand.u32 %v2099, 4294901760
    %v2101 = vsub.f32 %v2099, %v2100
    %v2102 = vand.u32 %v2101, 4294901760
    %2103 = vmatmul.mubr.f32.gmra.mxu0 %v2102
    %v2104 = vpop.f32.mrf.mxu0
    %v2105 = vadd.f32 0.0, %v2104
    %v2106 = vpop.f32.mrf.mxu0
    %2107 = vmatprep.mubr.f32.mxu0 0.0
    %v2108 = vand.u32 %v1691, 4294901760
    %v2109 = vsub.f32 %v1691, %v2108
    %v2110 = vand.u32 %v2109, 4294901760
    %v2111 = vsub.f32 %v2109, %v2110
    %v2112 = vand.u32 %v2111, 4294901760
    %2113 = vmatmul.mubr.f32.gmra.mxu0 %v2112
    %v2114 = vpop.f32.mrf.mxu0
    %v2115 = vadd.f32 0.0, %v2114
    %v2116 = vpop.f32.mrf.mxu0
    %2117 = vmatprep.mubr.f32.mxu0 0.0
    %v2118 = vand.u32 %v1693, 4294901760
    %v2119 = vsub.f32 %v1693, %v2118
    %v2120 = vand.u32 %v2119, 4294901760
    %v2121 = vsub.f32 %v2119, %v2120
    %v2122 = vand.u32 %v2121, 4294901760
    %2123 = vmatmul.mubr.f32.gmra.mxu0 %v2122
    %v2124 = vpop.f32.mrf.mxu0
    %v2125 = vadd.f32 0.0, %v2124
    %v2126 = vpop.f32.mrf.mxu0
    %2127 = vmatprep.mubr.f32.mxu0 0.0
    %v2128 = vand.u32 %v1695, 4294901760
    %v2129 = vsub.f32 %v1695, %v2128
    %v2130 = vand.u32 %v2129, 4294901760
    %v2131 = vsub.f32 %v2129, %v2130
    %v2132 = vand.u32 %v2131, 4294901760
    %2133 = vmatmul.mubr.f32.gmra.mxu0 %v2132
    %v2134 = vpop.f32.mrf.mxu0
    %v2135 = vadd.f32 0.0, %v2134
    %v2136 = vpop.f32.mrf.mxu0
    %2137 = vmatprep.mubr.f32.mxu0 0.0
    %v2138 = vand.u32 %v1697, 4294901760
    %v2139 = vsub.f32 %v1697, %v2138
    %v2140 = vand.u32 %v2139, 4294901760
    %v2141 = vsub.f32 %v2139, %v2140
    %v2142 = vand.u32 %v2141, 4294901760
    %2143 = vmatmul.mubr.f32.gmra.mxu0 %v2142
    %v2144 = vpop.f32.mrf.mxu0
    %v2145 = vadd.f32 0.0, %v2144
    %v2146 = vpop.f32.mrf.mxu0
    %2147 = vmatprep.mubr.f32.mxu0 0.0
    %v2148 = vand.u32 %v1699, 4294901760
    %v2149 = vsub.f32 %v1699, %v2148
    %v2150 = vand.u32 %v2149, 4294901760
    %v2151 = vsub.f32 %v2149, %v2150
    %v2152 = vand.u32 %v2151, 4294901760
    %2153 = vmatmul.mubr.f32.gmra.mxu0 %v2152
    %v2154 = vpop.f32.mrf.mxu0
    %v2155 = vadd.f32 0.0, %v2154
    %v2156 = vpop.f32.mrf.mxu0
    %2157 = vmatprep.mubr.f32.mxu0 0.0
    %v2158 = vand.u32 %v1701, 4294901760
    %v2159 = vsub.f32 %v1701, %v2158
    %v2160 = vand.u32 %v2159, 4294901760
    %v2161 = vsub.f32 %v2159, %v2160
    %v2162 = vand.u32 %v2161, 4294901760
    %2163 = vmatmul.mubr.f32.gmra.mxu0 %v2162
    %v2164 = vpop.f32.mrf.mxu0
    %v2165 = vadd.f32 0.0, %v2164
    %v2166 = vpop.f32.mrf.mxu0
    %2167 = vdwg.mxu0
    %2168 = vmatprep.subr.mxu0 0.0
    %v2169 = vand.u32 %v1926, 4294901760
    %v2170 = vsub.f32 %v1926, %v2169
    %v2171 = vand.u32 %v2170, 4294901760
    %v2172 = vsub.f32 %v2170, %v2171
    %v2173 = vand.u32 %v2172, 4294901760
    %2174 = vmatpush1.msra.mxu0 %v2173
    %2175 = vmatprep.subr.mxu0 0.0
    %v2176 = vand.u32 %v1925, 4294901760
    %v2177 = vsub.f32 %v1925, %v2176
    %v2178 = vand.u32 %v2177, 4294901760
    %v2179 = vsub.f32 %v2177, %v2178
    %v2180 = vand.u32 %v2179, 4294901760
    %2181 = vmatpush1.msra.mxu0 %v2180
    %2182 = vmatprep.subr.mxu0 0.0
    %v2183 = vand.u32 %v1924, 4294901760
    %v2184 = vsub.f32 %v1924, %v2183
    %v2185 = vand.u32 %v2184, 4294901760
    %v2186 = vsub.f32 %v2184, %v2185
    %v2187 = vand.u32 %v2186, 4294901760
    %2188 = vmatpush1.msra.mxu0 %v2187
    %2189 = vmatprep.subr.mxu0 0.0
    %v2190 = vand.u32 %v1923, 4294901760
    %v2191 = vsub.f32 %v1923, %v2190
    %v2192 = vand.u32 %v2191, 4294901760
    %v2193 = vsub.f32 %v2191, %v2192
    %v2194 = vand.u32 %v2193, 4294901760
    %2195 = vmatpush1.msra.mxu0 %v2194
    %2196 = vmatprep.subr.mxu0 0.0
    %v2197 = vand.u32 %v1922, 4294901760
    %v2198 = vsub.f32 %v1922, %v2197
    %v2199 = vand.u32 %v2198, 4294901760
    %v2200 = vsub.f32 %v2198, %v2199
    %v2201 = vand.u32 %v2200, 4294901760
    %2202 = vmatpush1.msra.mxu0 %v2201
    %2203 = vmatprep.subr.mxu0 0.0
    %v2204 = vand.u32 %v1921, 4294901760
    %v2205 = vsub.f32 %v1921, %v2204
    %v2206 = vand.u32 %v2205, 4294901760
    %v2207 = vsub.f32 %v2205, %v2206
    %v2208 = vand.u32 %v2207, 4294901760
    %2209 = vmatpush1.msra.mxu0 %v2208
    %2210 = vmatprep.subr.mxu0 0.0
    %v2211 = vand.u32 %v1920, 4294901760
    %v2212 = vsub.f32 %v1920, %v2211
    %v2213 = vand.u32 %v2212, 4294901760
    %v2214 = vsub.f32 %v2212, %v2213
    %v2215 = vand.u32 %v2214, 4294901760
    %2216 = vmatpush1.msra.mxu0 %v2215
    %2217 = vmatprep.subr.mxu0 0.0
    %v2218 = vand.u32 %v1919, 4294901760
    %v2219 = vsub.f32 %v1919, %v2218
    %v2220 = vand.u32 %v2219, 4294901760
    %v2221 = vsub.f32 %v2219, %v2220
    %v2222 = vand.u32 %v2221, 4294901760
    %2223 = vmatpush1.msra.mxu0 %v2222
    %2224 = vmatprep.subr.mxu0 0.0
    %v2225 = vand.u32 %v1918, 4294901760
    %v2226 = vsub.f32 %v1918, %v2225
    %v2227 = vand.u32 %v2226, 4294901760
    %v2228 = vsub.f32 %v2226, %v2227
    %v2229 = vand.u32 %v2228, 4294901760
    %2230 = vmatpush1.msra.mxu0 %v2229
    %2231 = vmatprep.subr.mxu0 0.0
    %v2232 = vand.u32 %v1917, 4294901760
    %v2233 = vsub.f32 %v1917, %v2232
    %v2234 = vand.u32 %v2233, 4294901760
    %v2235 = vsub.f32 %v2233, %v2234
    %v2236 = vand.u32 %v2235, 4294901760
    %2237 = vmatpush1.msra.mxu0 %v2236
    %2238 = vmatprep.subr.mxu0 0.0
    %v2239 = vand.u32 %v1916, 4294901760
    %v2240 = vsub.f32 %v1916, %v2239
    %v2241 = vand.u32 %v2240, 4294901760
    %v2242 = vsub.f32 %v2240, %v2241
    %v2243 = vand.u32 %v2242, 4294901760
    %2244 = vmatpush1.msra.mxu0 %v2243
    %2245 = vmatprep.subr.mxu0 0.0
    %v2246 = vand.u32 %v1915, 4294901760
    %v2247 = vsub.f32 %v1915, %v2246
    %v2248 = vand.u32 %v2247, 4294901760
    %v2249 = vsub.f32 %v2247, %v2248
    %v2250 = vand.u32 %v2249, 4294901760
    %2251 = vmatpush1.msra.mxu0 %v2250
    %2252 = vmatprep.subr.mxu0 0.0
    %v2253 = vand.u32 %v1914, 4294901760
    %v2254 = vsub.f32 %v1914, %v2253
    %v2255 = vand.u32 %v2254, 4294901760
    %v2256 = vsub.f32 %v2254, %v2255
    %v2257 = vand.u32 %v2256, 4294901760
    %2258 = vmatpush1.msra.mxu0 %v2257
    %2259 = vmatprep.subr.mxu0 0.0
    %v2260 = vand.u32 %v1913, 4294901760
    %v2261 = vsub.f32 %v1913, %v2260
    %v2262 = vand.u32 %v2261, 4294901760
    %v2263 = vsub.f32 %v2261, %v2262
    %v2264 = vand.u32 %v2263, 4294901760
    %2265 = vmatpush1.msra.mxu0 %v2264
    %2266 = vmatprep.subr.mxu0 0.0
    %v2267 = vand.u32 %v1912, 4294901760
    %v2268 = vsub.f32 %v1912, %v2267
    %v2269 = vand.u32 %v2268, 4294901760
    %v2270 = vsub.f32 %v2268, %v2269
    %v2271 = vand.u32 %v2270, 4294901760
    %2272 = vmatpush1.msra.mxu0 %v2271
    %2273 = vmatprep.subr.mxu0 0.0
    %v2274 = vand.u32 %v1911, 4294901760
    %v2275 = vsub.f32 %v1911, %v2274
    %v2276 = vand.u32 %v2275, 4294901760
    %v2277 = vsub.f32 %v2275, %v2276
    %v2278 = vand.u32 %v2277, 4294901760
    %2279 = vmatpush1.msra.mxu0 %v2278
    %2280 = vmatprep.subr.mxu0 0.0
    %2281 = vmatpush2.msra.mxu0 0.0
    %2282 = vmatprep.subr.mxu0 0.0
    %2283 = vmatpush2.msra.mxu0 0.0
    %2284 = vmatprep.subr.mxu0 0.0
    %2285 = vmatpush2.msra.mxu0 0.0
    %2286 = vmatprep.subr.mxu0 0.0
    %2287 = vmatpush2.msra.mxu0 0.0
    %2288 = vmatprep.subr.mxu0 0.0
    %2289 = vmatpush2.msra.mxu0 0.0
    %2290 = vmatprep.subr.mxu0 0.0
    %2291 = vmatpush2.msra.mxu0 0.0
    %2292 = vmatprep.subr.mxu0 0.0
    %2293 = vmatpush2.msra.mxu0 0.0
    %2294 = vmatprep.subr.mxu0 0.0
    %2295 = vmatpush2.msra.mxu0 0.0
    %2296 = vmatprep.subr.mxu0 0.0
    %2297 = vmatpush2.msra.mxu0 0.0
    %2298 = vmatprep.subr.mxu0 0.0
    %2299 = vmatpush2.msra.mxu0 0.0
    %2300 = vmatprep.subr.mxu0 0.0
    %2301 = vmatpush2.msra.mxu0 0.0
    %2302 = vmatprep.subr.mxu0 0.0
    %2303 = vmatpush2.msra.mxu0 0.0
    %2304 = vmatprep.subr.mxu0 0.0
    %2305 = vmatpush2.msra.mxu0 0.0
    %2306 = vmatprep.subr.mxu0 0.0
    %2307 = vmatpush2.msra.mxu0 0.0
    %2308 = vmatprep.subr.mxu0 0.0
    %2309 = vmatpush2.msra.mxu0 0.0
    %2310 = vmatprep.subr.mxu0 0.0
    %2311 = vmatpush2.msra.mxu0 0.0
    %2312 = vmatprep.mubr.f32.mxu0 0.0
    %v2313 = vand.u32 %v1671, 4294901760
    %2314 = vmatmul.mubr.f32.gmra.mxu0 %v2313
    %v2315 = vpop.f32.mrf.mxu0
    %v2316 = vadd.f32 %v2015, %v2315
    %v2317 = vpop.f32.mrf.mxu0
    %2318 = vmatprep.mubr.f32.mxu0 0.0
    %v2319 = vand.u32 %v1673, 4294901760
    %2320 = vmatmul.mubr.f32.gmra.mxu0 %v2319
    %v2321 = vpop.f32.mrf.mxu0
    %v2322 = vadd.f32 %v2025, %v2321
    %v2323 = vpop.f32.mrf.mxu0
    %2324 = vmatprep.mubr.f32.mxu0 0.0
    %v2325 = vand.u32 %v1675, 4294901760
    %2326 = vmatmul.mubr.f32.gmra.mxu0 %v2325
    %v2327 = vpop.f32.mrf.mxu0
    %v2328 = vadd.f32 %v2035, %v2327
    %v2329 = vpop.f32.mrf.mxu0
    %2330 = vmatprep.mubr.f32.mxu0 0.0
    %v2331 = vand.u32 %v1677, 4294901760
    %2332 = vmatmul.mubr.f32.gmra.mxu0 %v2331
    %v2333 = vpop.f32.mrf.mxu0
    %v2334 = vadd.f32 %v2045, %v2333
    %v2335 = vpop.f32.mrf.mxu0
    %2336 = vmatprep.mubr.f32.mxu0 0.0
    %v2337 = vand.u32 %v1679, 4294901760
    %2338 = vmatmul.mubr.f32.gmra.mxu0 %v2337
    %v2339 = vpop.f32.mrf.mxu0
    %v2340 = vadd.f32 %v2055, %v2339
    %v2341 = vpop.f32.mrf.mxu0
    %2342 = vmatprep.mubr.f32.mxu0 0.0
    %v2343 = vand.u32 %v1681, 4294901760
    %2344 = vmatmul.mubr.f32.gmra.mxu0 %v2343
    %v2345 = vpop.f32.mrf.mxu0
    %v2346 = vadd.f32 %v2065, %v2345
    %v2347 = vpop.f32.mrf.mxu0
    %2348 = vmatprep.mubr.f32.mxu0 0.0
    %v2349 = vand.u32 %v1683, 4294901760
    %2350 = vmatmul.mubr.f32.gmra.mxu0 %v2349
    %v2351 = vpop.f32.mrf.mxu0
    %v2352 = vadd.f32 %v2075, %v2351
    %v2353 = vpop.f32.mrf.mxu0
    %2354 = vmatprep.mubr.f32.mxu0 0.0
    %v2355 = vand.u32 %v1685, 4294901760
    %2356 = vmatmul.mubr.f32.gmra.mxu0 %v2355
    %v2357 = vpop.f32.mrf.mxu0
    %v2358 = vadd.f32 %v2085, %v2357
    %v2359 = vpop.f32.mrf.mxu0
    %2360 = vmatprep.mubr.f32.mxu0 0.0
    %v2361 = vand.u32 %v1687, 4294901760
    %2362 = vmatmul.mubr.f32.gmra.mxu0 %v2361
    %v2363 = vpop.f32.mrf.mxu0
    %v2364 = vadd.f32 %v2095, %v2363
    %v2365 = vpop.f32.mrf.mxu0
    %2366 = vmatprep.mubr.f32.mxu0 0.0
    %v2367 = vand.u32 %v1689, 4294901760
    %2368 = vmatmul.mubr.f32.gmra.mxu0 %v2367
    %v2369 = vpop.f32.mrf.mxu0
    %v2370 = vadd.f32 %v2105, %v2369
    %v2371 = vpop.f32.mrf.mxu0
    %2372 = vmatprep.mubr.f32.mxu0 0.0
    %v2373 = vand.u32 %v1691, 4294901760
    %2374 = vmatmul.mubr.f32.gmra.mxu0 %v2373
    %v2375 = vpop.f32.mrf.mxu0
    %v2376 = vadd.f32 %v2115, %v2375
    %v2377 = vpop.f32.mrf.mxu0
    %2378 = vmatprep.mubr.f32.mxu0 0.0
    %v2379 = vand.u32 %v1693, 4294901760
    %2380 = vmatmul.mubr.f32.gmra.mxu0 %v2379
    %v2381 = vpop.f32.mrf.mxu0
    %v2382 = vadd.f32 %v2125, %v2381
    %v2383 = vpop.f32.mrf.mxu0
    %2384 = vmatprep.mubr.f32.mxu0 0.0
    %v2385 = vand.u32 %v1695, 4294901760
    %2386 = vmatmul.mubr.f32.gmra.mxu0 %v2385
    %v2387 = vpop.f32.mrf.mxu0
    %v2388 = vadd.f32 %v2135, %v2387
    %v2389 = vpop.f32.mrf.mxu0
    %2390 = vmatprep.mubr.f32.mxu0 0.0
    %v2391 = vand.u32 %v1697, 4294901760
    %2392 = vmatmul.mubr.f32.gmra.mxu0 %v2391
    %v2393 = vpop.f32.mrf.mxu0
    %v2394 = vadd.f32 %v2145, %v2393
    %v2395 = vpop.f32.mrf.mxu0
    %2396 = vmatprep.mubr.f32.mxu0 0.0
    %v2397 = vand.u32 %v1699, 4294901760
    %2398 = vmatmul.mubr.f32.gmra.mxu0 %v2397
    %v2399 = vpop.f32.mrf.mxu0
    %v2400 = vadd.f32 %v2155, %v2399
    %v2401 = vpop.f32.mrf.mxu0
    %2402 = vmatprep.mubr.f32.mxu0 0.0
    %v2403 = vand.u32 %v1701, 4294901760
    %2404 = vmatmul.mubr.f32.gmra.mxu0 %v2403
    %v2405 = vpop.f32.mrf.mxu0
    %v2406 = vadd.f32 %v2165, %v2405
    %v2407 = vpop.f32.mrf.mxu0
    %2408 = vdwg.mxu0
    %2409 = vmatprep.subr.mxu0 0.0
    %v2410 = vand.u32 %v1926, 4294901760
    %v2411 = vsub.f32 %v1926, %v2410
    %2412 = vmatpush1.msra.mxu0 %v2411
    %2413 = vmatprep.subr.mxu0 0.0
    %v2414 = vand.u32 %v1925, 4294901760
    %v2415 = vsub.f32 %v1925, %v2414
    %2416 = vmatpush1.msra.mxu0 %v2415
    %2417 = vmatprep.subr.mxu0 0.0
    %v2418 = vand.u32 %v1924, 4294901760
    %v2419 = vsub.f32 %v1924, %v2418
    %2420 = vmatpush1.msra.mxu0 %v2419
    %2421 = vmatprep.subr.mxu0 0.0
    %v2422 = vand.u32 %v1923, 4294901760
    %v2423 = vsub.f32 %v1923, %v2422
    %2424 = vmatpush1.msra.mxu0 %v2423
    %2425 = vmatprep.subr.mxu0 0.0
    %v2426 = vand.u32 %v1922, 4294901760
    %v2427 = vsub.f32 %v1922, %v2426
    %2428 = vmatpush1.msra.mxu0 %v2427
    %2429 = vmatprep.subr.mxu0 0.0
    %v2430 = vand.u32 %v1921, 4294901760
    %v2431 = vsub.f32 %v1921, %v2430
    %2432 = vmatpush1.msra.mxu0 %v2431
    %2433 = vmatprep.subr.mxu0 0.0
    %v2434 = vand.u32 %v1920, 4294901760
    %v2435 = vsub.f32 %v1920, %v2434
    %2436 = vmatpush1.msra.mxu0 %v2435
    %2437 = vmatprep.subr.mxu0 0.0
    %v2438 = vand.u32 %v1919, 4294901760
    %v2439 = vsub.f32 %v1919, %v2438
    %2440 = vmatpush1.msra.mxu0 %v2439
    %2441 = vmatprep.subr.mxu0 0.0
    %v2442 = vand.u32 %v1918, 4294901760
    %v2443 = vsub.f32 %v1918, %v2442
    %2444 = vmatpush1.msra.mxu0 %v2443
    %2445 = vmatprep.subr.mxu0 0.0
    %v2446 = vand.u32 %v1917, 4294901760
    %v2447 = vsub.f32 %v1917, %v2446
    %2448 = vmatpush1.msra.mxu0 %v2447
    %2449 = vmatprep.subr.mxu0 0.0
    %v2450 = vand.u32 %v1916, 4294901760
    %v2451 = vsub.f32 %v1916, %v2450
    %2452 = vmatpush1.msra.mxu0 %v2451
    %2453 = vmatprep.subr.mxu0 0.0
    %v2454 = vand.u32 %v1915, 4294901760
    %v2455 = vsub.f32 %v1915, %v2454
    %2456 = vmatpush1.msra.mxu0 %v2455
    %2457 = vmatprep.subr.mxu0 0.0
    %v2458 = vand.u32 %v1914, 4294901760
    %v2459 = vsub.f32 %v1914, %v2458
    %2460 = vmatpush1.msra.mxu0 %v2459
    %2461 = vmatprep.subr.mxu0 0.0
    %v2462 = vand.u32 %v1913, 4294901760
    %v2463 = vsub.f32 %v1913, %v2462
    %2464 = vmatpush1.msra.mxu0 %v2463
    %2465 = vmatprep.subr.mxu0 0.0
    %v2466 = vand.u32 %v1912, 4294901760
    %v2467 = vsub.f32 %v1912, %v2466
    %2468 = vmatpush1.msra.mxu0 %v2467
    %2469 = vmatprep.subr.mxu0 0.0
    %v2470 = vand.u32 %v1911, 4294901760
    %v2471 = vsub.f32 %v1911, %v2470
    %2472 = vmatpush1.msra.mxu0 %v2471
    %2473 = vmatprep.subr.mxu0 0.0
    %2474 = vmatpush2.msra.mxu0 0.0
    %2475 = vmatprep.subr.mxu0 0.0
    %2476 = vmatpush2.msra.mxu0 0.0
    %2477 = vmatprep.subr.mxu0 0.0
    %2478 = vmatpush2.msra.mxu0 0.0
    %2479 = vmatprep.subr.mxu0 0.0
    %2480 = vmatpush2.msra.mxu0 0.0
    %2481 = vmatprep.subr.mxu0 0.0
    %2482 = vmatpush2.msra.mxu0 0.0
    %2483 = vmatprep.subr.mxu0 0.0
    %2484 = vmatpush2.msra.mxu0 0.0
    %2485 = vmatprep.subr.mxu0 0.0
    %2486 = vmatpush2.msra.mxu0 0.0
    %2487 = vmatprep.subr.mxu0 0.0
    %2488 = vmatpush2.msra.mxu0 0.0
    %2489 = vmatprep.subr.mxu0 0.0
    %2490 = vmatpush2.msra.mxu0 0.0
    %2491 = vmatprep.subr.mxu0 0.0
    %2492 = vmatpush2.msra.mxu0 0.0
    %2493 = vmatprep.subr.mxu0 0.0
    %2494 = vmatpush2.msra.mxu0 0.0
    %2495 = vmatprep.subr.mxu0 0.0
    %2496 = vmatpush2.msra.mxu0 0.0
    %2497 = vmatprep.subr.mxu0 0.0
    %2498 = vmatpush2.msra.mxu0 0.0
    %2499 = vmatprep.subr.mxu0 0.0
    %2500 = vmatpush2.msra.mxu0 0.0
    %2501 = vmatprep.subr.mxu0 0.0
    %2502 = vmatpush2.msra.mxu0 0.0
    %2503 = vmatprep.subr.mxu0 0.0
    %2504 = vmatpush2.msra.mxu0 0.0
    %2505 = vmatprep.mubr.f32.mxu0 0.0
    %v2506 = vand.u32 %v1671, 4294901760
    %v2507 = vsub.f32 %v1671, %v2506
    %2508 = vmatmul.mubr.f32.gmra.mxu0 %v2507
    %v2509 = vpop.f32.mrf.mxu0
    %v2510 = vadd.f32 %v2316, %v2509
    %v2511 = vpop.f32.mrf.mxu0
    %2512 = vmatprep.mubr.f32.mxu0 0.0
    %v2513 = vand.u32 %v1673, 4294901760
    %v2514 = vsub.f32 %v1673, %v2513
    %2515 = vmatmul.mubr.f32.gmra.mxu0 %v2514
    %v2516 = vpop.f32.mrf.mxu0
    %v2517 = vadd.f32 %v2322, %v2516
    %v2518 = vpop.f32.mrf.mxu0
    %2519 = vmatprep.mubr.f32.mxu0 0.0
    %v2520 = vand.u32 %v1675, 4294901760
    %v2521 = vsub.f32 %v1675, %v2520
    %2522 = vmatmul.mubr.f32.gmra.mxu0 %v2521
    %v2523 = vpop.f32.mrf.mxu0
    %v2524 = vadd.f32 %v2328, %v2523
    %v2525 = vpop.f32.mrf.mxu0
    %2526 = vmatprep.mubr.f32.mxu0 0.0
    %v2527 = vand.u32 %v1677, 4294901760
    %v2528 = vsub.f32 %v1677, %v2527
    %2529 = vmatmul.mubr.f32.gmra.mxu0 %v2528
    %v2530 = vpop.f32.mrf.mxu0
    %v2531 = vadd.f32 %v2334, %v2530
    %v2532 = vpop.f32.mrf.mxu0
    %2533 = vmatprep.mubr.f32.mxu0 0.0
    %v2534 = vand.u32 %v1679, 4294901760
    %v2535 = vsub.f32 %v1679, %v2534
    %2536 = vmatmul.mubr.f32.gmra.mxu0 %v2535
    %v2537 = vpop.f32.mrf.mxu0
    %v2538 = vadd.f32 %v2340, %v2537
    %v2539 = vpop.f32.mrf.mxu0
    %2540 = vmatprep.mubr.f32.mxu0 0.0
    %v2541 = vand.u32 %v1681, 4294901760
    %v2542 = vsub.f32 %v1681, %v2541
    %2543 = vmatmul.mubr.f32.gmra.mxu0 %v2542
    %v2544 = vpop.f32.mrf.mxu0
    %v2545 = vadd.f32 %v2346, %v2544
    %v2546 = vpop.f32.mrf.mxu0
    %2547 = vmatprep.mubr.f32.mxu0 0.0
    %v2548 = vand.u32 %v1683, 4294901760
    %v2549 = vsub.f32 %v1683, %v2548
    %2550 = vmatmul.mubr.f32.gmra.mxu0 %v2549
    %v2551 = vpop.f32.mrf.mxu0
    %v2552 = vadd.f32 %v2352, %v2551
    %v2553 = vpop.f32.mrf.mxu0
    %2554 = vmatprep.mubr.f32.mxu0 0.0
    %v2555 = vand.u32 %v1685, 4294901760
    %v2556 = vsub.f32 %v1685, %v2555
    %2557 = vmatmul.mubr.f32.gmra.mxu0 %v2556
    %v2558 = vpop.f32.mrf.mxu0
    %v2559 = vadd.f32 %v2358, %v2558
    %v2560 = vpop.f32.mrf.mxu0
    %2561 = vmatprep.mubr.f32.mxu0 0.0
    %v2562 = vand.u32 %v1687, 4294901760
    %v2563 = vsub.f32 %v1687, %v2562
    %2564 = vmatmul.mubr.f32.gmra.mxu0 %v2563
    %v2565 = vpop.f32.mrf.mxu0
    %v2566 = vadd.f32 %v2364, %v2565
    %v2567 = vpop.f32.mrf.mxu0
    %2568 = vmatprep.mubr.f32.mxu0 0.0
    %v2569 = vand.u32 %v1689, 4294901760
    %v2570 = vsub.f32 %v1689, %v2569
    %2571 = vmatmul.mubr.f32.gmra.mxu0 %v2570
    %v2572 = vpop.f32.mrf.mxu0
    %v2573 = vadd.f32 %v2370, %v2572
    %v2574 = vpop.f32.mrf.mxu0
    %2575 = vmatprep.mubr.f32.mxu0 0.0
    %v2576 = vand.u32 %v1691, 4294901760
    %v2577 = vsub.f32 %v1691, %v2576
    %2578 = vmatmul.mubr.f32.gmra.mxu0 %v2577
    %v2579 = vpop.f32.mrf.mxu0
    %v2580 = vadd.f32 %v2376, %v2579
    %v2581 = vpop.f32.mrf.mxu0
    %2582 = vmatprep.mubr.f32.mxu0 0.0
    %v2583 = vand.u32 %v1693, 4294901760
    %v2584 = vsub.f32 %v1693, %v2583
    %2585 = vmatmul.mubr.f32.gmra.mxu0 %v2584
    %v2586 = vpop.f32.mrf.mxu0
    %v2587 = vadd.f32 %v2382, %v2586
    %v2588 = vpop.f32.mrf.mxu0
    %2589 = vmatprep.mubr.f32.mxu0 0.0
    %v2590 = vand.u32 %v1695, 4294901760
    %v2591 = vsub.f32 %v1695, %v2590
    %2592 = vmatmul.mubr.f32.gmra.mxu0 %v2591
    %v2593 = vpop.f32.mrf.mxu0
    %v2594 = vadd.f32 %v2388, %v2593
    %v2595 = vpop.f32.mrf.mxu0
    %2596 = vmatprep.mubr.f32.mxu0 0.0
    %v2597 = vand.u32 %v1697, 4294901760
    %v2598 = vsub.f32 %v1697, %v2597
    %2599 = vmatmul.mubr.f32.gmra.mxu0 %v2598
    %v2600 = vpop.f32.mrf.mxu0
    %v2601 = vadd.f32 %v2394, %v2600
    %v2602 = vpop.f32.mrf.mxu0
    %2603 = vmatprep.mubr.f32.mxu0 0.0
    %v2604 = vand.u32 %v1699, 4294901760
    %v2605 = vsub.f32 %v1699, %v2604
    %2606 = vmatmul.mubr.f32.gmra.mxu0 %v2605
    %v2607 = vpop.f32.mrf.mxu0
    %v2608 = vadd.f32 %v2400, %v2607
    %v2609 = vpop.f32.mrf.mxu0
    %2610 = vmatprep.mubr.f32.mxu0 0.0
    %v2611 = vand.u32 %v1701, 4294901760
    %v2612 = vsub.f32 %v1701, %v2611
    %2613 = vmatmul.mubr.f32.gmra.mxu0 %v2612
    %v2614 = vpop.f32.mrf.mxu0
    %v2615 = vadd.f32 %v2406, %v2614
    %v2616 = vpop.f32.mrf.mxu0
    %2617 = vdwg.mxu0
    %2618 = vmatprep.subr.mxu0 0.0
    %v2619 = vand.u32 %v1926, 4294901760
    %2620 = vmatpush1.msra.mxu0 %v2619
    %2621 = vmatprep.subr.mxu0 0.0
    %v2622 = vand.u32 %v1925, 4294901760
    %2623 = vmatpush1.msra.mxu0 %v2622
    %2624 = vmatprep.subr.mxu0 0.0
    %v2625 = vand.u32 %v1924, 4294901760
    %2626 = vmatpush1.msra.mxu0 %v2625
    %2627 = vmatprep.subr.mxu0 0.0
    %v2628 = vand.u32 %v1923, 4294901760
    %2629 = vmatpush1.msra.mxu0 %v2628
    %2630 = vmatprep.subr.mxu0 0.0
    %v2631 = vand.u32 %v1922, 4294901760
    %2632 = vmatpush1.msra.mxu0 %v2631
    %2633 = vmatprep.subr.mxu0 0.0
    %v2634 = vand.u32 %v1921, 4294901760
    %2635 = vmatpush1.msra.mxu0 %v2634
    %2636 = vmatprep.subr.mxu0 0.0
    %v2637 = vand.u32 %v1920, 4294901760
    %2638 = vmatpush1.msra.mxu0 %v2637
    %2639 = vmatprep.subr.mxu0 0.0
    %v2640 = vand.u32 %v1919, 4294901760
    %2641 = vmatpush1.msra.mxu0 %v2640
    %2642 = vmatprep.subr.mxu0 0.0
    %v2643 = vand.u32 %v1918, 4294901760
    %2644 = vmatpush1.msra.mxu0 %v2643
    %2645 = vmatprep.subr.mxu0 0.0
    %v2646 = vand.u32 %v1917, 4294901760
    %2647 = vmatpush1.msra.mxu0 %v2646
    %2648 = vmatprep.subr.mxu0 0.0
    %v2649 = vand.u32 %v1916, 4294901760
    %2650 = vmatpush1.msra.mxu0 %v2649
    %2651 = vmatprep.subr.mxu0 0.0
    %v2652 = vand.u32 %v1915, 4294901760
    %2653 = vmatpush1.msra.mxu0 %v2652
    %2654 = vmatprep.subr.mxu0 0.0
    %v2655 = vand.u32 %v1914, 4294901760
    %2656 = vmatpush1.msra.mxu0 %v2655
    %2657 = vmatprep.subr.mxu0 0.0
    %v2658 = vand.u32 %v1913, 4294901760
    %2659 = vmatpush1.msra.mxu0 %v2658
    %2660 = vmatprep.subr.mxu0 0.0
    %v2661 = vand.u32 %v1912, 4294901760
    %2662 = vmatpush1.msra.mxu0 %v2661
    %2663 = vmatprep.subr.mxu0 0.0
    %v2664 = vand.u32 %v1911, 4294901760
    %2665 = vmatpush1.msra.mxu0 %v2664
    %2666 = vmatprep.subr.mxu0 0.0
    %2667 = vmatpush2.msra.mxu0 0.0
    %2668 = vmatprep.subr.mxu0 0.0
    %2669 = vmatpush2.msra.mxu0 0.0
    %2670 = vmatprep.subr.mxu0 0.0
    %2671 = vmatpush2.msra.mxu0 0.0
    %2672 = vmatprep.subr.mxu0 0.0
    %2673 = vmatpush2.msra.mxu0 0.0
    %2674 = vmatprep.subr.mxu0 0.0
    %2675 = vmatpush2.msra.mxu0 0.0
    %2676 = vmatprep.subr.mxu0 0.0
    %2677 = vmatpush2.msra.mxu0 0.0
    %2678 = vmatprep.subr.mxu0 0.0
    %2679 = vmatpush2.msra.mxu0 0.0
    %2680 = vmatprep.subr.mxu0 0.0
    %2681 = vmatpush2.msra.mxu0 0.0
    %2682 = vmatprep.subr.mxu0 0.0
    %2683 = vmatpush2.msra.mxu0 0.0
    %2684 = vmatprep.subr.mxu0 0.0
    %2685 = vmatpush2.msra.mxu0 0.0
    %2686 = vmatprep.subr.mxu0 0.0
    %2687 = vmatpush2.msra.mxu0 0.0
    %2688 = vmatprep.subr.mxu0 0.0
    %2689 = vmatpush2.msra.mxu0 0.0
    %2690 = vmatprep.subr.mxu0 0.0
    %2691 = vmatpush2.msra.mxu0 0.0
    %2692 = vmatprep.subr.mxu0 0.0
    %2693 = vmatpush2.msra.mxu0 0.0
    %2694 = vmatprep.subr.mxu0 0.0
    %2695 = vmatpush2.msra.mxu0 0.0
    %2696 = vmatprep.subr.mxu0 0.0
    %2697 = vmatpush2.msra.mxu0 0.0
    %2698 = vmatprep.mubr.f32.mxu0 0.0
    %v2699 = vand.u32 %v1671, 4294901760
    %v2700 = vsub.f32 %v1671, %v2699
    %v2701 = vand.u32 %v2700, 4294901760
    %2702 = vmatmul.mubr.f32.gmra.mxu0 %v2701
    %v2703 = vpop.f32.mrf.mxu0
    %v2704 = vadd.f32 %v2510, %v2703
    %v2705 = vpop.f32.mrf.mxu0
    %2706 = vmatprep.mubr.f32.mxu0 0.0
    %v2707 = vand.u32 %v1673, 4294901760
    %v2708 = vsub.f32 %v1673, %v2707
    %v2709 = vand.u32 %v2708, 4294901760
    %2710 = vmatmul.mubr.f32.gmra.mxu0 %v2709
    %v2711 = vpop.f32.mrf.mxu0
    %v2712 = vadd.f32 %v2517, %v2711
    %v2713 = vpop.f32.mrf.mxu0
    %2714 = vmatprep.mubr.f32.mxu0 0.0
    %v2715 = vand.u32 %v1675, 4294901760
    %v2716 = vsub.f32 %v1675, %v2715
    %v2717 = vand.u32 %v2716, 4294901760
    %2718 = vmatmul.mubr.f32.gmra.mxu0 %v2717
    %v2719 = vpop.f32.mrf.mxu0
    %v2720 = vadd.f32 %v2524, %v2719
    %v2721 = vpop.f32.mrf.mxu0
    %2722 = vmatprep.mubr.f32.mxu0 0.0
    %v2723 = vand.u32 %v1677, 4294901760
    %v2724 = vsub.f32 %v1677, %v2723
    %v2725 = vand.u32 %v2724, 4294901760
    %2726 = vmatmul.mubr.f32.gmra.mxu0 %v2725
    %v2727 = vpop.f32.mrf.mxu0
    %v2728 = vadd.f32 %v2531, %v2727
    %v2729 = vpop.f32.mrf.mxu0
    %2730 = vmatprep.mubr.f32.mxu0 0.0
    %v2731 = vand.u32 %v1679, 4294901760
    %v2732 = vsub.f32 %v1679, %v2731
    %v2733 = vand.u32 %v2732, 4294901760
    %2734 = vmatmul.mubr.f32.gmra.mxu0 %v2733
    %v2735 = vpop.f32.mrf.mxu0
    %v2736 = vadd.f32 %v2538, %v2735
    %v2737 = vpop.f32.mrf.mxu0
    %2738 = vmatprep.mubr.f32.mxu0 0.0
    %v2739 = vand.u32 %v1681, 4294901760
    %v2740 = vsub.f32 %v1681, %v2739
    %v2741 = vand.u32 %v2740, 4294901760
    %2742 = vmatmul.mubr.f32.gmra.mxu0 %v2741
    %v2743 = vpop.f32.mrf.mxu0
    %v2744 = vadd.f32 %v2545, %v2743
    %v2745 = vpop.f32.mrf.mxu0
    %2746 = vmatprep.mubr.f32.mxu0 0.0
    %v2747 = vand.u32 %v1683, 4294901760
    %v2748 = vsub.f32 %v1683, %v2747
    %v2749 = vand.u32 %v2748, 4294901760
    %2750 = vmatmul.mubr.f32.gmra.mxu0 %v2749
    %v2751 = vpop.f32.mrf.mxu0
    %v2752 = vadd.f32 %v2552, %v2751
    %v2753 = vpop.f32.mrf.mxu0
    %2754 = vmatprep.mubr.f32.mxu0 0.0
    %v2755 = vand.u32 %v1685, 4294901760
    %v2756 = vsub.f32 %v1685, %v2755
    %v2757 = vand.u32 %v2756, 4294901760
    %2758 = vmatmul.mubr.f32.gmra.mxu0 %v2757
    %v2759 = vpop.f32.mrf.mxu0
    %v2760 = vadd.f32 %v2559, %v2759
    %v2761 = vpop.f32.mrf.mxu0
    %2762 = vmatprep.mubr.f32.mxu0 0.0
    %v2763 = vand.u32 %v1687, 4294901760
    %v2764 = vsub.f32 %v1687, %v2763
    %v2765 = vand.u32 %v2764, 4294901760
    %2766 = vmatmul.mubr.f32.gmra.mxu0 %v2765
    %v2767 = vpop.f32.mrf.mxu0
    %v2768 = vadd.f32 %v2566, %v2767
    %v2769 = vpop.f32.mrf.mxu0
    %2770 = vmatprep.mubr.f32.mxu0 0.0
    %v2771 = vand.u32 %v1689, 4294901760
    %v2772 = vsub.f32 %v1689, %v2771
    %v2773 = vand.u32 %v2772, 4294901760
    %2774 = vmatmul.mubr.f32.gmra.mxu0 %v2773
    %v2775 = vpop.f32.mrf.mxu0
    %v2776 = vadd.f32 %v2573, %v2775
    %v2777 = vpop.f32.mrf.mxu0
    %2778 = vmatprep.mubr.f32.mxu0 0.0
    %v2779 = vand.u32 %v1691, 4294901760
    %v2780 = vsub.f32 %v1691, %v2779
    %v2781 = vand.u32 %v2780, 4294901760
    %2782 = vmatmul.mubr.f32.gmra.mxu0 %v2781
    %v2783 = vpop.f32.mrf.mxu0
    %v2784 = vadd.f32 %v2580, %v2783
    %v2785 = vpop.f32.mrf.mxu0
    %2786 = vmatprep.mubr.f32.mxu0 0.0
    %v2787 = vand.u32 %v1693, 4294901760
    %v2788 = vsub.f32 %v1693, %v2787
    %v2789 = vand.u32 %v2788, 4294901760
    %2790 = vmatmul.mubr.f32.gmra.mxu0 %v2789
    %v2791 = vpop.f32.mrf.mxu0
    %v2792 = vadd.f32 %v2587, %v2791
    %v2793 = vpop.f32.mrf.mxu0
    %2794 = vmatprep.mubr.f32.mxu0 0.0
    %v2795 = vand.u32 %v1695, 4294901760
    %v2796 = vsub.f32 %v1695, %v2795
    %v2797 = vand.u32 %v2796, 4294901760
    %2798 = vmatmul.mubr.f32.gmra.mxu0 %v2797
    %v2799 = vpop.f32.mrf.mxu0
    %v2800 = vadd.f32 %v2594, %v2799
    %v2801 = vpop.f32.mrf.mxu0
    %2802 = vmatprep.mubr.f32.mxu0 0.0
    %v2803 = vand.u32 %v1697, 4294901760
    %v2804 = vsub.f32 %v1697, %v2803
    %v2805 = vand.u32 %v2804, 4294901760
    %2806 = vmatmul.mubr.f32.gmra.mxu0 %v2805
    %v2807 = vpop.f32.mrf.mxu0
    %v2808 = vadd.f32 %v2601, %v2807
    %v2809 = vpop.f32.mrf.mxu0
    %2810 = vmatprep.mubr.f32.mxu0 0.0
    %v2811 = vand.u32 %v1699, 4294901760
    %v2812 = vsub.f32 %v1699, %v2811
    %v2813 = vand.u32 %v2812, 4294901760
    %2814 = vmatmul.mubr.f32.gmra.mxu0 %v2813
    %v2815 = vpop.f32.mrf.mxu0
    %v2816 = vadd.f32 %v2608, %v2815
    %v2817 = vpop.f32.mrf.mxu0
    %2818 = vmatprep.mubr.f32.mxu0 0.0
    %v2819 = vand.u32 %v1701, 4294901760
    %v2820 = vsub.f32 %v1701, %v2819
    %v2821 = vand.u32 %v2820, 4294901760
    %2822 = vmatmul.mubr.f32.gmra.mxu0 %v2821
    %v2823 = vpop.f32.mrf.mxu0
    %v2824 = vadd.f32 %v2615, %v2823
    %v2825 = vpop.f32.mrf.mxu0
    %2826 = vdwg.mxu0
    %2827 = vmatprep.subr.mxu0 0.0
    %v2828 = vand.u32 %v1926, 4294901760
    %v2829 = vsub.f32 %v1926, %v2828
    %v2830 = vand.u32 %v2829, 4294901760
    %2831 = vmatpush1.msra.mxu0 %v2830
    %2832 = vmatprep.subr.mxu0 0.0
    %v2833 = vand.u32 %v1925, 4294901760
    %v2834 = vsub.f32 %v1925, %v2833
    %v2835 = vand.u32 %v2834, 4294901760
    %2836 = vmatpush1.msra.mxu0 %v2835
    %2837 = vmatprep.subr.mxu0 0.0
    %v2838 = vand.u32 %v1924, 4294901760
    %v2839 = vsub.f32 %v1924, %v2838
    %v2840 = vand.u32 %v2839, 4294901760
    %2841 = vmatpush1.msra.mxu0 %v2840
    %2842 = vmatprep.subr.mxu0 0.0
    %v2843 = vand.u32 %v1923, 4294901760
    %v2844 = vsub.f32 %v1923, %v2843
    %v2845 = vand.u32 %v2844, 4294901760
    %2846 = vmatpush1.msra.mxu0 %v2845
    %2847 = vmatprep.subr.mxu0 0.0
    %v2848 = vand.u32 %v1922, 4294901760
    %v2849 = vsub.f32 %v1922, %v2848
    %v2850 = vand.u32 %v2849, 4294901760
    %2851 = vmatpush1.msra.mxu0 %v2850
    %2852 = vmatprep.subr.mxu0 0.0
    %v2853 = vand.u32 %v1921, 4294901760
    %v2854 = vsub.f32 %v1921, %v2853
    %v2855 = vand.u32 %v2854, 4294901760
    %2856 = vmatpush1.msra.mxu0 %v2855
    %2857 = vmatprep.subr.mxu0 0.0
    %v2858 = vand.u32 %v1920, 4294901760
    %v2859 = vsub.f32 %v1920, %v2858
    %v2860 = vand.u32 %v2859, 4294901760
    %2861 = vmatpush1.msra.mxu0 %v2860
    %2862 = vmatprep.subr.mxu0 0.0
    %v2863 = vand.u32 %v1919, 4294901760
    %v2864 = vsub.f32 %v1919, %v2863
    %v2865 = vand.u32 %v2864, 4294901760
    %2866 = vmatpush1.msra.mxu0 %v2865
    %2867 = vmatprep.subr.mxu0 0.0
    %v2868 = vand.u32 %v1918, 4294901760
    %v2869 = vsub.f32 %v1918, %v2868
    %v2870 = vand.u32 %v2869, 4294901760
    %2871 = vmatpush1.msra.mxu0 %v2870
    %2872 = vmatprep.subr.mxu0 0.0
    %v2873 = vand.u32 %v1917, 4294901760
    %v2874 = vsub.f32 %v1917, %v2873
    %v2875 = vand.u32 %v2874, 4294901760
    %2876 = vmatpush1.msra.mxu0 %v2875
    %2877 = vmatprep.subr.mxu0 0.0
    %v2878 = vand.u32 %v1916, 4294901760
    %v2879 = vsub.f32 %v1916, %v2878
    %v2880 = vand.u32 %v2879, 4294901760
    %2881 = vmatpush1.msra.mxu0 %v2880
    %2882 = vmatprep.subr.mxu0 0.0
    %v2883 = vand.u32 %v1915, 4294901760
    %v2884 = vsub.f32 %v1915, %v2883
    %v2885 = vand.u32 %v2884, 4294901760
    %2886 = vmatpush1.msra.mxu0 %v2885
    %2887 = vmatprep.subr.mxu0 0.0
    %v2888 = vand.u32 %v1914, 4294901760
    %v2889 = vsub.f32 %v1914, %v2888
    %v2890 = vand.u32 %v2889, 4294901760
    %2891 = vmatpush1.msra.mxu0 %v2890
    %2892 = vmatprep.subr.mxu0 0.0
    %v2893 = vand.u32 %v1913, 4294901760
    %v2894 = vsub.f32 %v1913, %v2893
    %v2895 = vand.u32 %v2894, 4294901760
    %2896 = vmatpush1.msra.mxu0 %v2895
    %2897 = vmatprep.subr.mxu0 0.0
    %v2898 = vand.u32 %v1912, 4294901760
    %v2899 = vsub.f32 %v1912, %v2898
    %v2900 = vand.u32 %v2899, 4294901760
    %2901 = vmatpush1.msra.mxu0 %v2900
    %2902 = vmatprep.subr.mxu0 0.0
    %v2903 = vand.u32 %v1911, 4294901760
    %v2904 = vsub.f32 %v1911, %v2903
    %v2905 = vand.u32 %v2904, 4294901760
    %2906 = vmatpush1.msra.mxu0 %v2905
    %2907 = vmatprep.subr.mxu0 0.0
    %2908 = vmatpush2.msra.mxu0 0.0
    %2909 = vmatprep.subr.mxu0 0.0
    %2910 = vmatpush2.msra.mxu0 0.0
    %2911 = vmatprep.subr.mxu0 0.0
    %2912 = vmatpush2.msra.mxu0 0.0
    %2913 = vmatprep.subr.mxu0 0.0
    %2914 = vmatpush2.msra.mxu0 0.0
    %2915 = vmatprep.subr.mxu0 0.0
    %2916 = vmatpush2.msra.mxu0 0.0
    %2917 = vmatprep.subr.mxu0 0.0
    %2918 = vmatpush2.msra.mxu0 0.0
    %2919 = vmatprep.subr.mxu0 0.0
    %2920 = vmatpush2.msra.mxu0 0.0
    %2921 = vmatprep.subr.mxu0 0.0
    %2922 = vmatpush2.msra.mxu0 0.0
    %2923 = vmatprep.subr.mxu0 0.0
    %2924 = vmatpush2.msra.mxu0 0.0
    %2925 = vmatprep.subr.mxu0 0.0
    %2926 = vmatpush2.msra.mxu0 0.0
    %2927 = vmatprep.subr.mxu0 0.0
    %2928 = vmatpush2.msra.mxu0 0.0
    %2929 = vmatprep.subr.mxu0 0.0
    %2930 = vmatpush2.msra.mxu0 0.0
    %2931 = vmatprep.subr.mxu0 0.0
    %2932 = vmatpush2.msra.mxu0 0.0
    %2933 = vmatprep.subr.mxu0 0.0
    %2934 = vmatpush2.msra.mxu0 0.0
    %2935 = vmatprep.subr.mxu0 0.0
    %2936 = vmatpush2.msra.mxu0 0.0
    %2937 = vmatprep.subr.mxu0 0.0
    %2938 = vmatpush2.msra.mxu0 0.0
    %2939 = vmatprep.mubr.f32.mxu0 0.0
    %v2940 = vand.u32 %v1671, 4294901760
    %2941 = vmatmul.mubr.f32.gmra.mxu0 %v2940
    %v2942 = vpop.f32.mrf.mxu0
    %v2943 = vadd.f32 %v2704, %v2942
    %v2944 = vpop.f32.mrf.mxu0
    %2945 = vmatprep.mubr.f32.mxu0 0.0
    %v2946 = vand.u32 %v1673, 4294901760
    %2947 = vmatmul.mubr.f32.gmra.mxu0 %v2946
    %v2948 = vpop.f32.mrf.mxu0
    %v2949 = vadd.f32 %v2712, %v2948
    %v2950 = vpop.f32.mrf.mxu0
    %2951 = vmatprep.mubr.f32.mxu0 0.0
    %v2952 = vand.u32 %v1675, 4294901760
    %2953 = vmatmul.mubr.f32.gmra.mxu0 %v2952
    %v2954 = vpop.f32.mrf.mxu0
    %v2955 = vadd.f32 %v2720, %v2954
    %v2956 = vpop.f32.mrf.mxu0
    %2957 = vmatprep.mubr.f32.mxu0 0.0
    %v2958 = vand.u32 %v1677, 4294901760
    %2959 = vmatmul.mubr.f32.gmra.mxu0 %v2958
    %v2960 = vpop.f32.mrf.mxu0
    %v2961 = vadd.f32 %v2728, %v2960
    %v2962 = vpop.f32.mrf.mxu0
    %2963 = vmatprep.mubr.f32.mxu0 0.0
    %v2964 = vand.u32 %v1679, 4294901760
    %2965 = vmatmul.mubr.f32.gmra.mxu0 %v2964
    %v2966 = vpop.f32.mrf.mxu0
    %v2967 = vadd.f32 %v2736, %v2966
    %v2968 = vpop.f32.mrf.mxu0
    %2969 = vmatprep.mubr.f32.mxu0 0.0
    %v2970 = vand.u32 %v1681, 4294901760
    %2971 = vmatmul.mubr.f32.gmra.mxu0 %v2970
    %v2972 = vpop.f32.mrf.mxu0
    %v2973 = vadd.f32 %v2744, %v2972
    %v2974 = vpop.f32.mrf.mxu0
    %2975 = vmatprep.mubr.f32.mxu0 0.0
    %v2976 = vand.u32 %v1683, 4294901760
    %2977 = vmatmul.mubr.f32.gmra.mxu0 %v2976
    %v2978 = vpop.f32.mrf.mxu0
    %v2979 = vadd.f32 %v2752, %v2978
    %v2980 = vpop.f32.mrf.mxu0
    %2981 = vmatprep.mubr.f32.mxu0 0.0
    %v2982 = vand.u32 %v1685, 4294901760
    %2983 = vmatmul.mubr.f32.gmra.mxu0 %v2982
    %v2984 = vpop.f32.mrf.mxu0
    %v2985 = vadd.f32 %v2760, %v2984
    %v2986 = vpop.f32.mrf.mxu0
    %2987 = vmatprep.mubr.f32.mxu0 0.0
    %v2988 = vand.u32 %v1687, 4294901760
    %2989 = vmatmul.mubr.f32.gmra.mxu0 %v2988
    %v2990 = vpop.f32.mrf.mxu0
    %v2991 = vadd.f32 %v2768, %v2990
    %v2992 = vpop.f32.mrf.mxu0
    %2993 = vmatprep.mubr.f32.mxu0 0.0
    %v2994 = vand.u32 %v1689, 4294901760
    %2995 = vmatmul.mubr.f32.gmra.mxu0 %v2994
    %v2996 = vpop.f32.mrf.mxu0
    %v2997 = vadd.f32 %v2776, %v2996
    %v2998 = vpop.f32.mrf.mxu0
    %2999 = vmatprep.mubr.f32.mxu0 0.0
    %v3000 = vand.u32 %v1691, 4294901760
    %3001 = vmatmul.mubr.f32.gmra.mxu0 %v3000
    %v3002 = vpop.f32.mrf.mxu0
    %v3003 = vadd.f32 %v2784, %v3002
    %v3004 = vpop.f32.mrf.mxu0
    %3005 = vmatprep.mubr.f32.mxu0 0.0
    %v3006 = vand.u32 %v1693, 4294901760
    %3007 = vmatmul.mubr.f32.gmra.mxu0 %v3006
    %v3008 = vpop.f32.mrf.mxu0
    %v3009 = vadd.f32 %v2792, %v3008
    %v3010 = vpop.f32.mrf.mxu0
    %3011 = vmatprep.mubr.f32.mxu0 0.0
    %v3012 = vand.u32 %v1695, 4294901760
    %3013 = vmatmul.mubr.f32.gmra.mxu0 %v3012
    %v3014 = vpop.f32.mrf.mxu0
    %v3015 = vadd.f32 %v2800, %v3014
    %v3016 = vpop.f32.mrf.mxu0
    %3017 = vmatprep.mubr.f32.mxu0 0.0
    %v3018 = vand.u32 %v1697, 4294901760
    %3019 = vmatmul.mubr.f32.gmra.mxu0 %v3018
    %v3020 = vpop.f32.mrf.mxu0
    %v3021 = vadd.f32 %v2808, %v3020
    %v3022 = vpop.f32.mrf.mxu0
    %3023 = vmatprep.mubr.f32.mxu0 0.0
    %v3024 = vand.u32 %v1699, 4294901760
    %3025 = vmatmul.mubr.f32.gmra.mxu0 %v3024
    %v3026 = vpop.f32.mrf.mxu0
    %v3027 = vadd.f32 %v2816, %v3026
    %v3028 = vpop.f32.mrf.mxu0
    %3029 = vmatprep.mubr.f32.mxu0 0.0
    %v3030 = vand.u32 %v1701, 4294901760
    %3031 = vmatmul.mubr.f32.gmra.mxu0 %v3030
    %v3032 = vpop.f32.mrf.mxu0
    %v3033 = vadd.f32 %v2824, %v3032
    %v3034 = vpop.f32.mrf.mxu0
    %3035 = vdwg.mxu0
    %3036 = vmatprep.subr.mxu0 0.0
    %v3037 = vand.u32 %v1926, 4294901760
    %3038 = vmatpush1.msra.mxu0 %v3037
    %3039 = vmatprep.subr.mxu0 0.0
    %v3040 = vand.u32 %v1925, 4294901760
    %3041 = vmatpush1.msra.mxu0 %v3040
    %3042 = vmatprep.subr.mxu0 0.0
    %v3043 = vand.u32 %v1924, 4294901760
    %3044 = vmatpush1.msra.mxu0 %v3043
    %3045 = vmatprep.subr.mxu0 0.0
    %v3046 = vand.u32 %v1923, 4294901760
    %3047 = vmatpush1.msra.mxu0 %v3046
    %3048 = vmatprep.subr.mxu0 0.0
    %v3049 = vand.u32 %v1922, 4294901760
    %3050 = vmatpush1.msra.mxu0 %v3049
    %3051 = vmatprep.subr.mxu0 0.0
    %v3052 = vand.u32 %v1921, 4294901760
    %3053 = vmatpush1.msra.mxu0 %v3052
    %3054 = vmatprep.subr.mxu0 0.0
    %v3055 = vand.u32 %v1920, 4294901760
    %3056 = vmatpush1.msra.mxu0 %v3055
    %3057 = vmatprep.subr.mxu0 0.0
    %v3058 = vand.u32 %v1919, 4294901760
    %3059 = vmatpush1.msra.mxu0 %v3058
    %3060 = vmatprep.subr.mxu0 0.0
    %v3061 = vand.u32 %v1918, 4294901760
    %3062 = vmatpush1.msra.mxu0 %v3061
    %3063 = vmatprep.subr.mxu0 0.0
    %v3064 = vand.u32 %v1917, 4294901760
    %3065 = vmatpush1.msra.mxu0 %v3064
    %3066 = vmatprep.subr.mxu0 0.0
    %v3067 = vand.u32 %v1916, 4294901760
    %3068 = vmatpush1.msra.mxu0 %v3067
    %3069 = vmatprep.subr.mxu0 0.0
    %v3070 = vand.u32 %v1915, 4294901760
    %3071 = vmatpush1.msra.mxu0 %v3070
    %3072 = vmatprep.subr.mxu0 0.0
    %v3073 = vand.u32 %v1914, 4294901760
    %3074 = vmatpush1.msra.mxu0 %v3073
    %3075 = vmatprep.subr.mxu0 0.0
    %v3076 = vand.u32 %v1913, 4294901760
    %3077 = vmatpush1.msra.mxu0 %v3076
    %3078 = vmatprep.subr.mxu0 0.0
    %v3079 = vand.u32 %v1912, 4294901760
    %3080 = vmatpush1.msra.mxu0 %v3079
    %3081 = vmatprep.subr.mxu0 0.0
    %v3082 = vand.u32 %v1911, 4294901760
    %3083 = vmatpush1.msra.mxu0 %v3082
    %3084 = vmatprep.subr.mxu0 0.0
    %3085 = vmatpush2.msra.mxu0 0.0
    %3086 = vmatprep.subr.mxu0 0.0
    %3087 = vmatpush2.msra.mxu0 0.0
    %3088 = vmatprep.subr.mxu0 0.0
    %3089 = vmatpush2.msra.mxu0 0.0
    %3090 = vmatprep.subr.mxu0 0.0
    %3091 = vmatpush2.msra.mxu0 0.0
    %3092 = vmatprep.subr.mxu0 0.0
    %3093 = vmatpush2.msra.mxu0 0.0
    %3094 = vmatprep.subr.mxu0 0.0
    %3095 = vmatpush2.msra.mxu0 0.0
    %3096 = vmatprep.subr.mxu0 0.0
    %3097 = vmatpush2.msra.mxu0 0.0
    %3098 = vmatprep.subr.mxu0 0.0
    %3099 = vmatpush2.msra.mxu0 0.0
    %3100 = vmatprep.subr.mxu0 0.0
    %3101 = vmatpush2.msra.mxu0 0.0
    %3102 = vmatprep.subr.mxu0 0.0
    %3103 = vmatpush2.msra.mxu0 0.0
    %3104 = vmatprep.subr.mxu0 0.0
    %3105 = vmatpush2.msra.mxu0 0.0
    %3106 = vmatprep.subr.mxu0 0.0
    %3107 = vmatpush2.msra.mxu0 0.0
    %3108 = vmatprep.subr.mxu0 0.0
    %3109 = vmatpush2.msra.mxu0 0.0
    %3110 = vmatprep.subr.mxu0 0.0
    %3111 = vmatpush2.msra.mxu0 0.0
    %3112 = vmatprep.subr.mxu0 0.0
    %3113 = vmatpush2.msra.mxu0 0.0
    %3114 = vmatprep.subr.mxu0 0.0
    %3115 = vmatpush2.msra.mxu0 0.0
    %3116 = vmatprep.mubr.f32.mxu0 0.0
    %v3117 = vand.u32 %v1671, 4294901760
    %3118 = vmatmul.mubr.f32.gmra.mxu0 %v3117
    %v3119 = vpop.f32.mrf.mxu0
    %v3120 = vadd.f32 %v2943, %v3119
    %v3121 = vpop.f32.mrf.mxu0
    %3122 = vmatprep.mubr.f32.mxu0 0.0
    %v3123 = vand.u32 %v1673, 4294901760
    %3124 = vmatmul.mubr.f32.gmra.mxu0 %v3123
    %v3125 = vpop.f32.mrf.mxu0
    %v3126 = vadd.f32 %v2949, %v3125
    %v3127 = vpop.f32.mrf.mxu0
    %3128 = vmatprep.mubr.f32.mxu0 0.0
    %v3129 = vand.u32 %v1675, 4294901760
    %3130 = vmatmul.mubr.f32.gmra.mxu0 %v3129
    %v3131 = vpop.f32.mrf.mxu0
    %v3132 = vadd.f32 %v2955, %v3131
    %v3133 = vpop.f32.mrf.mxu0
    %3134 = vmatprep.mubr.f32.mxu0 0.0
    %v3135 = vand.u32 %v1677, 4294901760
    %3136 = vmatmul.mubr.f32.gmra.mxu0 %v3135
    %v3137 = vpop.f32.mrf.mxu0
    %v3138 = vadd.f32 %v2961, %v3137
    %v3139 = vpop.f32.mrf.mxu0
    %3140 = vmatprep.mubr.f32.mxu0 0.0
    %v3141 = vand.u32 %v1679, 4294901760
    %3142 = vmatmul.mubr.f32.gmra.mxu0 %v3141
    %v3143 = vpop.f32.mrf.mxu0
    %v3144 = vadd.f32 %v2967, %v3143
    %v3145 = vpop.f32.mrf.mxu0
    %3146 = vmatprep.mubr.f32.mxu0 0.0
    %v3147 = vand.u32 %v1681, 4294901760
    %3148 = vmatmul.mubr.f32.gmra.mxu0 %v3147
    %v3149 = vpop.f32.mrf.mxu0
    %v3150 = vadd.f32 %v2973, %v3149
    %v3151 = vpop.f32.mrf.mxu0
    %3152 = vmatprep.mubr.f32.mxu0 0.0
    %v3153 = vand.u32 %v1683, 4294901760
    %3154 = vmatmul.mubr.f32.gmra.mxu0 %v3153
    %v3155 = vpop.f32.mrf.mxu0
    %v3156 = vadd.f32 %v2979, %v3155
    %v3157 = vpop.f32.mrf.mxu0
    %3158 = vmatprep.mubr.f32.mxu0 0.0
    %v3159 = vand.u32 %v1685, 4294901760
    %3160 = vmatmul.mubr.f32.gmra.mxu0 %v3159
    %v3161 = vpop.f32.mrf.mxu0
    %v3162 = vadd.f32 %v2985, %v3161
    %v3163 = vpop.f32.mrf.mxu0
    %3164 = vmatprep.mubr.f32.mxu0 0.0
    %v3165 = vand.u32 %v1687, 4294901760
    %3166 = vmatmul.mubr.f32.gmra.mxu0 %v3165
    %v3167 = vpop.f32.mrf.mxu0
    %v3168 = vadd.f32 %v2991, %v3167
    %v3169 = vpop.f32.mrf.mxu0
    %3170 = vmatprep.mubr.f32.mxu0 0.0
    %v3171 = vand.u32 %v1689, 4294901760
    %3172 = vmatmul.mubr.f32.gmra.mxu0 %v3171
    %v3173 = vpop.f32.mrf.mxu0
    %v3174 = vadd.f32 %v2997, %v3173
    %v3175 = vpop.f32.mrf.mxu0
    %3176 = vmatprep.mubr.f32.mxu0 0.0
    %v3177 = vand.u32 %v1691, 4294901760
    %3178 = vmatmul.mubr.f32.gmra.mxu0 %v3177
    %v3179 = vpop.f32.mrf.mxu0
    %v3180 = vadd.f32 %v3003, %v3179
    %v3181 = vpop.f32.mrf.mxu0
    %3182 = vmatprep.mubr.f32.mxu0 0.0
    %v3183 = vand.u32 %v1693, 4294901760
    %3184 = vmatmul.mubr.f32.gmra.mxu0 %v3183
    %v3185 = vpop.f32.mrf.mxu0
    %v3186 = vadd.f32 %v3009, %v3185
    %v3187 = vpop.f32.mrf.mxu0
    %3188 = vmatprep.mubr.f32.mxu0 0.0
    %v3189 = vand.u32 %v1695, 4294901760
    %3190 = vmatmul.mubr.f32.gmra.mxu0 %v3189
    %v3191 = vpop.f32.mrf.mxu0
    %v3192 = vadd.f32 %v3015, %v3191
    %v3193 = vpop.f32.mrf.mxu0
    %3194 = vmatprep.mubr.f32.mxu0 0.0
    %v3195 = vand.u32 %v1697, 4294901760
    %3196 = vmatmul.mubr.f32.gmra.mxu0 %v3195
    %v3197 = vpop.f32.mrf.mxu0
    %v3198 = vadd.f32 %v3021, %v3197
    %v3199 = vpop.f32.mrf.mxu0
    %3200 = vmatprep.mubr.f32.mxu0 0.0
    %v3201 = vand.u32 %v1699, 4294901760
    %3202 = vmatmul.mubr.f32.gmra.mxu0 %v3201
    %v3203 = vpop.f32.mrf.mxu0
    %v3204 = vadd.f32 %v3027, %v3203
    %v3205 = vpop.f32.mrf.mxu0
    %3206 = vmatprep.mubr.f32.mxu0 0.0
    %v3207 = vand.u32 %v1701, 4294901760
    %3208 = vmatmul.mubr.f32.gmra.mxu0 %v3207
    %v3209 = vpop.f32.mrf.mxu0
    %v3210 = vadd.f32 %v3033, %v3209
    %v3211 = vpop.f32.mrf.mxu0
    %3212 = vdwg.mxu0
    %v3213 = vadd.f32 %v1895, %v3120
    %v3214 = vadd.f32 %v1896, %v3126
    %v3215 = vadd.f32 %v1897, %v3132
    %v3216 = vadd.f32 %v1898, %v3138
    %v3217 = vadd.f32 %v1899, %v3144
    %v3218 = vadd.f32 %v1900, %v3150
    %v3219 = vadd.f32 %v1901, %v3156
    %v3220 = vadd.f32 %v1902, %v3162
    %v3221 = vadd.f32 %v1903, %v3168
    %v3222 = vadd.f32 %v1904, %v3174
    %v3223 = vadd.f32 %v1905, %v3180
    %v3224 = vadd.f32 %v1906, %v3186
    %v3225 = vadd.f32 %v1907, %v3192
    %v3226 = vadd.f32 %v1908, %v3198
    %v3227 = vadd.f32 %v1909, %v3204
    %v3228 = vadd.f32 %v1910, %v3210
    %3229 = vst [vmem:[#allocation4] sm:$0xff] %v3213
    %3230 = vst [vmem:[#allocation4 + $0x8] sm:$0xff] %v3214
    %3231 = vst [vmem:[#allocation4 + $0x10] sm:$0xff] %v3215
    %3232 = vst [vmem:[#allocation4 + $0x18] sm:$0xff] %v3216
    %3233 = vst [vmem:[#allocation4 + $0x20] sm:$0xff] %v3217
    %3234 = vst [vmem:[#allocation4 + $0x28] sm:$0xff] %v3218
    %3235 = vst [vmem:[#allocation4 + $0x30] sm:$0xff] %v3219
    %3236 = vst [vmem:[#allocation4 + $0x38] sm:$0xff] %v3220
    %3237 = vst [vmem:[#allocation4 + $0x40] sm:$0xff] %v3221
    %3238 = vst [vmem:[#allocation4 + $0x48] sm:$0xff] %v3222
    %3239 = vst [vmem:[#allocation4 + $0x50] sm:$0xff] %v3223
    %3240 = vst [vmem:[#allocation4 + $0x58] sm:$0xff] %v3224
    %3241 = vst [vmem:[#allocation4 + $0x60] sm:$0xff] %v3225
    %3242 = vst [vmem:[#allocation4 + $0x68] sm:$0xff] %v3226
    %3243 = vst [vmem:[#allocation4 + $0x70] sm:$0xff] %v3227
    %3244 = vst [vmem:[#allocation4 + $0x78] sm:$0xff] %v3228
    %3245 = vst.msk [vmem:[#allocation2] sm:$0xff] %vm1782, %v1510
    %3246 = vst.msk [vmem:[#allocation2 + $0x8] sm:$0xff] %vm1782, %v1511
    %3247 = vst.msk [vmem:[#allocation2 + $0x10] sm:$0xff] %vm1782, %v1512
    %3248 = vst.msk [vmem:[#allocation2 + $0x18] sm:$0xff] %vm1782, %v1513
    %3249 = vst.msk [vmem:[#allocation2 + $0x20] sm:$0xff] %vm1782, %v1514
    %3250 = vst.msk [vmem:[#allocation2 + $0x28] sm:$0xff] %vm1782, %v1515
    %3251 = vst.msk [vmem:[#allocation2 + $0x30] sm:$0xff] %vm1782, %v1516
    %3252 = vst.msk [vmem:[#allocation2 + $0x38] sm:$0xff] %vm1782, %v1517
    %3253 = vst.msk [vmem:[#allocation2 + $0x40] sm:$0xff] %vm1782, %v1518
    %3254 = vst.msk [vmem:[#allocation2 + $0x48] sm:$0xff] %vm1782, %v1519
    %3255 = vst.msk [vmem:[#allocation2 + $0x50] sm:$0xff] %vm1782, %v1520
    %3256 = vst.msk [vmem:[#allocation2 + $0x58] sm:$0xff] %vm1782, %v1521
    %3257 = vst.msk [vmem:[#allocation2 + $0x60] sm:$0xff] %vm1782, %v1522
    %3258 = vst.msk [vmem:[#allocation2 + $0x68] sm:$0xff] %vm1782, %v1523
    %3259 = vst.msk [vmem:[#allocation2 + $0x70] sm:$0xff] %vm1782, %v1524
    %3260 = vst.msk [vmem:[#allocation2 + $0x78] sm:$0xff] %vm1782, %v1525
    // Predicated region
    $region42: #{tpu_custom_call.1} parent=1 // pred_check
      %p3261 = pneg %p45
    $region43: #{tpu_custom_call.1} parent=1 // pred_check_branch
      %3263 = sbr.rel (%p3261) target = $region45
    $region44: #{tpu_custom_call.1} parent=1 // pred_region
      %v3264 = vld [vmem:[#allocation3] sm:$0xff]
      %v3265 = vld [vmem:[#allocation3 + $0x8] sm:$0xff]
      %v3266 = vld [vmem:[#allocation3 + $0x10] sm:$0xff]
      %v3267 = vld [vmem:[#allocation3 + $0x18] sm:$0xff]
      %v3268 = vld [vmem:[#allocation3 + $0x20] sm:$0xff]
      %v3269 = vld [vmem:[#allocation3 + $0x28] sm:$0xff]
      %v3270 = vld [vmem:[#allocation3 + $0x30] sm:$0xff]
      %v3271 = vld [vmem:[#allocation3 + $0x38] sm:$0xff]
      %v3272 = vld [vmem:[#allocation3 + $0x40] sm:$0xff]
      %v3273 = vld [vmem:[#allocation3 + $0x48] sm:$0xff]
      %v3274 = vld [vmem:[#allocation3 + $0x50] sm:$0xff]
      %v3275 = vld [vmem:[#allocation3 + $0x58] sm:$0xff]
      %v3276 = vld [vmem:[#allocation3 + $0x60] sm:$0xff]
      %v3277 = vld [vmem:[#allocation3 + $0x68] sm:$0xff]
      %v3278 = vld [vmem:[#allocation3 + $0x70] sm:$0xff]
      %v3279 = vld [vmem:[#allocation3 + $0x78] sm:$0xff]
      %v3280 = vrcp.pop %v3264
      %v3281 = vrcp.pop %v3265
      %v3282 = vrcp.pop %v3266
      %v3283 = vrcp.pop %v3267
      %v3284 = vrcp.pop %v3268
      %v3285 = vrcp.pop %v3269
      %v3286 = vrcp.pop %v3270
      %v3287 = vrcp.pop %v3271
      %v3288 = vrcp.pop %v3272
      %v3289 = vrcp.pop %v3273
      %v3290 = vrcp.pop %v3274
      %v3291 = vrcp.pop %v3275
      %v3292 = vrcp.pop %v3276
      %v3293 = vrcp.pop %v3277
      %v3294 = vrcp.pop %v3278
      %v3295 = vrcp.pop %v3279
      %v3296 = vld [vmem:[#allocation4] sm:$0xff]
      %v3297 = vld [vmem:[#allocation4 + $0x8] sm:$0xff]
      %v3298 = vld [vmem:[#allocation4 + $0x10] sm:$0xff]
      %v3299 = vld [vmem:[#allocation4 + $0x18] sm:$0xff]
      %v3300 = vld [vmem:[#allocation4 + $0x20] sm:$0xff]
      %v3301 = vld [vmem:[#allocation4 + $0x28] sm:$0xff]
      %v3302 = vld [vmem:[#allocation4 + $0x30] sm:$0xff]
      %v3303 = vld [vmem:[#allocation4 + $0x38] sm:$0xff]
      %v3304 = vld [vmem:[#allocation4 + $0x40] sm:$0xff]
      %v3305 = vld [vmem:[#allocation4 + $0x48] sm:$0xff]
      %v3306 = vld [vmem:[#allocation4 + $0x50] sm:$0xff]
      %v3307 = vld [vmem:[#allocation4 + $0x58] sm:$0xff]
      %v3308 = vld [vmem:[#allocation4 + $0x60] sm:$0xff]
      %v3309 = vld [vmem:[#allocation4 + $0x68] sm:$0xff]
      %v3310 = vld [vmem:[#allocation4 + $0x70] sm:$0xff]
      %v3311 = vld [vmem:[#allocation4 + $0x78] sm:$0xff]
      %3313 = vset.pattern.permute.xlu0 0
      %3314 = vperm.xlu0 %3313, %v3280
      %v3315 = vpop.permute.xlu0 %3314
      %3318 = vset.pattern.permute.xlu0 0
      %3319 = vperm.xlu0 %3318, %v3281
      %v3320 = vpop.permute.xlu0 %3319
      %3323 = vset.pattern.permute.xlu0 0
      %3324 = vperm.xlu0 %3323, %v3282
      %v3325 = vpop.permute.xlu0 %3324
      %3328 = vset.pattern.permute.xlu0 0
      %3329 = vperm.xlu0 %3328, %v3283
      %v3330 = vpop.permute.xlu0 %3329
      %3333 = vset.pattern.permute.xlu0 0
      %3334 = vperm.xlu0 %3333, %v3284
      %v3335 = vpop.permute.xlu0 %3334
      %3338 = vset.pattern.permute.xlu0 0
      %3339 = vperm.xlu0 %3338, %v3285
      %v3340 = vpop.permute.xlu0 %3339
      %3343 = vset.pattern.permute.xlu0 0
      %3344 = vperm.xlu0 %3343, %v3286
      %v3345 = vpop.permute.xlu0 %3344
      %3348 = vset.pattern.permute.xlu0 0
      %3349 = vperm.xlu0 %3348, %v3287
      %v3350 = vpop.permute.xlu0 %3349
      %3353 = vset.pattern.permute.xlu0 0
      %3354 = vperm.xlu0 %3353, %v3288
      %v3355 = vpop.permute.xlu0 %3354
      %3358 = vset.pattern.permute.xlu0 0
      %3359 = vperm.xlu0 %3358, %v3289
      %v3360 = vpop.permute.xlu0 %3359
      %3363 = vset.pattern.permute.xlu0 0
      %3364 = vperm.xlu0 %3363, %v3290
      %v3365 = vpop.permute.xlu0 %3364
      %3368 = vset.pattern.permute.xlu0 0
      %3369 = vperm.xlu0 %3368, %v3291
      %v3370 = vpop.permute.xlu0 %3369
      %3373 = vset.pattern.permute.xlu0 0
      %3374 = vperm.xlu0 %3373, %v3292
      %v3375 = vpop.permute.xlu0 %3374
      %3378 = vset.pattern.permute.xlu0 0
      %3379 = vperm.xlu0 %3378, %v3293
      %v3380 = vpop.permute.xlu0 %3379
      %3383 = vset.pattern.permute.xlu0 0
      %3384 = vperm.xlu0 %3383, %v3294
      %v3385 = vpop.permute.xlu0 %3384
      %3388 = vset.pattern.permute.xlu0 0
      %3389 = vperm.xlu0 %3388, %v3295
      %v3390 = vpop.permute.xlu0 %3389
      %v3392 = vmul.f32 %v3296, %v3315
      %v3393 = vmul.f32 %v3297, %v3320
      %v3394 = vmul.f32 %v3298, %v3325
      %v3395 = vmul.f32 %v3299, %v3330
      %v3396 = vmul.f32 %v3300, %v3335
      %v3397 = vmul.f32 %v3301, %v3340
      %v3398 = vmul.f32 %v3302, %v3345
      %v3399 = vmul.f32 %v3303, %v3350
      %v3400 = vmul.f32 %v3304, %v3355
      %v3401 = vmul.f32 %v3305, %v3360
      %v3402 = vmul.f32 %v3306, %v3365
      %v3403 = vmul.f32 %v3307, %v3370
      %v3404 = vmul.f32 %v3308, %v3375
      %v3405 = vmul.f32 %v3309, %v3380
      %v3406 = vmul.f32 %v3310, %v3385
      %v3407 = vmul.f32 %v3311, %v3390
      %v3408 = vld [vmem:[%s7] sm:$0x1]
      %v3410 = vlaneseq
      %v3411 = vshrl.u32 %v3410, 7
      %v3412 = vsub.s32 0, %v3411
      %v3413 = vrot.slane %v3408, %v3412
      %v3415 = vadd.f32 %v3392, %v3413
      %v3416 = vadd.f32 %v3393, %v3413
      %v3417 = vadd.f32 %v3394, %v3413
      %v3418 = vadd.f32 %v3395, %v3413
      %v3419 = vadd.f32 %v3396, %v3413
      %v3420 = vadd.f32 %v3397, %v3413
      %v3421 = vadd.f32 %v3398, %v3413
      %v3422 = vadd.f32 %v3399, %v3413
      %v3423 = vadd.f32 %v3400, %v3413
      %v3424 = vadd.f32 %v3401, %v3413
      %v3425 = vadd.f32 %v3402, %v3413
      %v3426 = vadd.f32 %v3403, %v3413
      %v3427 = vadd.f32 %v3404, %v3413
      %v3428 = vadd.f32 %v3405, %v3413
      %v3429 = vadd.f32 %v3406, %v3413
      %v3430 = vadd.f32 %v3407, %v3413
      %3431 = vst [vmem:[#allocation8] sm:$0xff] %v3415
      %3432 = vst [vmem:[#allocation8 + $0x8] sm:$0xff] %v3416
      %3433 = vst [vmem:[#allocation8 + $0x10] sm:$0xff] %v3417
      %3434 = vst [vmem:[#allocation8 + $0x18] sm:$0xff] %v3418
      %3435 = vst [vmem:[#allocation8 + $0x20] sm:$0xff] %v3419
      %3436 = vst [vmem:[#allocation8 + $0x28] sm:$0xff] %v3420
      %3437 = vst [vmem:[#allocation8 + $0x30] sm:$0xff] %v3421
      %3438 = vst [vmem:[#allocation8 + $0x38] sm:$0xff] %v3422
      %3439 = vst [vmem:[#allocation8 + $0x40] sm:$0xff] %v3423
      %3440 = vst [vmem:[#allocation8 + $0x48] sm:$0xff] %v3424
      %3441 = vst [vmem:[#allocation8 + $0x50] sm:$0xff] %v3425
      %3442 = vst [vmem:[#allocation8 + $0x58] sm:$0xff] %v3426
      %3443 = vst [vmem:[#allocation8 + $0x60] sm:$0xff] %v3427
      %3444 = vst [vmem:[#allocation8 + $0x68] sm:$0xff] %v3428
      %3445 = vst [vmem:[#allocation8 + $0x70] sm:$0xff] %v3429
      %3446 = vst [vmem:[#allocation8 + $0x78] sm:$0xff] %v3430
    $region45: #{tpu_custom_call.1} parent=1 // pred_fallthru
      _
    // Predicated region
    $region46: #{tpu_custom_call.1} parent=1 // pred_check
      _
    $region47: #{tpu_custom_call.1} parent=1 // pred_check_branch
      %3448 = sbr.rel (0) target = $region49
    $region48: #{tpu_custom_call.1} parent=1 // pred_region
      %s3450 = ssub.s32 2048, 2048
      %3451 = vsyncadd [#allocation6], %s3450
      %s3452 = sshll.u32 [#allocation8], 4
      %s3453 = int_to_ptr.vmem [resolvable:$true] %s3452
      %3458 = dma.vmem_to_hbm [thread:$0]  %s3453, 2048, %s8, [#allocation6], 128, 128, 8
    $region49: #{tpu_custom_call.1} parent=1 // pred_fallthru
      _
    // Predicated region
    $region50: #{tpu_custom_call.1} parent=1 // pred_check
      _
    $region51: #{tpu_custom_call.1} parent=1 // pred_check_branch
      %3460 = sbr.rel (0) target = $region53
    $region52: #{tpu_custom_call.1} parent=1 // pred_region
      %3461 = dma.done [#allocation6], 2048
    $region53: #{tpu_custom_call.1} parent=1 // pred_fallthru
      _
    %3462 = vsyncpa [#allocation6], 1
    %3463 = vsyncpa [#allocation7], 1

</llo_original>
